<compile_context>
chip_gen: v6e
topology: v6e:2x2x1
jax: 0.10.0
libtpu: 0.0.40
codegen_flags: <defaults>
</compile_context>

<pallas_src>
import functools

import jax
import jax.numpy as jnp
from jax.experimental import pallas as pl
from jax.experimental.pallas import tpu as pltpu


def _recip(x):
    # EUP reciprocal + one Newton-Raphson refinement: keeps the VALU slot clear while
    # restoring ~1e-7 relative accuracy (well inside the 1e-4 check).
    r = pl.reciprocal(x, approx=True)
    return r * (2.0 - x * r)


def coattention_kernel(q_ref, d_ref, w1_ref, wq_ref, wd_ref, b_ref, o_ref, *, use_bf16):
    q = q_ref[...]                                    # (TB, Lq, E) f32
    d = d_ref[...]                                    # (TB, Ld, E) f32
    TB, Lq, E = q.shape
    mx = jnp.bfloat16 if use_bf16 else jnp.float32    # MXU input dtype (f32 accumulation)

    # ---- W1 projection: one tall (TB*Lq, E) @ (E, E) GEMM for the whole block -----
    # TODO(synk): verify in the bundle dump that this reshape round-trip is a pure
    # sublane repack (E pads to 128 lanes, Lq == 8 sublanes) and not a materialized
    # VMEM copy; if copies appear, keep the projection batched and drop the reshape.
    qw = jnp.dot(q.reshape(TB * Lq, E).astype(mx), w1_ref[...].astype(mx),
                 preferred_element_type=jnp.float32).reshape(TB, Lq, E)

    # ---- affinity matrix L = tanh(q W1 d^T): NT contraction, no explicit .T -------
    L = jnp.tanh(jnp.einsum("bqe,bde->bqd", qw.astype(mx), d.astype(mx),
                            preferred_element_type=jnp.float32))      # (TB, Lq, Ld)

    # ---- Aq: softmax over Lq of sum_{Ld} L -----------------------------------------
    sq = jnp.sum(L, axis=2)                                           # (TB, Lq)
    sq = sq - jnp.max(sq, axis=1, keepdims=True)
    eq = jnp.exp(sq)
    aq = eq * _recip(jnp.sum(eq, axis=1, keepdims=True))

    # ---- Ad: softmax over Ld of sum_{Lq} L -----------------------------------------
    sd = jnp.sum(L, axis=1)                                           # (TB, Ld)
    sd = sd - jnp.max(sd, axis=1, keepdims=True)
    ed = jnp.exp(sd)
    ad = ed * _recip(jnp.sum(ed, axis=1, keepdims=True))

    # ---- attention pooling: broadcast-multiply + sublane reduce (no transposes) ----
    cq = jnp.sum(aq[:, :, None] * q, axis=1)                          # (TB, E)
    cd = jnp.sum(ad[:, :, None] * d, axis=1)                          # (TB, E)

    # ---- final linear: split-weight GEMMs instead of concat([cq, cd]) --------------
    out = (jnp.dot(cq.astype(mx), wq_ref[...].astype(mx),
                   preferred_element_type=jnp.float32)
           + jnp.dot(cd.astype(mx), wd_ref[...].astype(mx),
                     preferred_element_type=jnp.float32)
           + b_ref[...])
    o_ref[...] = out.astype(o_ref.dtype)                              # (TB, E)


# ----------------------------- hardware-aware sizing --------------------------------

def _vmem_capacity_bytes():
    try:
        v = getattr(pltpu.get_tpu_info(), "vmem_capacity_bytes", None)
        if isinstance(v, int) and v > 0:
            return v
    except Exception:
        pass
    return 128 << 20   # v5e/v6e default


def _tensorcores_per_chip():
    # v7x has 2 TensorCores per chip (megacore); v5e/v6e have 1.
    try:
        kind = jax.devices()[0].device_kind.lower()
    except Exception:
        return 1
    return 2 if ("v7" in kind or "7x" in kind) else 1


def _pick_block_b(B, Lq, *, num_tc, target_rows):
    """Batch block TB: divides B, keeps TB*Lq under target_rows, keeps >= num_tc grid
    steps on multi-TC chips (so the 'parallel' batch axis shards over the cores), and
    prefers multiples of 8 (sublane-dense output rows). On single-TC chips the whole
    batch goes in one step: extra grid steps there are pure per-step overhead."""
    divisors = [d for d in range(1, B + 1) if B % d == 0]
    fitting = [d for d in divisors if d * Lq <= target_rows] or [1]
    if num_tc >= 2:
        candidates = [d for d in fitting if B // d >= num_tc] or fitting
    else:
        candidates = fitting
    aligned = [d for d in candidates if d % 8 == 0] or candidates
    return max(aligned)


def _compute_vmem_limit(TB, Lq, Ld, E, itemsize=4):
    q_blk = TB * Lq * E * itemsize
    d_blk = TB * Ld * E * itemsize
    o_blk = TB * E * itemsize
    w_blk = (3 * E * E + E) * itemsize                                # single-buffered
    interm = (TB * Lq * E + TB * Lq * Ld
              + 4 * TB * max(Lq, Ld) + 4 * TB * E) * itemsize         # L, qw, softmax, pools
    need = 2 * (q_blk + d_blk + o_blk) + w_blk + 2 * interm + (8 << 20)   # headroom
    cap = (_vmem_capacity_bytes() * 3) // 4
    return int(max(min(need, cap), 8 << 20))


# ------------------------------------ wrapper ----------------------------------------

def simple_coattention(query, doc, W1, W_lin, b_lin, *, block_b=None, use_bf16=False):
    """query: (B, Lq, E), doc: (B, Ld, E), W1: (E, E),
    W_lin: (E, 2E) (torch nn.Linear weight), b_lin: (E,). Returns (B, E)."""
    B, Lq, E = query.shape
    _, Ld, _ = doc.shape

    num_tc = _tensorcores_per_chip()
    vmem_phys = _vmem_capacity_bytes()
    # v7x (64 MiB VMEM/TC) gets smaller batch blocks than v5e/v6e (128 MiB).
    target_rows = 512 if vmem_phys < (100 << 20) else 2048

    TB = block_b if block_b is not None else _pick_block_b(
        B, Lq, num_tc=num_tc, target_rows=target_rows)
    assert B % TB == 0, "batch block must divide B"

    # Split/transpose the final-linear weight in the wrapper (free in XLA) so the
    # kernel avoids any lane-axis concatenate.
    wq = W_lin[:, :E].T                # (E, E) — acts on coAttn_q
    wd = W_lin[:, E:].T                # (E, E) — acts on coAttn_d
    bias = b_lin.reshape(1, E)         # (1, E)

    kernel = functools.partial(coattention_kernel, use_bf16=use_bf16)
    vmem_limit = _compute_vmem_limit(TB, Lq, Ld, E)

    def _call(single_buffer_weights):
        const_kw = {"pipeline_mode": pl.Buffered(1)} if single_buffer_weights else {}
        w_spec = pl.BlockSpec((E, E), lambda b: (0, 0), **const_kw)
        b_spec = pl.BlockSpec((1, E), lambda b: (0, 0), **const_kw)
        # TODO(synk): when B*E % 128 == 0, present the output lane-dense wrapper-side
        # as (B*E//128, 128) to turn masked vst.msk partial stores into full-lane vst.
        return pl.pallas_call(
            kernel,
            out_shape=jax.ShapeDtypeStruct((B, E), query.dtype),
            grid_spec=pltpu.PrefetchScalarGridSpec(
                num_scalar_prefetch=0,
                grid=(B // TB,),
                in_specs=[
                    pl.BlockSpec((TB, Lq, E), lambda b: (b, 0, 0)),
                    pl.BlockSpec((TB, Ld, E), lambda b: (b, 0, 0)),
                    w_spec,            # W1
                    w_spec,            # wq
                    w_spec,            # wd
                    b_spec,            # bias
                ],
                out_specs=pl.BlockSpec((TB, E), lambda b: (b, 0)),
            ),
            compiler_params=pltpu.CompilerParams(
                dimension_semantics=("parallel",),
                vmem_limit_bytes=vmem_limit,
            ),
        )(query, doc, W1, wq, wd, bias)

    try:
        return _call(True)
    except Exception:
        # TODO(synk): drop this fallback once pl.Buffered(1) single-buffering of the
        # grid-invariant weights is confirmed supported on the deployed jax version.
        return _call(False)


# ------------------------------------ reference --------------------------------------

def _reference(query, doc, W1, W_lin, b_lin):
    # pure-JAX reference mirroring the torch forward exactly
    doc_t = jnp.swapaxes(doc, 2, 1)
    L = jnp.tanh(jnp.matmul(jnp.matmul(query, W1), doc_t))            # (B, Lq, Ld)
    L_t = jnp.swapaxes(L, 2, 1)                                       # (B, Ld, Lq)
    Aq = jax.nn.softmax(jnp.sum(L_t, axis=1)[:, None, :], axis=-1)    # (B, 1, Lq)
    Ad = jax.nn.softmax(jnp.sum(L, axis=1)[:, None, :], axis=-1)      # (B, 1, Ld)
    cq = jnp.matmul(Aq, query)[:, 0, :]                               # (B, E)
    cd = jnp.matmul(Ad, doc)[:, 0, :]                                 # (B, E)
    cat = jnp.concatenate([cq, cd], axis=1)                           # (B, 2E)
    return cat @ W_lin.T + b_lin


if __name__ == "__main__":
    B, Lq, Ld, E = 16, 8, 8, 32

    key = jax.random.PRNGKey(0)
    k1, k2, k3, k4, k5 = jax.random.split(key, 5)

    # deterministic "checkpoint": mimic torch.rand for W1, nn.Linear init for qd_linear
    W1 = jax.random.uniform(k1, (E, E), dtype=jnp.float32)                    # torch.rand
    bound = 1.0 / jnp.sqrt(2.0 * E)
    W_lin = jax.random.uniform(k2, (E, 2 * E), minval=-bound, maxval=bound,
                               dtype=jnp.float32)                             # Linear.weight
    b_lin = jax.random.uniform(k3, (E,), minval=-bound, maxval=bound,
                               dtype=jnp.float32)                             # Linear.bias

    query = jax.random.normal(k4, (B, Lq, E), dtype=jnp.float32)
    doc = jax.random.normal(k5, (B, Ld, E), dtype=jnp.float32)

    out = simple_coattention(query, doc, W1, W_lin, b_lin)
    out = jax.block_until_ready(out)

    ref = _reference(query, doc, W1, W_lin, b_lin)
    assert out.shape == (B, E)
    assert jnp.allclose(out, ref, atol=1e-4, rtol=1e-4), "mismatch vs reference"

    print("KERNEL_OK")
</pallas_src>

<mosaic_0001>
module attributes {stable_mosaic.version = 11 : i64} {
  func.func @coattention_kernel(%arg0: i32, %arg1: memref<16x8x32xf32, #tpu.memory_space<vmem>>, %arg2: memref<16x8x32xf32, #tpu.memory_space<vmem>>, %arg3: memref<32x32xf32, #tpu.memory_space<vmem>>, %arg4: memref<32x32xf32, #tpu.memory_space<vmem>>, %arg5: memref<32x32xf32, #tpu.memory_space<vmem>>, %arg6: memref<1x32xf32, #tpu.memory_space<vmem>>, %arg7: memref<16x32xf32, #tpu.memory_space<vmem>>) attributes {dimension_semantics = [#tpu.dimension_semantics<parallel>], iteration_bounds = array<i64: 1>, scalar_prefetch = 0 : i64, scratch_operands = 0 : i64, tpu.core_type = #tpu.core_type<tc>, window_params = [{transform_indices = @transform_0, window_bounds = array<i64: 16, 8, 32>}, {transform_indices = @transform_1, window_bounds = array<i64: 16, 8, 32>}, {pipeline_mode = #tpu.pipeline_mode<synchronous>, transform_indices = @transform_2, window_bounds = array<i64: 32, 32>}, {pipeline_mode = #tpu.pipeline_mode<synchronous>, transform_indices = @transform_3, window_bounds = array<i64: 32, 32>}, {pipeline_mode = #tpu.pipeline_mode<synchronous>, transform_indices = @transform_4, window_bounds = array<i64: 32, 32>}, {pipeline_mode = #tpu.pipeline_mode<synchronous>, transform_indices = @transform_5, window_bounds = array<i64: 1, 32>}, {transform_indices = @transform_6, window_bounds = array<i64: 16, 32>}]} {
    %c0 = arith.constant 0 : index
    %c0_0 = arith.constant 0 : index
    %c0_1 = arith.constant 0 : index
    %0 = vector.load %arg1[%c0, %c0_0, %c0_1] : memref<16x8x32xf32, #tpu.memory_space<vmem>>, vector<16x8x32xf32>
    %c0_2 = arith.constant 0 : index
    %c0_3 = arith.constant 0 : index
    %c0_4 = arith.constant 0 : index
    %1 = vector.load %arg2[%c0_2, %c0_3, %c0_4] : memref<16x8x32xf32, #tpu.memory_space<vmem>>, vector<16x8x32xf32>
    %2 = vector.shape_cast %0 : vector<16x8x32xf32> to vector<128x32xf32>
    %c0_5 = arith.constant 0 : index
    %c0_6 = arith.constant 0 : index
    %3 = vector.load %arg3[%c0_5, %c0_6] : memref<32x32xf32, #tpu.memory_space<vmem>>, vector<32x32xf32>
    %cst = arith.constant dense<0.000000e+00> : vector<128x32xf32>
    %4 = tpu.matmul %2, %3, %cst {dimension_numbers = #tpu.dot_dimension_numbers<[1], [0], [0], [1], [0, 0, 1, 1], [], []>} : vector<128x32xf32>, vector<32x32xf32>, vector<128x32xf32> -> vector<128x32xf32>
    %5 = vector.shape_cast %4 : vector<128x32xf32> to vector<16x8x32xf32>
    "tpu.trace_start"() <{level = 10 : i32, message = "bqe,bde->bqd"}> : () -> ()
    %cst_7 = arith.constant dense<0.000000e+00> : vector<16x8x8xf32>
    %6 = tpu.matmul %5, %1, %cst_7 {dimension_numbers = #tpu.dot_dimension_numbers<[2], [2], [1], [1], [0, 0, 0, 1, 1, 1], [0], [0]>} : vector<16x8x32xf32>, vector<16x8x32xf32>, vector<16x8x8xf32> -> vector<16x8x8xf32>
    "tpu.trace_stop"() : () -> ()
    %7 = math.tanh %6 : vector<16x8x8xf32>
    %cst_8 = arith.constant dense<0.000000e+00> : vector<16x8xf32>
    %8 = vector.multi_reduction <add>, %7, %cst_8 [2] : vector<16x8x8xf32> to vector<16x8xf32>
    %cst_9 = arith.constant dense<0xFF800000> : vector<16xf32>
    %9 = vector.multi_reduction <maximumf>, %8, %cst_9 [1] : vector<16x8xf32> to vector<16xf32>
    %10 = vector.shape_cast %9 : vector<16xf32> to vector<16x1xf32>
    %11 = vector.broadcast %10 : vector<16x1xf32> to vector<16x8xf32>
    %12 = arith.subf %8, %11 : vector<16x8xf32>
    %13 = math.exp %12 : vector<16x8xf32>
    %cst_10 = arith.constant dense<0.000000e+00> : vector<16xf32>
    %14 = vector.multi_reduction <add>, %13, %cst_10 [1] : vector<16x8xf32> to vector<16xf32>
    %15 = vector.shape_cast %14 : vector<16xf32> to vector<16x1xf32>
    %16 = tpu.reciprocal %15 {approx = true} : vector<16x1xf32> -> vector<16x1xf32>
    %17 = arith.mulf %15, %16 : vector<16x1xf32>
    %cst_11 = arith.constant 2.000000e+00 : f32
    %18 = vector.broadcast %cst_11 : f32 to vector<16x1xf32>
    %19 = arith.subf %18, %17 : vector<16x1xf32>
    %20 = arith.mulf %16, %19 : vector<16x1xf32>
    %21 = vector.broadcast %20 : vector<16x1xf32> to vector<16x8xf32>
    %22 = arith.mulf %13, %21 : vector<16x8xf32>
    %cst_12 = arith.constant dense<0.000000e+00> : vector<16x8xf32>
    %23 = vector.multi_reduction <add>, %7, %cst_12 [1] : vector<16x8x8xf32> to vector<16x8xf32>
    %cst_13 = arith.constant dense<0xFF800000> : vector<16xf32>
    %24 = vector.multi_reduction <maximumf>, %23, %cst_13 [1] : vector<16x8xf32> to vector<16xf32>
    %25 = vector.shape_cast %24 : vector<16xf32> to vector<16x1xf32>
    %26 = vector.broadcast %25 : vector<16x1xf32> to vector<16x8xf32>
    %27 = arith.subf %23, %26 : vector<16x8xf32>
    %28 = math.exp %27 : vector<16x8xf32>
    %cst_14 = arith.constant dense<0.000000e+00> : vector<16xf32>
    %29 = vector.multi_reduction <add>, %28, %cst_14 [1] : vector<16x8xf32> to vector<16xf32>
    %30 = vector.shape_cast %29 : vector<16xf32> to vector<16x1xf32>
    %31 = tpu.reciprocal %30 {approx = true} : vector<16x1xf32> -> vector<16x1xf32>
    %32 = arith.mulf %30, %31 : vector<16x1xf32>
    %cst_15 = arith.constant 2.000000e+00 : f32
    %33 = vector.broadcast %cst_15 : f32 to vector<16x1xf32>
    %34 = arith.subf %33, %32 : vector<16x1xf32>
    %35 = arith.mulf %31, %34 : vector<16x1xf32>
    %36 = vector.broadcast %35 : vector<16x1xf32> to vector<16x8xf32>
    %37 = arith.mulf %28, %36 : vector<16x8xf32>
    %38 = vector.shape_cast %22 : vector<16x8xf32> to vector<16x8x1xf32>
    %39 = vector.broadcast %38 : vector<16x8x1xf32> to vector<16x8x32xf32>
    %40 = arith.mulf %39, %0 : vector<16x8x32xf32>
    %cst_16 = arith.constant dense<0.000000e+00> : vector<16x32xf32>
    %41 = vector.multi_reduction <add>, %40, %cst_16 [1] : vector<16x8x32xf32> to vector<16x32xf32>
    %42 = vector.shape_cast %37 : vector<16x8xf32> to vector<16x8x1xf32>
    %43 = vector.broadcast %42 : vector<16x8x1xf32> to vector<16x8x32xf32>
    %44 = arith.mulf %43, %1 : vector<16x8x32xf32>
    %cst_17 = arith.constant dense<0.000000e+00> : vector<16x32xf32>
    %45 = vector.multi_reduction <add>, %44, %cst_17 [1] : vector<16x8x32xf32> to vector<16x32xf32>
    %c0_18 = arith.constant 0 : index
    %c0_19 = arith.constant 0 : index
    %46 = vector.load %arg4[%c0_18, %c0_19] : memref<32x32xf32, #tpu.memory_space<vmem>>, vector<32x32xf32>
    %cst_20 = arith.constant dense<0.000000e+00> : vector<16x32xf32>
    %47 = tpu.matmul %41, %46, %cst_20 {dimension_numbers = #tpu.dot_dimension_numbers<[1], [0], [0], [1], [0, 0, 1, 1], [], []>} : vector<16x32xf32>, vector<32x32xf32>, vector<16x32xf32> -> vector<16x32xf32>
    %c0_21 = arith.constant 0 : index
    %c0_22 = arith.constant 0 : index
    %48 = vector.load %arg5[%c0_21, %c0_22] : memref<32x32xf32, #tpu.memory_space<vmem>>, vector<32x32xf32>
    %cst_23 = arith.constant dense<0.000000e+00> : vector<16x32xf32>
    %49 = tpu.matmul %45, %48, %cst_23 {dimension_numbers = #tpu.dot_dimension_numbers<[1], [0], [0], [1], [0, 0, 1, 1], [], []>} : vector<16x32xf32>, vector<32x32xf32>, vector<16x32xf32> -> vector<16x32xf32>
    %50 = arith.addf %47, %49 : vector<16x32xf32>
    %c0_24 = arith.constant 0 : index
    %c0_25 = arith.constant 0 : index
    %51 = vector.load %arg6[%c0_24, %c0_25] : memref<1x32xf32, #tpu.memory_space<vmem>>, vector<1x32xf32>
    %52 = vector.broadcast %51 : vector<1x32xf32> to vector<16x32xf32>
    %53 = arith.addf %50, %52 : vector<16x32xf32>
    %c0_26 = arith.constant 0 : index
    %c0_27 = arith.constant 0 : index
    %54 = vector.load %arg7[%c0_26, %c0_27] : memref<16x32xf32, #tpu.memory_space<vmem>>, vector<16x32xf32>
    tpu.vector_store %arg7[%c0_26, %c0_27], %53 {strides = array<i32>} : memref<16x32xf32, #tpu.memory_space<vmem>>, vector<16x32xf32>,
    return
  }
  func.func @transform_0(%arg0: i32) -> (i32, i32, i32) {
    %c0_i32 = arith.constant 0 : i32
    %c0_i32_0 = arith.constant 0 : i32
    %c0_i32_1 = arith.constant 0 : i32
    return %arg0, %c0_i32, %c0_i32_0 : i32, i32, i32
  }
  func.func @transform_1(%arg0: i32) -> (i32, i32, i32) {
    %c0_i32 = arith.constant 0 : i32
    %c0_i32_0 = arith.constant 0 : i32
    %c0_i32_1 = arith.constant 0 : i32
    return %arg0, %c0_i32, %c0_i32_0 : i32, i32, i32
  }
  func.func @transform_2(%arg0: i32) -> (i32, i32) {
    %c0_i32 = arith.constant 0 : i32
    %c0_i32_0 = arith.constant 0 : i32
    %c0_i32_1 = arith.constant 0 : i32
    return %c0_i32, %c0_i32_0 : i32, i32
  }
  func.func @transform_3(%arg0: i32) -> (i32, i32) {
    %c0_i32 = arith.constant 0 : i32
    %c0_i32_0 = arith.constant 0 : i32
    %c0_i32_1 = arith.constant 0 : i32
    return %c0_i32, %c0_i32_0 : i32, i32
  }
  func.func @transform_4(%arg0: i32) -> (i32, i32) {
    %c0_i32 = arith.constant 0 : i32
    %c0_i32_0 = arith.constant 0 : i32
    %c0_i32_1 = arith.constant 0 : i32
    return %c0_i32, %c0_i32_0 : i32, i32
  }
  func.func @transform_5(%arg0: i32) -> (i32, i32) {
    %c0_i32 = arith.constant 0 : i32
    %c0_i32_0 = arith.constant 0 : i32
    %c0_i32_1 = arith.constant 0 : i32
    return %c0_i32, %c0_i32_0 : i32, i32
  }
  func.func @transform_6(%arg0: i32) -> (i32, i32) {
    %c0_i32 = arith.constant 0 : i32
    %c0_i32_0 = arith.constant 0 : i32
    return %arg0, %c0_i32 : i32, i32
  }
}

module attributes {stable_mosaic.version = 11 : i64} {
  func.func @coattention_kernel(%arg0: i32, %arg1: memref<16x8x32xf32, #tpu.memory_space<vmem>>, %arg2: memref<16x8x32xf32, #tpu.memory_space<vmem>>, %arg3: memref<32x32xf32, #tpu.memory_space<vmem>>, %arg4: memref<32x32xf32, #tpu.memory_space<vmem>>, %arg5: memref<32x32xf32, #tpu.memory_space<vmem>>, %arg6: memref<1x32xf32, #tpu.memory_space<vmem>>, %arg7: memref<16x32xf32, #tpu.memory_space<vmem>>) attributes {dimension_semantics = [#tpu.dimension_semantics<parallel>], iteration_bounds = array<i64: 1>, scalar_prefetch = 0 : i64, scratch_operands = 0 : i64, tpu.core_type = #tpu.core_type<tc>, window_params = [{transform_indices = @transform_0, window_bounds = array<i64: 16, 8, 32>}, {transform_indices = @transform_1, window_bounds = array<i64: 16, 8, 32>}, {pipeline_mode = #tpu.pipeline_mode<synchronous>, transform_indices = @transform_2, window_bounds = array<i64: 32, 32>}, {pipeline_mode = #tpu.pipeline_mode<synchronous>, transform_indices = @transform_3, window_bounds = array<i64: 32, 32>}, {pipeline_mode = #tpu.pipeline_mode<synchronous>, transform_indices = @transform_4, window_bounds = array<i64: 32, 32>}, {pipeline_mode = #tpu.pipeline_mode<synchronous>, transform_indices = @transform_5, window_bounds = array<i64: 1, 32>}, {transform_indices = @transform_6, window_bounds = array<i64: 16, 32>}]} {
    %c0 = arith.constant 0 : index
    %c0_0 = arith.constant 0 : index
    %c0_1 = arith.constant 0 : index
    %0 = vector.load %arg1[%c0, %c0_0, %c0_1] : memref<16x8x32xf32, #tpu.memory_space<vmem>>, vector<16x8x32xf32>
    %c0_2 = arith.constant 0 : index
    %c0_3 = arith.constant 0 : index
    %c0_4 = arith.constant 0 : index
    %1 = vector.load %arg2[%c0_2, %c0_3, %c0_4] : memref<16x8x32xf32, #tpu.memory_space<vmem>>, vector<16x8x32xf32>
    %2 = vector.shape_cast %0 : vector<16x8x32xf32> to vector<128x32xf32>
    %c0_5 = arith.constant 0 : index
    %c0_6 = arith.constant 0 : index
    %3 = vector.load %arg3[%c0_5, %c0_6] : memref<32x32xf32, #tpu.memory_space<vmem>>, vector<32x32xf32>
    %cst = arith.constant dense<0.000000e+00> : vector<128x32xf32>
    %4 = tpu.matmul %2, %3, %cst {dimension_numbers = #tpu.dot_dimension_numbers<[1], [0], [0], [1], [0, 0, 1, 1], [], []>} : vector<128x32xf32>, vector<32x32xf32>, vector<128x32xf32> -> vector<128x32xf32>
    %5 = vector.shape_cast %4 : vector<128x32xf32> to vector<16x8x32xf32>
    "tpu.trace_start"() <{level = 10 : i32, message = "bqe,bde->bqd"}> : () -> ()
    %cst_7 = arith.constant dense<0.000000e+00> : vector<16x8x8xf32>
    %6 = tpu.matmul %5, %1, %cst_7 {dimension_numbers = #tpu.dot_dimension_numbers<[2], [2], [1], [1], [0, 0, 0, 1, 1, 1], [0], [0]>} : vector<16x8x32xf32>, vector<16x8x32xf32>, vector<16x8x8xf32> -> vector<16x8x8xf32>
    "tpu.trace_stop"() : () -> ()
    %7 = math.tanh %6 : vector<16x8x8xf32>
    %cst_8 = arith.constant dense<0.000000e+00> : vector<16x8xf32>
    %8 = vector.multi_reduction <add>, %7, %cst_8 [2] : vector<16x8x8xf32> to vector<16x8xf32>
    %cst_9 = arith.constant dense<0xFF800000> : vector<16xf32>
    %9 = vector.multi_reduction <maximumf>, %8, %cst_9 [1] : vector<16x8xf32> to vector<16xf32>
    %10 = vector.shape_cast %9 : vector<16xf32> to vector<16x1xf32>
    %11 = vector.broadcast %10 : vector<16x1xf32> to vector<16x8xf32>
    %12 = arith.subf %8, %11 : vector<16x8xf32>
    %13 = math.exp %12 : vector<16x8xf32>
    %cst_10 = arith.constant dense<0.000000e+00> : vector<16xf32>
    %14 = vector.multi_reduction <add>, %13, %cst_10 [1] : vector<16x8xf32> to vector<16xf32>
    %15 = vector.shape_cast %14 : vector<16xf32> to vector<16x1xf32>
    %16 = tpu.reciprocal %15 {approx = true} : vector<16x1xf32> -> vector<16x1xf32>
    %17 = arith.mulf %15, %16 : vector<16x1xf32>
    %cst_11 = arith.constant 2.000000e+00 : f32
    %18 = vector.broadcast %cst_11 : f32 to vector<16x1xf32>
    %19 = arith.subf %18, %17 : vector<16x1xf32>
    %20 = arith.mulf %16, %19 : vector<16x1xf32>
    %21 = vector.broadcast %20 : vector<16x1xf32> to vector<16x8xf32>
    %22 = arith.mulf %13, %21 : vector<16x8xf32>
    %cst_12 = arith.constant dense<0.000000e+00> : vector<16x8xf32>
    %23 = vector.multi_reduction <add>, %7, %cst_12 [1] : vector<16x8x8xf32> to vector<16x8xf32>
    %cst_13 = arith.constant dense<0xFF800000> : vector<16xf32>
    %24 = vector.multi_reduction <maximumf>, %23, %cst_13 [1] : vector<16x8xf32> to vector<16xf32>
    %25 = vector.shape_cast %24 : vector<16xf32> to vector<16x1xf32>
    %26 = vector.broadcast %25 : vector<16x1xf32> to vector<16x8xf32>
    %27 = arith.subf %23, %26 : vector<16x8xf32>
    %28 = math.exp %27 : vector<16x8xf32>
    %cst_14 = arith.constant dense<0.000000e+00> : vector<16xf32>
    %29 = vector.multi_reduction <add>, %28, %cst_14 [1] : vector<16x8xf32> to vector<16xf32>
    %30 = vector.shape_cast %29 : vector<16xf32> to vector<16x1xf32>
    %31 = tpu.reciprocal %30 {approx = true} : vector<16x1xf32> -> vector<16x1xf32>
    %32 = arith.mulf %30, %31 : vector<16x1xf32>
    %cst_15 = arith.constant 2.000000e+00 : f32
    %33 = vector.broadcast %cst_15 : f32 to vector<16x1xf32>
    %34 = arith.subf %33, %32 : vector<16x1xf32>
    %35 = arith.mulf %31, %34 : vector<16x1xf32>
    %36 = vector.broadcast %35 : vector<16x1xf32> to vector<16x8xf32>
    %37 = arith.mulf %28, %36 : vector<16x8xf32>
    %38 = vector.shape_cast %22 : vector<16x8xf32> to vector<16x8x1xf32>
    %39 = vector.broadcast %38 : vector<16x8x1xf32> to vector<16x8x32xf32>
    %40 = arith.mulf %39, %0 : vector<16x8x32xf32>
    %cst_16 = arith.constant dense<0.000000e+00> : vector<16x32xf32>
    %41 = vector.multi_reduction <add>, %40, %cst_16 [1] : vector<16x8x32xf32> to vector<16x32xf32>
    %42 = vector.shape_cast %37 : vector<16x8xf32> to vector<16x8x1xf32>
    %43 = vector.broadcast %42 : vector<16x8x1xf32> to vector<16x8x32xf32>
    %44 = arith.mulf %43, %1 : vector<16x8x32xf32>
    %cst_17 = arith.constant dense<0.000000e+00> : vector<16x32xf32>
    %45 = vector.multi_reduction <add>, %44, %cst_17 [1] : vector<16x8x32xf32> to vector<16x32xf32>
    %c0_18 = arith.constant 0 : index
    %c0_19 = arith.constant 0 : index
    %46 = vector.load %arg4[%c0_18, %c0_19] : memref<32x32xf32, #tpu.memory_space<vmem>>, vector<32x32xf32>
    %cst_20 = arith.constant dense<0.000000e+00> : vector<16x32xf32>
    %47 = tpu.matmul %41, %46, %cst_20 {dimension_numbers = #tpu.dot_dimension_numbers<[1], [0], [0], [1], [0, 0, 1, 1], [], []>} : vector<16x32xf32>, vector<32x32xf32>, vector<16x32xf32> -> vector<16x32xf32>
    %c0_21 = arith.constant 0 : index
    %c0_22 = arith.constant 0 : index
    %48 = vector.load %arg5[%c0_21, %c0_22] : memref<32x32xf32, #tpu.memory_space<vmem>>, vector<32x32xf32>
    %cst_23 = arith.constant dense<0.000000e+00> : vector<16x32xf32>
    %49 = tpu.matmul %45, %48, %cst_23 {dimension_numbers = #tpu.dot_dimension_numbers<[1], [0], [0], [1], [0, 0, 1, 1], [], []>} : vector<16x32xf32>, vector<32x32xf32>, vector<16x32xf32> -> vector<16x32xf32>
    %50 = arith.addf %47, %49 : vector<16x32xf32>
    %c0_24 = arith.constant 0 : index
    %c0_25 = arith.constant 0 : index
    %51 = vector.load %arg6[%c0_24, %c0_25] : memref<1x32xf32, #tpu.memory_space<vmem>>, vector<1x32xf32>
    %52 = vector.broadcast %51 : vector<1x32xf32> to vector<16x32xf32>
    %53 = arith.addf %50, %52 : vector<16x32xf32>
    %c0_26 = arith.constant 0 : index
    %c0_27 = arith.constant 0 : index
    %54 = vector.load %arg7[%c0_26, %c0_27] : memref<16x32xf32, #tpu.memory_space<vmem>>, vector<16x32xf32>
    tpu.vector_store %arg7[%c0_26, %c0_27], %53 {strides = array<i32>} : memref<16x32xf32, #tpu.memory_space<vmem>>, vector<16x32xf32>,
    return
  }
  func.func @transform_0(%arg0: i32) -> (i32, i32, i32) {
    %c0_i32 = arith.constant 0 : i32
    %c0_i32_0 = arith.constant 0 : i32
    %c0_i32_1 = arith.constant 0 : i32
    return %arg0, %c0_i32, %c0_i32_0 : i32, i32, i32
  }
  func.func @transform_1(%arg0: i32) -> (i32, i32, i32) {
    %c0_i32 = arith.constant 0 : i32
    %c0_i32_0 = arith.constant 0 : i32
    %c0_i32_1 = arith.constant 0 : i32
    return %arg0, %c0_i32, %c0_i32_0 : i32, i32, i32
  }
  func.func @transform_2(%arg0: i32) -> (i32, i32) {
    %c0_i32 = arith.constant 0 : i32
    %c0_i32_0 = arith.constant 0 : i32
    %c0_i32_1 = arith.constant 0 : i32
    return %c0_i32, %c0_i32_0 : i32, i32
  }
  func.func @transform_3(%arg0: i32) -> (i32, i32) {
    %c0_i32 = arith.constant 0 : i32
    %c0_i32_0 = arith.constant 0 : i32
    %c0_i32_1 = arith.constant 0 : i32
    return %c0_i32, %c0_i32_0 : i32, i32
  }
  func.func @transform_4(%arg0: i32) -> (i32, i32) {
    %c0_i32 = arith.constant 0 : i32
    %c0_i32_0 = arith.constant 0 : i32
    %c0_i32_1 = arith.constant 0 : i32
    return %c0_i32, %c0_i32_0 : i32, i32
  }
  func.func @transform_5(%arg0: i32) -> (i32, i32) {
    %c0_i32 = arith.constant 0 : i32
    %c0_i32_0 = arith.constant 0 : i32
    %c0_i32_1 = arith.constant 0 : i32
    return %c0_i32, %c0_i32_0 : i32, i32
  }
  func.func @transform_6(%arg0: i32) -> (i32, i32) {
    %c0_i32 = arith.constant 0 : i32
    %c0_i32_0 = arith.constant 0 : i32
    return %arg0, %c0_i32 : i32, i32
  }
}

</mosaic_0001>

<llo_original>
// kernel: tpu_custom_call.1
$region0: #{tpu_custom_call.1}
  #allocation0 [shape = 'u32[]', space=smem, size = 0x4, offset = 0x4, fixed_abs, tag = 'smem constant byte address 0x4 - core index']
  #allocation1 [shape = 'u32[144,128]{1,0:T(1,128)}', space=vmem, size = 0x12000, scoped, tag = 'internal scratch']
  %s0 = inlined_call_operand.hbm [shape: f32[16,8,32], index: 0, kind: input, shape index: {}]
  %s1 = inlined_call_operand.hbm [shape: f32[16,8,32], index: 1, kind: input, shape index: {}]
  %s2 = inlined_call_operand.hbm [shape: f32[32,32], index: 2, kind: input, shape index: {}]
  %s3 = inlined_call_operand.hbm [shape: f32[32,32], index: 3, kind: input, shape index: {}]
  %s4 = inlined_call_operand.hbm [shape: f32[32,32], index: 4, kind: input, shape index: {}]
  %s5 = inlined_call_operand.vmem [shape: f32[1,32], index: 5, kind: input, shape index: {}]
  %s6 = inlined_call_operand.hbm [shape: f32[16,32], index: 6, kind: output, shape index: {}]
  %s7 = sld [smem:[#allocation0]]
  $region54: #{tpu_custom_call.1} parent=0
    _
  %s9 = ssub.s32 1, %s7
  %s10 = scalar_select 0, %s9, %s7
  $region1: #{tpu_custom_call.1} parent=0
    #allocation2 [shape = 'u8[65536]{0}', space=vmem, size = 0x10000, scoped, tag = 'input window, operand 0, single buffered']
    #allocation3 [shape = 's32[1]{0}', space=sflag, size = 0x4, scoped, tag = 'scoped memory for tpu_custom_call.1']
    #allocation4 [shape = 's32[1]{0}', space=sflag, size = 0x4, scoped, tag = 'scoped memory for tpu_custom_call.1']
    #allocation5 [shape = 'u8[65536]{0}', space=vmem, size = 0x10000, scoped, tag = 'input window, operand 1, single buffered']
    #allocation6 [shape = 's32[1]{0}', space=sflag, size = 0x4, scoped, tag = 'scoped memory for tpu_custom_call.1']
    #allocation7 [shape = 'u8[16384]{0}', space=vmem, size = 0x4000, scoped, tag = 'input window, operand 2, single buffered']
    #allocation8 [shape = 'u8[16384]{0}', space=vmem, size = 0x4000, scoped, tag = 'input window, operand 3, single buffered']
    #allocation9 [shape = 's32[1]{0}', space=sflag, size = 0x4, scoped, tag = 'scoped memory for tpu_custom_call.1']
    #allocation10 [shape = 'u8[16384]{0}', space=vmem, size = 0x4000, scoped, tag = 'input window, operand 4, single buffered']
    #allocation11 [shape = 'u8[8192]{0}', space=vmem, size = 0x2000, scoped, tag = 'output window, operand 0, single buffered']
    %11 = vsyncpa [#allocation3], 0
    %12 = vsyncpa [#allocation6], 0
    %13 = vsyncpa [#allocation9], 0
    %14 = vsyncpa [#allocation4], 0
    // Predicated region
    $region2: #{tpu_custom_call.1} parent=1 // pred_check
      _
    $region3: #{tpu_custom_call.1} parent=1 // pred_check_branch
      %16 = sbr.rel (0) target = $region5
    $region4: #{tpu_custom_call.1} parent=1 // pred_region
      %s18 = ssub.s32 2048, 2048
      %19 = vsyncadd [#allocation3], %s18
      %s20 = sshll.u32 [#allocation2], 4
      %s21 = int_to_ptr.vmem [resolvable:$true] %s20
      %26 = dma.hbm_to_vmem [thread:$0]  %s0, 2048, %s21, [#allocation3], 128, 128, 8
    $region5: #{tpu_custom_call.1} parent=1 // pred_fallthru
      _
    // Predicated region
    $region6: #{tpu_custom_call.1} parent=1 // pred_check
      _
    $region7: #{tpu_custom_call.1} parent=1 // pred_check_branch
      %28 = sbr.rel (0) target = $region9
    $region8: #{tpu_custom_call.1} parent=1 // pred_region
      %s30 = ssub.s32 2048, 2048
      %31 = vsyncadd [#allocation6], %s30
      %s32 = sshll.u32 [#allocation5], 4
      %s33 = int_to_ptr.vmem [resolvable:$true] %s32
      %38 = dma.hbm_to_vmem [thread:$0]  %s1, 2048, %s33, [#allocation6], 128, 128, 8
    $region9: #{tpu_custom_call.1} parent=1 // pred_fallthru
      _
    // Predicated region
    $region10: #{tpu_custom_call.1} parent=1 // pred_check
      _
    $region11: #{tpu_custom_call.1} parent=1 // pred_check_branch
      %40 = sbr.rel (0) target = $region13
    $region12: #{tpu_custom_call.1} parent=1 // pred_region
      %s42 = ssub.s32 512, 512
      %43 = vsyncadd [#allocation6], %s42
      %s44 = sshll.u32 [#allocation7], 4
      %s45 = int_to_ptr.vmem [resolvable:$true] %s44
      %50 = dma.hbm_to_vmem [thread:$0]  %s2, 512, %s45, [#allocation6], 128, 128, 8
    $region13: #{tpu_custom_call.1} parent=1 // pred_fallthru
      _
    // Predicated region
    $region14: #{tpu_custom_call.1} parent=1 // pred_check
      _
    $region15: #{tpu_custom_call.1} parent=1 // pred_check_branch
      %52 = sbr.rel (0) target = $region17
    $region16: #{tpu_custom_call.1} parent=1 // pred_region
      %s54 = ssub.s32 512, 512
      %55 = vsyncadd [#allocation9], %s54
      %s56 = sshll.u32 [#allocation8], 4
      %s57 = int_to_ptr.vmem [resolvable:$true] %s56
      %62 = dma.hbm_to_vmem [thread:$0]  %s3, 512, %s57, [#allocation9], 128, 128, 8
    $region17: #{tpu_custom_call.1} parent=1 // pred_fallthru
      _
    // Predicated region
    $region18: #{tpu_custom_call.1} parent=1 // pred_check
      _
    $region19: #{tpu_custom_call.1} parent=1 // pred_check_branch
      %64 = sbr.rel (0) target = $region21
    $region20: #{tpu_custom_call.1} parent=1 // pred_region
      %s66 = ssub.s32 512, 512
      %67 = vsyncadd [#allocation9], %s66
      %s68 = sshll.u32 [#allocation10], 4
      %s69 = int_to_ptr.vmem [resolvable:$true] %s68
      %74 = dma.hbm_to_vmem [thread:$0]  %s4, 512, %s69, [#allocation9], 128, 128, 8
    $region21: #{tpu_custom_call.1} parent=1 // pred_fallthru
      _
    // Predicated region
    $region22: #{tpu_custom_call.1} parent=1 // pred_check
      _
    $region23: #{tpu_custom_call.1} parent=1 // pred_check_branch
      %76 = sbr.rel (0) target = $region25
    $region24: #{tpu_custom_call.1} parent=1 // pred_region
      _
    $region25: #{tpu_custom_call.1} parent=1 // pred_fallthru
      _
    // Predicated region
    $region26: #{tpu_custom_call.1} parent=1 // pred_check
      _
    $region27: #{tpu_custom_call.1} parent=1 // pred_check_branch
      %78 = sbr.rel (0) target = $region29
    $region28: #{tpu_custom_call.1} parent=1 // pred_region
      %79 = dma.done [#allocation3], 2048
    $region29: #{tpu_custom_call.1} parent=1 // pred_fallthru
      _
    // Predicated region
    $region30: #{tpu_custom_call.1} parent=1 // pred_check
      _
    $region31: #{tpu_custom_call.1} parent=1 // pred_check_branch
      %81 = sbr.rel (0) target = $region33
    $region32: #{tpu_custom_call.1} parent=1 // pred_region
      %82 = dma.done [#allocation6], 2048
    $region33: #{tpu_custom_call.1} parent=1 // pred_fallthru
      _
    // Predicated region
    $region34: #{tpu_custom_call.1} parent=1 // pred_check
      _
    $region35: #{tpu_custom_call.1} parent=1 // pred_check_branch
      %84 = sbr.rel (0) target = $region37
    $region36: #{tpu_custom_call.1} parent=1 // pred_region
      %85 = dma.done [#allocation6], 512
    $region37: #{tpu_custom_call.1} parent=1 // pred_fallthru
      _
    // Predicated region
    $region38: #{tpu_custom_call.1} parent=1 // pred_check
      _
    $region39: #{tpu_custom_call.1} parent=1 // pred_check_branch
      %87 = sbr.rel (0) target = $region41
    $region40: #{tpu_custom_call.1} parent=1 // pred_region
      %88 = dma.done [#allocation9], 512
    $region41: #{tpu_custom_call.1} parent=1 // pred_fallthru
      _
    // Predicated region
    $region42: #{tpu_custom_call.1} parent=1 // pred_check
      _
    $region43: #{tpu_custom_call.1} parent=1 // pred_check_branch
      %90 = sbr.rel (0) target = $region45
    $region44: #{tpu_custom_call.1} parent=1 // pred_region
      %91 = dma.done [#allocation9], 512
    $region45: #{tpu_custom_call.1} parent=1 // pred_fallthru
      _
    %v92 = vld [vmem:[#allocation2] sm:$0xff]
    %v93 = vld [vmem:[#allocation2 + $0x8] sm:$0xff]
    %v94 = vld [vmem:[#allocation2 + $0x10] sm:$0xff]
    %v95 = vld [vmem:[#allocation2 + $0x18] sm:$0xff]
    %v96 = vld [vmem:[#allocation2 + $0x20] sm:$0xff]
    %v97 = vld [vmem:[#allocation2 + $0x28] sm:$0xff]
    %v98 = vld [vmem:[#allocation2 + $0x30] sm:$0xff]
    %v99 = vld [vmem:[#allocation2 + $0x38] sm:$0xff]
    %v100 = vld [vmem:[#allocation2 + $0x40] sm:$0xff]
    %v101 = vld [vmem:[#allocation2 + $0x48] sm:$0xff]
    %v102 = vld [vmem:[#allocation2 + $0x50] sm:$0xff]
    %v103 = vld [vmem:[#allocation2 + $0x58] sm:$0xff]
    %v104 = vld [vmem:[#allocation2 + $0x60] sm:$0xff]
    %v105 = vld [vmem:[#allocation2 + $0x68] sm:$0xff]
    %v106 = vld [vmem:[#allocation2 + $0x70] sm:$0xff]
    %v107 = vld [vmem:[#allocation2 + $0x78] sm:$0xff]
    %v108 = vld [vmem:[#allocation5] sm:$0xff]
    %v109 = vld [vmem:[#allocation5 + $0x8] sm:$0xff]
    %v110 = vld [vmem:[#allocation5 + $0x10] sm:$0xff]
    %v111 = vld [vmem:[#allocation5 + $0x18] sm:$0xff]
    %v112 = vld [vmem:[#allocation5 + $0x20] sm:$0xff]
    %v113 = vld [vmem:[#allocation5 + $0x28] sm:$0xff]
    %v114 = vld [vmem:[#allocation5 + $0x30] sm:$0xff]
    %v115 = vld [vmem:[#allocation5 + $0x38] sm:$0xff]
    %v116 = vld [vmem:[#allocation5 + $0x40] sm:$0xff]
    %v117 = vld [vmem:[#allocation5 + $0x48] sm:$0xff]
    %v118 = vld [vmem:[#allocation5 + $0x50] sm:$0xff]
    %v119 = vld [vmem:[#allocation5 + $0x58] sm:$0xff]
    %v120 = vld [vmem:[#allocation5 + $0x60] sm:$0xff]
    %v121 = vld [vmem:[#allocation5 + $0x68] sm:$0xff]
    %v122 = vld [vmem:[#allocation5 + $0x70] sm:$0xff]
    %v123 = vld [vmem:[#allocation5 + $0x78] sm:$0xff]
    %v124 = vld [vmem:[#allocation7] sm:$0xff]
    %v125 = vld [vmem:[#allocation7 + $0x8] sm:$0xff]
    %v126 = vld [vmem:[#allocation7 + $0x10] sm:$0xff]
    %v127 = vld [vmem:[#allocation7 + $0x18] sm:$0xff]
    %vm128 = vcmask 261120
    %v130 = vsel %vm128, %v92, 0
    %v133 = vsel %vm128, %v93, 0
    %v136 = vsel %vm128, %v94, 0
    %v139 = vsel %vm128, %v95, 0
    %v142 = vsel %vm128, %v96, 0
    %v145 = vsel %vm128, %v97, 0
    %v148 = vsel %vm128, %v98, 0
    %v151 = vsel %vm128, %v99, 0
    %v154 = vsel %vm128, %v100, 0
    %v157 = vsel %vm128, %v101, 0
    %v160 = vsel %vm128, %v102, 0
    %v163 = vsel %vm128, %v103, 0
    %v166 = vsel %vm128, %v104, 0
    %v169 = vsel %vm128, %v105, 0
    %v172 = vsel %vm128, %v106, 0
    %v175 = vsel %vm128, %v107, 0
    %177 = vmatprep.subr.mxu0 0.0
    %178 = vmatpush1.msra.mxu0 0.0
    %179 = vmatprep.subr.mxu0 0.0
    %180 = vmatpush1.msra.mxu0 0.0
    %181 = vmatprep.subr.mxu0 0.0
    %182 = vmatpush1.msra.mxu0 0.0
    %183 = vmatprep.subr.mxu0 0.0
    %184 = vmatpush1.msra.mxu0 0.0
    %185 = vmatprep.subr.mxu0 0.0
    %186 = vmatpush1.msra.mxu0 0.0
    %187 = vmatprep.subr.mxu0 0.0
    %188 = vmatpush1.msra.mxu0 0.0
    %189 = vmatprep.subr.mxu0 0.0
    %190 = vmatpush1.msra.mxu0 0.0
    %191 = vmatprep.subr.mxu0 0.0
    %192 = vmatpush1.msra.mxu0 0.0
    %193 = vmatprep.subr.mxu0 0.0
    %194 = vmatpush1.msra.mxu0 0.0
    %195 = vmatprep.subr.mxu0 0.0
    %196 = vmatpush1.msra.mxu0 0.0
    %197 = vmatprep.subr.mxu0 0.0
    %198 = vmatpush1.msra.mxu0 0.0
    %199 = vmatprep.subr.mxu0 0.0
    %200 = vmatpush1.msra.mxu0 0.0
    %201 = vmatprep.subr.mxu0 0.0
    %202 = vmatpush1.msra.mxu0 %v127
    %203 = vmatprep.subr.mxu0 0.0
    %204 = vmatpush1.msra.mxu0 %v126
    %205 = vmatprep.subr.mxu0 0.0
    %206 = vmatpush1.msra.mxu0 %v125
    %207 = vmatprep.subr.mxu0 0.0
    %208 = vmatpush1.msra.mxu0 %v124
    %209 = vmatprep.subr.mxu0 0.0
    %210 = vmatpush2.msra.mxu0 0.0
    %211 = vmatprep.subr.mxu0 0.0
    %212 = vmatpush2.msra.mxu0 0.0
    %213 = vmatprep.subr.mxu0 0.0
    %214 = vmatpush2.msra.mxu0 0.0
    %215 = vmatprep.subr.mxu0 0.0
    %216 = vmatpush2.msra.mxu0 0.0
    %217 = vmatprep.subr.mxu0 0.0
    %218 = vmatpush2.msra.mxu0 0.0
    %219 = vmatprep.subr.mxu0 0.0
    %220 = vmatpush2.msra.mxu0 0.0
    %221 = vmatprep.subr.mxu0 0.0
    %222 = vmatpush2.msra.mxu0 0.0
    %223 = vmatprep.subr.mxu0 0.0
    %224 = vmatpush2.msra.mxu0 0.0
    %225 = vmatprep.subr.mxu0 0.0
    %226 = vmatpush2.msra.mxu0 0.0
    %227 = vmatprep.subr.mxu0 0.0
    %228 = vmatpush2.msra.mxu0 0.0
    %229 = vmatprep.subr.mxu0 0.0
    %230 = vmatpush2.msra.mxu0 0.0
    %231 = vmatprep.subr.mxu0 0.0
    %232 = vmatpush2.msra.mxu0 0.0
    %233 = vmatprep.subr.mxu0 0.0
    %234 = vmatpush2.msra.mxu0 0.0
    %235 = vmatprep.subr.mxu0 0.0
    %236 = vmatpush2.msra.mxu0 0.0
    %237 = vmatprep.subr.mxu0 0.0
    %238 = vmatpush2.msra.mxu0 0.0
    %239 = vmatprep.subr.mxu0 0.0
    %240 = vmatpush2.msra.mxu0 0.0
    %241 = vmatprep.mubr.f32.mxu0 0.0
    %242 = vmatmul.mubr.f32.gmra.mxu0 %v130
    %v243 = vpop.f32.mrf.mxu0
    %v244 = vadd.f32 0.0, %v243
    %v245 = vpop.f32.mrf.mxu0
    %246 = vmatprep.mubr.f32.mxu0 0.0
    %247 = vmatmul.mubr.f32.gmra.mxu0 %v133
    %v248 = vpop.f32.mrf.mxu0
    %v249 = vadd.f32 0.0, %v248
    %v250 = vpop.f32.mrf.mxu0
    %251 = vmatprep.mubr.f32.mxu0 0.0
    %252 = vmatmul.mubr.f32.gmra.mxu0 %v136
    %v253 = vpop.f32.mrf.mxu0
    %v254 = vadd.f32 0.0, %v253
    %v255 = vpop.f32.mrf.mxu0
    %256 = vmatprep.mubr.f32.mxu0 0.0
    %257 = vmatmul.mubr.f32.gmra.mxu0 %v139
    %v258 = vpop.f32.mrf.mxu0
    %v259 = vadd.f32 0.0, %v258
    %v260 = vpop.f32.mrf.mxu0
    %261 = vmatprep.mubr.f32.mxu0 0.0
    %262 = vmatmul.mubr.f32.gmra.mxu0 %v142
    %v263 = vpop.f32.mrf.mxu0
    %v264 = vadd.f32 0.0, %v263
    %v265 = vpop.f32.mrf.mxu0
    %266 = vmatprep.mubr.f32.mxu0 0.0
    %267 = vmatmul.mubr.f32.gmra.mxu0 %v145
    %v268 = vpop.f32.mrf.mxu0
    %v269 = vadd.f32 0.0, %v268
    %v270 = vpop.f32.mrf.mxu0
    %271 = vmatprep.mubr.f32.mxu0 0.0
    %272 = vmatmul.mubr.f32.gmra.mxu0 %v148
    %v273 = vpop.f32.mrf.mxu0
    %v274 = vadd.f32 0.0, %v273
    %v275 = vpop.f32.mrf.mxu0
    %276 = vmatprep.mubr.f32.mxu0 0.0
    %277 = vmatmul.mubr.f32.gmra.mxu0 %v151
    %v278 = vpop.f32.mrf.mxu0
    %v279 = vadd.f32 0.0, %v278
    %v280 = vpop.f32.mrf.mxu0
    %281 = vmatprep.mubr.f32.mxu0 0.0
    %282 = vmatmul.mubr.f32.gmra.mxu0 %v154
    %v283 = vpop.f32.mrf.mxu0
    %v284 = vadd.f32 0.0, %v283
    %v285 = vpop.f32.mrf.mxu0
    %286 = vmatprep.mubr.f32.mxu0 0.0
    %287 = vmatmul.mubr.f32.gmra.mxu0 %v157
    %v288 = vpop.f32.mrf.mxu0
    %v289 = vadd.f32 0.0, %v288
    %v290 = vpop.f32.mrf.mxu0
    %291 = vmatprep.mubr.f32.mxu0 0.0
    %292 = vmatmul.mubr.f32.gmra.mxu0 %v160
    %v293 = vpop.f32.mrf.mxu0
    %v294 = vadd.f32 0.0, %v293
    %v295 = vpop.f32.mrf.mxu0
    %296 = vmatprep.mubr.f32.mxu0 0.0
    %297 = vmatmul.mubr.f32.gmra.mxu0 %v163
    %v298 = vpop.f32.mrf.mxu0
    %v299 = vadd.f32 0.0, %v298
    %v300 = vpop.f32.mrf.mxu0
    %301 = vmatprep.mubr.f32.mxu0 0.0
    %302 = vmatmul.mubr.f32.gmra.mxu0 %v166
    %v303 = vpop.f32.mrf.mxu0
    %v304 = vadd.f32 0.0, %v303
    %v305 = vpop.f32.mrf.mxu0
    %306 = vmatprep.mubr.f32.mxu0 0.0
    %307 = vmatmul.mubr.f32.gmra.mxu0 %v169
    %v308 = vpop.f32.mrf.mxu0
    %v309 = vadd.f32 0.0, %v308
    %v310 = vpop.f32.mrf.mxu0
    %311 = vmatprep.mubr.f32.mxu0 0.0
    %312 = vmatmul.mubr.f32.gmra.mxu0 %v172
    %v313 = vpop.f32.mrf.mxu0
    %v314 = vadd.f32 0.0, %v313
    %v315 = vpop.f32.mrf.mxu0
    %316 = vmatprep.mubr.f32.mxu0 0.0
    %317 = vmatmul.mubr.f32.gmra.mxu0 %v175
    %v318 = vpop.f32.mrf.mxu0
    %v319 = vadd.f32 0.0, %v318
    %v320 = vpop.f32.mrf.mxu0
    %321 = vdwg.mxu0
    %v323 = vsel %vm128, %v244, 0
    %v326 = vsel %vm128, %v108, 0
    %328 = vmatprep.subr.mxu0 0.0
    %329 = vmatpush1.xpose.msra.mxu0 0.0
    %330 = vmatprep.subr.mxu0 0.0
    %331 = vmatpush1.xpose.msra.mxu0 0.0
    %332 = vmatprep.subr.mxu0 0.0
    %333 = vmatpush1.xpose.msra.mxu0 0.0
    %334 = vmatprep.subr.mxu0 0.0
    %335 = vmatpush1.xpose.msra.mxu0 0.0
    %336 = vmatprep.subr.mxu0 0.0
    %337 = vmatpush1.xpose.msra.mxu0 0.0
    %338 = vmatprep.subr.mxu0 0.0
    %339 = vmatpush1.xpose.msra.mxu0 0.0
    %340 = vmatprep.subr.mxu0 0.0
    %341 = vmatpush1.xpose.msra.mxu0 0.0
    %342 = vmatprep.subr.mxu0 0.0
    %343 = vmatpush1.xpose.msra.mxu0 0.0
    %344 = vmatprep.subr.mxu0 0.0
    %345 = vmatpush1.xpose.msra.mxu0 0.0
    %346 = vmatprep.subr.mxu0 0.0
    %347 = vmatpush1.xpose.msra.mxu0 0.0
    %348 = vmatprep.subr.mxu0 0.0
    %349 = vmatpush1.xpose.msra.mxu0 0.0
    %350 = vmatprep.subr.mxu0 0.0
    %351 = vmatpush1.xpose.msra.mxu0 0.0
    %352 = vmatprep.subr.mxu0 0.0
    %353 = vmatpush1.xpose.msra.mxu0 0.0
    %354 = vmatprep.subr.mxu0 0.0
    %355 = vmatpush1.xpose.msra.mxu0 0.0
    %356 = vmatprep.subr.mxu0 0.0
    %357 = vmatpush1.xpose.msra.mxu0 0.0
    %358 = vmatprep.subr.mxu0 0.0
    %359 = vmatpush1.xpose.msra.mxu0 %v326
    %360 = vmatprep.subr.mxu0 0.0
    %361 = vmatpush2.xpose.msra.mxu0 0.0
    %362 = vmatprep.subr.mxu0 0.0
    %363 = vmatpush2.xpose.msra.mxu0 0.0
    %364 = vmatprep.subr.mxu0 0.0
    %365 = vmatpush2.xpose.msra.mxu0 0.0
    %366 = vmatprep.subr.mxu0 0.0
    %367 = vmatpush2.xpose.msra.mxu0 0.0
    %368 = vmatprep.subr.mxu0 0.0
    %369 = vmatpush2.xpose.msra.mxu0 0.0
    %370 = vmatprep.subr.mxu0 0.0
    %371 = vmatpush2.xpose.msra.mxu0 0.0
    %372 = vmatprep.subr.mxu0 0.0
    %373 = vmatpush2.xpose.msra.mxu0 0.0
    %374 = vmatprep.subr.mxu0 0.0
    %375 = vmatpush2.xpose.msra.mxu0 0.0
    %376 = vmatprep.subr.mxu0 0.0
    %377 = vmatpush2.xpose.msra.mxu0 0.0
    %378 = vmatprep.subr.mxu0 0.0
    %379 = vmatpush2.xpose.msra.mxu0 0.0
    %380 = vmatprep.subr.mxu0 0.0
    %381 = vmatpush2.xpose.msra.mxu0 0.0
    %382 = vmatprep.subr.mxu0 0.0
    %383 = vmatpush2.xpose.msra.mxu0 0.0
    %384 = vmatprep.subr.mxu0 0.0
    %385 = vmatpush2.xpose.msra.mxu0 0.0
    %386 = vmatprep.subr.mxu0 0.0
    %387 = vmatpush2.xpose.msra.mxu0 0.0
    %388 = vmatprep.subr.mxu0 0.0
    %389 = vmatpush2.xpose.msra.mxu0 0.0
    %390 = vmatprep.subr.mxu0 0.0
    %391 = vmatpush2.xpose.msra.mxu0 0.0
    %392 = vmatprep.mubr.f32.mxu0 0.0
    %393 = vmatmul.mubr.f32.gmra.mxu0 %v323
    %v394 = vpop.f32.mrf.mxu0
    %v395 = vadd.f32 0.0, %v394
    %v396 = vpop.f32.mrf.mxu0
    %397 = vdwg.mxu0
    %v399 = vsel %vm128, %v249, 0
    %v402 = vsel %vm128, %v109, 0
    %404 = vmatprep.subr.mxu0 0.0
    %405 = vmatpush1.xpose.msra.mxu0 0.0
    %406 = vmatprep.subr.mxu0 0.0
    %407 = vmatpush1.xpose.msra.mxu0 0.0
    %408 = vmatprep.subr.mxu0 0.0
    %409 = vmatpush1.xpose.msra.mxu0 0.0
    %410 = vmatprep.subr.mxu0 0.0
    %411 = vmatpush1.xpose.msra.mxu0 0.0
    %412 = vmatprep.subr.mxu0 0.0
    %413 = vmatpush1.xpose.msra.mxu0 0.0
    %414 = vmatprep.subr.mxu0 0.0
    %415 = vmatpush1.xpose.msra.mxu0 0.0
    %416 = vmatprep.subr.mxu0 0.0
    %417 = vmatpush1.xpose.msra.mxu0 0.0
    %418 = vmatprep.subr.mxu0 0.0
    %419 = vmatpush1.xpose.msra.mxu0 0.0
    %420 = vmatprep.subr.mxu0 0.0
    %421 = vmatpush1.xpose.msra.mxu0 0.0
    %422 = vmatprep.subr.mxu0 0.0
    %423 = vmatpush1.xpose.msra.mxu0 0.0
    %424 = vmatprep.subr.mxu0 0.0
    %425 = vmatpush1.xpose.msra.mxu0 0.0
    %426 = vmatprep.subr.mxu0 0.0
    %427 = vmatpush1.xpose.msra.mxu0 0.0
    %428 = vmatprep.subr.mxu0 0.0
    %429 = vmatpush1.xpose.msra.mxu0 0.0
    %430 = vmatprep.subr.mxu0 0.0
    %431 = vmatpush1.xpose.msra.mxu0 0.0
    %432 = vmatprep.subr.mxu0 0.0
    %433 = vmatpush1.xpose.msra.mxu0 0.0
    %434 = vmatprep.subr.mxu0 0.0
    %435 = vmatpush1.xpose.msra.mxu0 %v402
    %436 = vmatprep.subr.mxu0 0.0
    %437 = vmatpush2.xpose.msra.mxu0 0.0
    %438 = vmatprep.subr.mxu0 0.0
    %439 = vmatpush2.xpose.msra.mxu0 0.0
    %440 = vmatprep.subr.mxu0 0.0
    %441 = vmatpush2.xpose.msra.mxu0 0.0
    %442 = vmatprep.subr.mxu0 0.0
    %443 = vmatpush2.xpose.msra.mxu0 0.0
    %444 = vmatprep.subr.mxu0 0.0
    %445 = vmatpush2.xpose.msra.mxu0 0.0
    %446 = vmatprep.subr.mxu0 0.0
    %447 = vmatpush2.xpose.msra.mxu0 0.0
    %448 = vmatprep.subr.mxu0 0.0
    %449 = vmatpush2.xpose.msra.mxu0 0.0
    %450 = vmatprep.subr.mxu0 0.0
    %451 = vmatpush2.xpose.msra.mxu0 0.0
    %452 = vmatprep.subr.mxu0 0.0
    %453 = vmatpush2.xpose.msra.mxu0 0.0
    %454 = vmatprep.subr.mxu0 0.0
    %455 = vmatpush2.xpose.msra.mxu0 0.0
    %456 = vmatprep.subr.mxu0 0.0
    %457 = vmatpush2.xpose.msra.mxu0 0.0
    %458 = vmatprep.subr.mxu0 0.0
    %459 = vmatpush2.xpose.msra.mxu0 0.0
    %460 = vmatprep.subr.mxu0 0.0
    %461 = vmatpush2.xpose.msra.mxu0 0.0
    %462 = vmatprep.subr.mxu0 0.0
    %463 = vmatpush2.xpose.msra.mxu0 0.0
    %464 = vmatprep.subr.mxu0 0.0
    %465 = vmatpush2.xpose.msra.mxu0 0.0
    %466 = vmatprep.subr.mxu0 0.0
    %467 = vmatpush2.xpose.msra.mxu0 0.0
    %468 = vmatprep.mubr.f32.mxu0 0.0
    %469 = vmatmul.mubr.f32.gmra.mxu0 %v399
    %v470 = vpop.f32.mrf.mxu0
    %v471 = vadd.f32 0.0, %v470
    %v472 = vpop.f32.mrf.mxu0
    %473 = vdwg.mxu0
    %v475 = vsel %vm128, %v254, 0
    %v478 = vsel %vm128, %v110, 0
    %480 = vmatprep.subr.mxu0 0.0
    %481 = vmatpush1.xpose.msra.mxu0 0.0
    %482 = vmatprep.subr.mxu0 0.0
    %483 = vmatpush1.xpose.msra.mxu0 0.0
    %484 = vmatprep.subr.mxu0 0.0
    %485 = vmatpush1.xpose.msra.mxu0 0.0
    %486 = vmatprep.subr.mxu0 0.0
    %487 = vmatpush1.xpose.msra.mxu0 0.0
    %488 = vmatprep.subr.mxu0 0.0
    %489 = vmatpush1.xpose.msra.mxu0 0.0
    %490 = vmatprep.subr.mxu0 0.0
    %491 = vmatpush1.xpose.msra.mxu0 0.0
    %492 = vmatprep.subr.mxu0 0.0
    %493 = vmatpush1.xpose.msra.mxu0 0.0
    %494 = vmatprep.subr.mxu0 0.0
    %495 = vmatpush1.xpose.msra.mxu0 0.0
    %496 = vmatprep.subr.mxu0 0.0
    %497 = vmatpush1.xpose.msra.mxu0 0.0
    %498 = vmatprep.subr.mxu0 0.0
    %499 = vmatpush1.xpose.msra.mxu0 0.0
    %500 = vmatprep.subr.mxu0 0.0
    %501 = vmatpush1.xpose.msra.mxu0 0.0
    %502 = vmatprep.subr.mxu0 0.0
    %503 = vmatpush1.xpose.msra.mxu0 0.0
    %504 = vmatprep.subr.mxu0 0.0
    %505 = vmatpush1.xpose.msra.mxu0 0.0
    %506 = vmatprep.subr.mxu0 0.0
    %507 = vmatpush1.xpose.msra.mxu0 0.0
    %508 = vmatprep.subr.mxu0 0.0
    %509 = vmatpush1.xpose.msra.mxu0 0.0
    %510 = vmatprep.subr.mxu0 0.0
    %511 = vmatpush1.xpose.msra.mxu0 %v478
    %512 = vmatprep.subr.mxu0 0.0
    %513 = vmatpush2.xpose.msra.mxu0 0.0
    %514 = vmatprep.subr.mxu0 0.0
    %515 = vmatpush2.xpose.msra.mxu0 0.0
    %516 = vmatprep.subr.mxu0 0.0
    %517 = vmatpush2.xpose.msra.mxu0 0.0
    %518 = vmatprep.subr.mxu0 0.0
    %519 = vmatpush2.xpose.msra.mxu0 0.0
    %520 = vmatprep.subr.mxu0 0.0
    %521 = vmatpush2.xpose.msra.mxu0 0.0
    %522 = vmatprep.subr.mxu0 0.0
    %523 = vmatpush2.xpose.msra.mxu0 0.0
    %524 = vmatprep.subr.mxu0 0.0
    %525 = vmatpush2.xpose.msra.mxu0 0.0
    %526 = vmatprep.subr.mxu0 0.0
    %527 = vmatpush2.xpose.msra.mxu0 0.0
    %528 = vmatprep.subr.mxu0 0.0
    %529 = vmatpush2.xpose.msra.mxu0 0.0
    %530 = vmatprep.subr.mxu0 0.0
    %531 = vmatpush2.xpose.msra.mxu0 0.0
    %532 = vmatprep.subr.mxu0 0.0
    %533 = vmatpush2.xpose.msra.mxu0 0.0
    %534 = vmatprep.subr.mxu0 0.0
    %535 = vmatpush2.xpose.msra.mxu0 0.0
    %536 = vmatprep.subr.mxu0 0.0
    %537 = vmatpush2.xpose.msra.mxu0 0.0
    %538 = vmatprep.subr.mxu0 0.0
    %539 = vmatpush2.xpose.msra.mxu0 0.0
    %540 = vmatprep.subr.mxu0 0.0
    %541 = vmatpush2.xpose.msra.mxu0 0.0
    %542 = vmatprep.subr.mxu0 0.0
    %543 = vmatpush2.xpose.msra.mxu0 0.0
    %544 = vmatprep.mubr.f32.mxu0 0.0
    %545 = vmatmul.mubr.f32.gmra.mxu0 %v475
    %v546 = vpop.f32.mrf.mxu0
    %v547 = vadd.f32 0.0, %v546
    %v548 = vpop.f32.mrf.mxu0
    %549 = vdwg.mxu0
    %v551 = vsel %vm128, %v259, 0
    %v554 = vsel %vm128, %v111, 0
    %556 = vmatprep.subr.mxu0 0.0
    %557 = vmatpush1.xpose.msra.mxu0 0.0
    %558 = vmatprep.subr.mxu0 0.0
    %559 = vmatpush1.xpose.msra.mxu0 0.0
    %560 = vmatprep.subr.mxu0 0.0
    %561 = vmatpush1.xpose.msra.mxu0 0.0
    %562 = vmatprep.subr.mxu0 0.0
    %563 = vmatpush1.xpose.msra.mxu0 0.0
    %564 = vmatprep.subr.mxu0 0.0
    %565 = vmatpush1.xpose.msra.mxu0 0.0
    %566 = vmatprep.subr.mxu0 0.0
    %567 = vmatpush1.xpose.msra.mxu0 0.0
    %568 = vmatprep.subr.mxu0 0.0
    %569 = vmatpush1.xpose.msra.mxu0 0.0
    %570 = vmatprep.subr.mxu0 0.0
    %571 = vmatpush1.xpose.msra.mxu0 0.0
    %572 = vmatprep.subr.mxu0 0.0
    %573 = vmatpush1.xpose.msra.mxu0 0.0
    %574 = vmatprep.subr.mxu0 0.0
    %575 = vmatpush1.xpose.msra.mxu0 0.0
    %576 = vmatprep.subr.mxu0 0.0
    %577 = vmatpush1.xpose.msra.mxu0 0.0
    %578 = vmatprep.subr.mxu0 0.0
    %579 = vmatpush1.xpose.msra.mxu0 0.0
    %580 = vmatprep.subr.mxu0 0.0
    %581 = vmatpush1.xpose.msra.mxu0 0.0
    %582 = vmatprep.subr.mxu0 0.0
    %583 = vmatpush1.xpose.msra.mxu0 0.0
    %584 = vmatprep.subr.mxu0 0.0
    %585 = vmatpush1.xpose.msra.mxu0 0.0
    %586 = vmatprep.subr.mxu0 0.0
    %587 = vmatpush1.xpose.msra.mxu0 %v554
    %588 = vmatprep.subr.mxu0 0.0
    %589 = vmatpush2.xpose.msra.mxu0 0.0
    %590 = vmatprep.subr.mxu0 0.0
    %591 = vmatpush2.xpose.msra.mxu0 0.0
    %592 = vmatprep.subr.mxu0 0.0
    %593 = vmatpush2.xpose.msra.mxu0 0.0
    %594 = vmatprep.subr.mxu0 0.0
    %595 = vmatpush2.xpose.msra.mxu0 0.0
    %596 = vmatprep.subr.mxu0 0.0
    %597 = vmatpush2.xpose.msra.mxu0 0.0
    %598 = vmatprep.subr.mxu0 0.0
    %599 = vmatpush2.xpose.msra.mxu0 0.0
    %600 = vmatprep.subr.mxu0 0.0
    %601 = vmatpush2.xpose.msra.mxu0 0.0
    %602 = vmatprep.subr.mxu0 0.0
    %603 = vmatpush2.xpose.msra.mxu0 0.0
    %604 = vmatprep.subr.mxu0 0.0
    %605 = vmatpush2.xpose.msra.mxu0 0.0
    %606 = vmatprep.subr.mxu0 0.0
    %607 = vmatpush2.xpose.msra.mxu0 0.0
    %608 = vmatprep.subr.mxu0 0.0
    %609 = vmatpush2.xpose.msra.mxu0 0.0
    %610 = vmatprep.subr.mxu0 0.0
    %611 = vmatpush2.xpose.msra.mxu0 0.0
    %612 = vmatprep.subr.mxu0 0.0
    %613 = vmatpush2.xpose.msra.mxu0 0.0
    %614 = vmatprep.subr.mxu0 0.0
    %615 = vmatpush2.xpose.msra.mxu0 0.0
    %616 = vmatprep.subr.mxu0 0.0
    %617 = vmatpush2.xpose.msra.mxu0 0.0
    %618 = vmatprep.subr.mxu0 0.0
    %619 = vmatpush2.xpose.msra.mxu0 0.0
    %620 = vmatprep.mubr.f32.mxu0 0.0
    %621 = vmatmul.mubr.f32.gmra.mxu0 %v551
    %v622 = vpop.f32.mrf.mxu0
    %v623 = vadd.f32 0.0, %v622
    %v624 = vpop.f32.mrf.mxu0
    %625 = vdwg.mxu0
    %v627 = vsel %vm128, %v264, 0
    %v630 = vsel %vm128, %v112, 0
    %632 = vmatprep.subr.mxu0 0.0
    %633 = vmatpush1.xpose.msra.mxu0 0.0
    %634 = vmatprep.subr.mxu0 0.0
    %635 = vmatpush1.xpose.msra.mxu0 0.0
    %636 = vmatprep.subr.mxu0 0.0
    %637 = vmatpush1.xpose.msra.mxu0 0.0
    %638 = vmatprep.subr.mxu0 0.0
    %639 = vmatpush1.xpose.msra.mxu0 0.0
    %640 = vmatprep.subr.mxu0 0.0
    %641 = vmatpush1.xpose.msra.mxu0 0.0
    %642 = vmatprep.subr.mxu0 0.0
    %643 = vmatpush1.xpose.msra.mxu0 0.0
    %644 = vmatprep.subr.mxu0 0.0
    %645 = vmatpush1.xpose.msra.mxu0 0.0
    %646 = vmatprep.subr.mxu0 0.0
    %647 = vmatpush1.xpose.msra.mxu0 0.0
    %648 = vmatprep.subr.mxu0 0.0
    %649 = vmatpush1.xpose.msra.mxu0 0.0
    %650 = vmatprep.subr.mxu0 0.0
    %651 = vmatpush1.xpose.msra.mxu0 0.0
    %652 = vmatprep.subr.mxu0 0.0
    %653 = vmatpush1.xpose.msra.mxu0 0.0
    %654 = vmatprep.subr.mxu0 0.0
    %655 = vmatpush1.xpose.msra.mxu0 0.0
    %656 = vmatprep.subr.mxu0 0.0
    %657 = vmatpush1.xpose.msra.mxu0 0.0
    %658 = vmatprep.subr.mxu0 0.0
    %659 = vmatpush1.xpose.msra.mxu0 0.0
    %660 = vmatprep.subr.mxu0 0.0
    %661 = vmatpush1.xpose.msra.mxu0 0.0
    %662 = vmatprep.subr.mxu0 0.0
    %663 = vmatpush1.xpose.msra.mxu0 %v630
    %664 = vmatprep.subr.mxu0 0.0
    %665 = vmatpush2.xpose.msra.mxu0 0.0
    %666 = vmatprep.subr.mxu0 0.0
    %667 = vmatpush2.xpose.msra.mxu0 0.0
    %668 = vmatprep.subr.mxu0 0.0
    %669 = vmatpush2.xpose.msra.mxu0 0.0
    %670 = vmatprep.subr.mxu0 0.0
    %671 = vmatpush2.xpose.msra.mxu0 0.0
    %672 = vmatprep.subr.mxu0 0.0
    %673 = vmatpush2.xpose.msra.mxu0 0.0
    %674 = vmatprep.subr.mxu0 0.0
    %675 = vmatpush2.xpose.msra.mxu0 0.0
    %676 = vmatprep.subr.mxu0 0.0
    %677 = vmatpush2.xpose.msra.mxu0 0.0
    %678 = vmatprep.subr.mxu0 0.0
    %679 = vmatpush2.xpose.msra.mxu0 0.0
    %680 = vmatprep.subr.mxu0 0.0
    %681 = vmatpush2.xpose.msra.mxu0 0.0
    %682 = vmatprep.subr.mxu0 0.0
    %683 = vmatpush2.xpose.msra.mxu0 0.0
    %684 = vmatprep.subr.mxu0 0.0
    %685 = vmatpush2.xpose.msra.mxu0 0.0
    %686 = vmatprep.subr.mxu0 0.0
    %687 = vmatpush2.xpose.msra.mxu0 0.0
    %688 = vmatprep.subr.mxu0 0.0
    %689 = vmatpush2.xpose.msra.mxu0 0.0
    %690 = vmatprep.subr.mxu0 0.0
    %691 = vmatpush2.xpose.msra.mxu0 0.0
    %692 = vmatprep.subr.mxu0 0.0
    %693 = vmatpush2.xpose.msra.mxu0 0.0
    %694 = vmatprep.subr.mxu0 0.0
    %695 = vmatpush2.xpose.msra.mxu0 0.0
    %696 = vmatprep.mubr.f32.mxu0 0.0
    %697 = vmatmul.mubr.f32.gmra.mxu0 %v627
    %v698 = vpop.f32.mrf.mxu0
    %v699 = vadd.f32 0.0, %v698
    %v700 = vpop.f32.mrf.mxu0
    %701 = vdwg.mxu0
    %v703 = vsel %vm128, %v269, 0
    %v706 = vsel %vm128, %v113, 0
    %708 = vmatprep.subr.mxu0 0.0
    %709 = vmatpush1.xpose.msra.mxu0 0.0
    %710 = vmatprep.subr.mxu0 0.0
    %711 = vmatpush1.xpose.msra.mxu0 0.0
    %712 = vmatprep.subr.mxu0 0.0
    %713 = vmatpush1.xpose.msra.mxu0 0.0
    %714 = vmatprep.subr.mxu0 0.0
    %715 = vmatpush1.xpose.msra.mxu0 0.0
    %716 = vmatprep.subr.mxu0 0.0
    %717 = vmatpush1.xpose.msra.mxu0 0.0
    %718 = vmatprep.subr.mxu0 0.0
    %719 = vmatpush1.xpose.msra.mxu0 0.0
    %720 = vmatprep.subr.mxu0 0.0
    %721 = vmatpush1.xpose.msra.mxu0 0.0
    %722 = vmatprep.subr.mxu0 0.0
    %723 = vmatpush1.xpose.msra.mxu0 0.0
    %724 = vmatprep.subr.mxu0 0.0
    %725 = vmatpush1.xpose.msra.mxu0 0.0
    %726 = vmatprep.subr.mxu0 0.0
    %727 = vmatpush1.xpose.msra.mxu0 0.0
    %728 = vmatprep.subr.mxu0 0.0
    %729 = vmatpush1.xpose.msra.mxu0 0.0
    %730 = vmatprep.subr.mxu0 0.0
    %731 = vmatpush1.xpose.msra.mxu0 0.0
    %732 = vmatprep.subr.mxu0 0.0
    %733 = vmatpush1.xpose.msra.mxu0 0.0
    %734 = vmatprep.subr.mxu0 0.0
    %735 = vmatpush1.xpose.msra.mxu0 0.0
    %736 = vmatprep.subr.mxu0 0.0
    %737 = vmatpush1.xpose.msra.mxu0 0.0
    %738 = vmatprep.subr.mxu0 0.0
    %739 = vmatpush1.xpose.msra.mxu0 %v706
    %740 = vmatprep.subr.mxu0 0.0
    %741 = vmatpush2.xpose.msra.mxu0 0.0
    %742 = vmatprep.subr.mxu0 0.0
    %743 = vmatpush2.xpose.msra.mxu0 0.0
    %744 = vmatprep.subr.mxu0 0.0
    %745 = vmatpush2.xpose.msra.mxu0 0.0
    %746 = vmatprep.subr.mxu0 0.0
    %747 = vmatpush2.xpose.msra.mxu0 0.0
    %748 = vmatprep.subr.mxu0 0.0
    %749 = vmatpush2.xpose.msra.mxu0 0.0
    %750 = vmatprep.subr.mxu0 0.0
    %751 = vmatpush2.xpose.msra.mxu0 0.0
    %752 = vmatprep.subr.mxu0 0.0
    %753 = vmatpush2.xpose.msra.mxu0 0.0
    %754 = vmatprep.subr.mxu0 0.0
    %755 = vmatpush2.xpose.msra.mxu0 0.0
    %756 = vmatprep.subr.mxu0 0.0
    %757 = vmatpush2.xpose.msra.mxu0 0.0
    %758 = vmatprep.subr.mxu0 0.0
    %759 = vmatpush2.xpose.msra.mxu0 0.0
    %760 = vmatprep.subr.mxu0 0.0
    %761 = vmatpush2.xpose.msra.mxu0 0.0
    %762 = vmatprep.subr.mxu0 0.0
    %763 = vmatpush2.xpose.msra.mxu0 0.0
    %764 = vmatprep.subr.mxu0 0.0
    %765 = vmatpush2.xpose.msra.mxu0 0.0
    %766 = vmatprep.subr.mxu0 0.0
    %767 = vmatpush2.xpose.msra.mxu0 0.0
    %768 = vmatprep.subr.mxu0 0.0
    %769 = vmatpush2.xpose.msra.mxu0 0.0
    %770 = vmatprep.subr.mxu0 0.0
    %771 = vmatpush2.xpose.msra.mxu0 0.0
    %772 = vmatprep.mubr.f32.mxu0 0.0
    %773 = vmatmul.mubr.f32.gmra.mxu0 %v703
    %v774 = vpop.f32.mrf.mxu0
    %v775 = vadd.f32 0.0, %v774
    %v776 = vpop.f32.mrf.mxu0
    %777 = vdwg.mxu0
    %v779 = vsel %vm128, %v274, 0
    %v782 = vsel %vm128, %v114, 0
    %784 = vmatprep.subr.mxu0 0.0
    %785 = vmatpush1.xpose.msra.mxu0 0.0
    %786 = vmatprep.subr.mxu0 0.0
    %787 = vmatpush1.xpose.msra.mxu0 0.0
    %788 = vmatprep.subr.mxu0 0.0
    %789 = vmatpush1.xpose.msra.mxu0 0.0
    %790 = vmatprep.subr.mxu0 0.0
    %791 = vmatpush1.xpose.msra.mxu0 0.0
    %792 = vmatprep.subr.mxu0 0.0
    %793 = vmatpush1.xpose.msra.mxu0 0.0
    %794 = vmatprep.subr.mxu0 0.0
    %795 = vmatpush1.xpose.msra.mxu0 0.0
    %796 = vmatprep.subr.mxu0 0.0
    %797 = vmatpush1.xpose.msra.mxu0 0.0
    %798 = vmatprep.subr.mxu0 0.0
    %799 = vmatpush1.xpose.msra.mxu0 0.0
    %800 = vmatprep.subr.mxu0 0.0
    %801 = vmatpush1.xpose.msra.mxu0 0.0
    %802 = vmatprep.subr.mxu0 0.0
    %803 = vmatpush1.xpose.msra.mxu0 0.0
    %804 = vmatprep.subr.mxu0 0.0
    %805 = vmatpush1.xpose.msra.mxu0 0.0
    %806 = vmatprep.subr.mxu0 0.0
    %807 = vmatpush1.xpose.msra.mxu0 0.0
    %808 = vmatprep.subr.mxu0 0.0
    %809 = vmatpush1.xpose.msra.mxu0 0.0
    %810 = vmatprep.subr.mxu0 0.0
    %811 = vmatpush1.xpose.msra.mxu0 0.0
    %812 = vmatprep.subr.mxu0 0.0
    %813 = vmatpush1.xpose.msra.mxu0 0.0
    %814 = vmatprep.subr.mxu0 0.0
    %815 = vmatpush1.xpose.msra.mxu0 %v782
    %816 = vmatprep.subr.mxu0 0.0
    %817 = vmatpush2.xpose.msra.mxu0 0.0
    %818 = vmatprep.subr.mxu0 0.0
    %819 = vmatpush2.xpose.msra.mxu0 0.0
    %820 = vmatprep.subr.mxu0 0.0
    %821 = vmatpush2.xpose.msra.mxu0 0.0
    %822 = vmatprep.subr.mxu0 0.0
    %823 = vmatpush2.xpose.msra.mxu0 0.0
    %824 = vmatprep.subr.mxu0 0.0
    %825 = vmatpush2.xpose.msra.mxu0 0.0
    %826 = vmatprep.subr.mxu0 0.0
    %827 = vmatpush2.xpose.msra.mxu0 0.0
    %828 = vmatprep.subr.mxu0 0.0
    %829 = vmatpush2.xpose.msra.mxu0 0.0
    %830 = vmatprep.subr.mxu0 0.0
    %831 = vmatpush2.xpose.msra.mxu0 0.0
    %832 = vmatprep.subr.mxu0 0.0
    %833 = vmatpush2.xpose.msra.mxu0 0.0
    %834 = vmatprep.subr.mxu0 0.0
    %835 = vmatpush2.xpose.msra.mxu0 0.0
    %836 = vmatprep.subr.mxu0 0.0
    %837 = vmatpush2.xpose.msra.mxu0 0.0
    %838 = vmatprep.subr.mxu0 0.0
    %839 = vmatpush2.xpose.msra.mxu0 0.0
    %840 = vmatprep.subr.mxu0 0.0
    %841 = vmatpush2.xpose.msra.mxu0 0.0
    %842 = vmatprep.subr.mxu0 0.0
    %843 = vmatpush2.xpose.msra.mxu0 0.0
    %844 = vmatprep.subr.mxu0 0.0
    %845 = vmatpush2.xpose.msra.mxu0 0.0
    %846 = vmatprep.subr.mxu0 0.0
    %847 = vmatpush2.xpose.msra.mxu0 0.0
    %848 = vmatprep.mubr.f32.mxu0 0.0
    %849 = vmatmul.mubr.f32.gmra.mxu0 %v779
    %v850 = vpop.f32.mrf.mxu0
    %v851 = vadd.f32 0.0, %v850
    %v852 = vpop.f32.mrf.mxu0
    %853 = vdwg.mxu0
    %v855 = vsel %vm128, %v279, 0
    %v858 = vsel %vm128, %v115, 0
    %860 = vmatprep.subr.mxu0 0.0
    %861 = vmatpush1.xpose.msra.mxu0 0.0
    %862 = vmatprep.subr.mxu0 0.0
    %863 = vmatpush1.xpose.msra.mxu0 0.0
    %864 = vmatprep.subr.mxu0 0.0
    %865 = vmatpush1.xpose.msra.mxu0 0.0
    %866 = vmatprep.subr.mxu0 0.0
    %867 = vmatpush1.xpose.msra.mxu0 0.0
    %868 = vmatprep.subr.mxu0 0.0
    %869 = vmatpush1.xpose.msra.mxu0 0.0
    %870 = vmatprep.subr.mxu0 0.0
    %871 = vmatpush1.xpose.msra.mxu0 0.0
    %872 = vmatprep.subr.mxu0 0.0
    %873 = vmatpush1.xpose.msra.mxu0 0.0
    %874 = vmatprep.subr.mxu0 0.0
    %875 = vmatpush1.xpose.msra.mxu0 0.0
    %876 = vmatprep.subr.mxu0 0.0
    %877 = vmatpush1.xpose.msra.mxu0 0.0
    %878 = vmatprep.subr.mxu0 0.0
    %879 = vmatpush1.xpose.msra.mxu0 0.0
    %880 = vmatprep.subr.mxu0 0.0
    %881 = vmatpush1.xpose.msra.mxu0 0.0
    %882 = vmatprep.subr.mxu0 0.0
    %883 = vmatpush1.xpose.msra.mxu0 0.0
    %884 = vmatprep.subr.mxu0 0.0
    %885 = vmatpush1.xpose.msra.mxu0 0.0
    %886 = vmatprep.subr.mxu0 0.0
    %887 = vmatpush1.xpose.msra.mxu0 0.0
    %888 = vmatprep.subr.mxu0 0.0
    %889 = vmatpush1.xpose.msra.mxu0 0.0
    %890 = vmatprep.subr.mxu0 0.0
    %891 = vmatpush1.xpose.msra.mxu0 %v858
    %892 = vmatprep.subr.mxu0 0.0
    %893 = vmatpush2.xpose.msra.mxu0 0.0
    %894 = vmatprep.subr.mxu0 0.0
    %895 = vmatpush2.xpose.msra.mxu0 0.0
    %896 = vmatprep.subr.mxu0 0.0
    %897 = vmatpush2.xpose.msra.mxu0 0.0
    %898 = vmatprep.subr.mxu0 0.0
    %899 = vmatpush2.xpose.msra.mxu0 0.0
    %900 = vmatprep.subr.mxu0 0.0
    %901 = vmatpush2.xpose.msra.mxu0 0.0
    %902 = vmatprep.subr.mxu0 0.0
    %903 = vmatpush2.xpose.msra.mxu0 0.0
    %904 = vmatprep.subr.mxu0 0.0
    %905 = vmatpush2.xpose.msra.mxu0 0.0
    %906 = vmatprep.subr.mxu0 0.0
    %907 = vmatpush2.xpose.msra.mxu0 0.0
    %908 = vmatprep.subr.mxu0 0.0
    %909 = vmatpush2.xpose.msra.mxu0 0.0
    %910 = vmatprep.subr.mxu0 0.0
    %911 = vmatpush2.xpose.msra.mxu0 0.0
    %912 = vmatprep.subr.mxu0 0.0
    %913 = vmatpush2.xpose.msra.mxu0 0.0
    %914 = vmatprep.subr.mxu0 0.0
    %915 = vmatpush2.xpose.msra.mxu0 0.0
    %916 = vmatprep.subr.mxu0 0.0
    %917 = vmatpush2.xpose.msra.mxu0 0.0
    %918 = vmatprep.subr.mxu0 0.0
    %919 = vmatpush2.xpose.msra.mxu0 0.0
    %920 = vmatprep.subr.mxu0 0.0
    %921 = vmatpush2.xpose.msra.mxu0 0.0
    %922 = vmatprep.subr.mxu0 0.0
    %923 = vmatpush2.xpose.msra.mxu0 0.0
    %924 = vmatprep.mubr.f32.mxu0 0.0
    %925 = vmatmul.mubr.f32.gmra.mxu0 %v855
    %v926 = vpop.f32.mrf.mxu0
    %v927 = vadd.f32 0.0, %v926
    %v928 = vpop.f32.mrf.mxu0
    %929 = vdwg.mxu0
    %v931 = vsel %vm128, %v284, 0
    %v934 = vsel %vm128, %v116, 0
    %936 = vmatprep.subr.mxu0 0.0
    %937 = vmatpush1.xpose.msra.mxu0 0.0
    %938 = vmatprep.subr.mxu0 0.0
    %939 = vmatpush1.xpose.msra.mxu0 0.0
    %940 = vmatprep.subr.mxu0 0.0
    %941 = vmatpush1.xpose.msra.mxu0 0.0
    %942 = vmatprep.subr.mxu0 0.0
    %943 = vmatpush1.xpose.msra.mxu0 0.0
    %944 = vmatprep.subr.mxu0 0.0
    %945 = vmatpush1.xpose.msra.mxu0 0.0
    %946 = vmatprep.subr.mxu0 0.0
    %947 = vmatpush1.xpose.msra.mxu0 0.0
    %948 = vmatprep.subr.mxu0 0.0
    %949 = vmatpush1.xpose.msra.mxu0 0.0
    %950 = vmatprep.subr.mxu0 0.0
    %951 = vmatpush1.xpose.msra.mxu0 0.0
    %952 = vmatprep.subr.mxu0 0.0
    %953 = vmatpush1.xpose.msra.mxu0 0.0
    %954 = vmatprep.subr.mxu0 0.0
    %955 = vmatpush1.xpose.msra.mxu0 0.0
    %956 = vmatprep.subr.mxu0 0.0
    %957 = vmatpush1.xpose.msra.mxu0 0.0
    %958 = vmatprep.subr.mxu0 0.0
    %959 = vmatpush1.xpose.msra.mxu0 0.0
    %960 = vmatprep.subr.mxu0 0.0
    %961 = vmatpush1.xpose.msra.mxu0 0.0
    %962 = vmatprep.subr.mxu0 0.0
    %963 = vmatpush1.xpose.msra.mxu0 0.0
    %964 = vmatprep.subr.mxu0 0.0
    %965 = vmatpush1.xpose.msra.mxu0 0.0
    %966 = vmatprep.subr.mxu0 0.0
    %967 = vmatpush1.xpose.msra.mxu0 %v934
    %968 = vmatprep.subr.mxu0 0.0
    %969 = vmatpush2.xpose.msra.mxu0 0.0
    %970 = vmatprep.subr.mxu0 0.0
    %971 = vmatpush2.xpose.msra.mxu0 0.0
    %972 = vmatprep.subr.mxu0 0.0
    %973 = vmatpush2.xpose.msra.mxu0 0.0
    %974 = vmatprep.subr.mxu0 0.0
    %975 = vmatpush2.xpose.msra.mxu0 0.0
    %976 = vmatprep.subr.mxu0 0.0
    %977 = vmatpush2.xpose.msra.mxu0 0.0
    %978 = vmatprep.subr.mxu0 0.0
    %979 = vmatpush2.xpose.msra.mxu0 0.0
    %980 = vmatprep.subr.mxu0 0.0
    %981 = vmatpush2.xpose.msra.mxu0 0.0
    %982 = vmatprep.subr.mxu0 0.0
    %983 = vmatpush2.xpose.msra.mxu0 0.0
    %984 = vmatprep.subr.mxu0 0.0
    %985 = vmatpush2.xpose.msra.mxu0 0.0
    %986 = vmatprep.subr.mxu0 0.0
    %987 = vmatpush2.xpose.msra.mxu0 0.0
    %988 = vmatprep.subr.mxu0 0.0
    %989 = vmatpush2.xpose.msra.mxu0 0.0
    %990 = vmatprep.subr.mxu0 0.0
    %991 = vmatpush2.xpose.msra.mxu0 0.0
    %992 = vmatprep.subr.mxu0 0.0
    %993 = vmatpush2.xpose.msra.mxu0 0.0
    %994 = vmatprep.subr.mxu0 0.0
    %995 = vmatpush2.xpose.msra.mxu0 0.0
    %996 = vmatprep.subr.mxu0 0.0
    %997 = vmatpush2.xpose.msra.mxu0 0.0
    %998 = vmatprep.subr.mxu0 0.0
    %999 = vmatpush2.xpose.msra.mxu0 0.0
    %1000 = vmatprep.mubr.f32.mxu0 0.0
    %1001 = vmatmul.mubr.f32.gmra.mxu0 %v931
    %v1002 = vpop.f32.mrf.mxu0
    %v1003 = vadd.f32 0.0, %v1002
    %v1004 = vpop.f32.mrf.mxu0
    %1005 = vdwg.mxu0
    %v1007 = vsel %vm128, %v289, 0
    %v1010 = vsel %vm128, %v117, 0
    %1012 = vmatprep.subr.mxu0 0.0
    %1013 = vmatpush1.xpose.msra.mxu0 0.0
    %1014 = vmatprep.subr.mxu0 0.0
    %1015 = vmatpush1.xpose.msra.mxu0 0.0
    %1016 = vmatprep.subr.mxu0 0.0
    %1017 = vmatpush1.xpose.msra.mxu0 0.0
    %1018 = vmatprep.subr.mxu0 0.0
    %1019 = vmatpush1.xpose.msra.mxu0 0.0
    %1020 = vmatprep.subr.mxu0 0.0
    %1021 = vmatpush1.xpose.msra.mxu0 0.0
    %1022 = vmatprep.subr.mxu0 0.0
    %1023 = vmatpush1.xpose.msra.mxu0 0.0
    %1024 = vmatprep.subr.mxu0 0.0
    %1025 = vmatpush1.xpose.msra.mxu0 0.0
    %1026 = vmatprep.subr.mxu0 0.0
    %1027 = vmatpush1.xpose.msra.mxu0 0.0
    %1028 = vmatprep.subr.mxu0 0.0
    %1029 = vmatpush1.xpose.msra.mxu0 0.0
    %1030 = vmatprep.subr.mxu0 0.0
    %1031 = vmatpush1.xpose.msra.mxu0 0.0
    %1032 = vmatprep.subr.mxu0 0.0
    %1033 = vmatpush1.xpose.msra.mxu0 0.0
    %1034 = vmatprep.subr.mxu0 0.0
    %1035 = vmatpush1.xpose.msra.mxu0 0.0
    %1036 = vmatprep.subr.mxu0 0.0
    %1037 = vmatpush1.xpose.msra.mxu0 0.0
    %1038 = vmatprep.subr.mxu0 0.0
    %1039 = vmatpush1.xpose.msra.mxu0 0.0
    %1040 = vmatprep.subr.mxu0 0.0
    %1041 = vmatpush1.xpose.msra.mxu0 0.0
    %1042 = vmatprep.subr.mxu0 0.0
    %1043 = vmatpush1.xpose.msra.mxu0 %v1010
    %1044 = vmatprep.subr.mxu0 0.0
    %1045 = vmatpush2.xpose.msra.mxu0 0.0
    %1046 = vmatprep.subr.mxu0 0.0
    %1047 = vmatpush2.xpose.msra.mxu0 0.0
    %1048 = vmatprep.subr.mxu0 0.0
    %1049 = vmatpush2.xpose.msra.mxu0 0.0
    %1050 = vmatprep.subr.mxu0 0.0
    %1051 = vmatpush2.xpose.msra.mxu0 0.0
    %1052 = vmatprep.subr.mxu0 0.0
    %1053 = vmatpush2.xpose.msra.mxu0 0.0
    %1054 = vmatprep.subr.mxu0 0.0
    %1055 = vmatpush2.xpose.msra.mxu0 0.0
    %1056 = vmatprep.subr.mxu0 0.0
    %1057 = vmatpush2.xpose.msra.mxu0 0.0
    %1058 = vmatprep.subr.mxu0 0.0
    %1059 = vmatpush2.xpose.msra.mxu0 0.0
    %1060 = vmatprep.subr.mxu0 0.0
    %1061 = vmatpush2.xpose.msra.mxu0 0.0
    %1062 = vmatprep.subr.mxu0 0.0
    %1063 = vmatpush2.xpose.msra.mxu0 0.0
    %1064 = vmatprep.subr.mxu0 0.0
    %1065 = vmatpush2.xpose.msra.mxu0 0.0
    %1066 = vmatprep.subr.mxu0 0.0
    %1067 = vmatpush2.xpose.msra.mxu0 0.0
    %1068 = vmatprep.subr.mxu0 0.0
    %1069 = vmatpush2.xpose.msra.mxu0 0.0
    %1070 = vmatprep.subr.mxu0 0.0
    %1071 = vmatpush2.xpose.msra.mxu0 0.0
    %1072 = vmatprep.subr.mxu0 0.0
    %1073 = vmatpush2.xpose.msra.mxu0 0.0
    %1074 = vmatprep.subr.mxu0 0.0
    %1075 = vmatpush2.xpose.msra.mxu0 0.0
    %1076 = vmatprep.mubr.f32.mxu0 0.0
    %1077 = vmatmul.mubr.f32.gmra.mxu0 %v1007
    %v1078 = vpop.f32.mrf.mxu0
    %v1079 = vadd.f32 0.0, %v1078
    %v1080 = vpop.f32.mrf.mxu0
    %1081 = vdwg.mxu0
    %v1083 = vsel %vm128, %v294, 0
    %v1086 = vsel %vm128, %v118, 0
    %1088 = vmatprep.subr.mxu0 0.0
    %1089 = vmatpush1.xpose.msra.mxu0 0.0
    %1090 = vmatprep.subr.mxu0 0.0
    %1091 = vmatpush1.xpose.msra.mxu0 0.0
    %1092 = vmatprep.subr.mxu0 0.0
    %1093 = vmatpush1.xpose.msra.mxu0 0.0
    %1094 = vmatprep.subr.mxu0 0.0
    %1095 = vmatpush1.xpose.msra.mxu0 0.0
    %1096 = vmatprep.subr.mxu0 0.0
    %1097 = vmatpush1.xpose.msra.mxu0 0.0
    %1098 = vmatprep.subr.mxu0 0.0
    %1099 = vmatpush1.xpose.msra.mxu0 0.0
    %1100 = vmatprep.subr.mxu0 0.0
    %1101 = vmatpush1.xpose.msra.mxu0 0.0
    %1102 = vmatprep.subr.mxu0 0.0
    %1103 = vmatpush1.xpose.msra.mxu0 0.0
    %1104 = vmatprep.subr.mxu0 0.0
    %1105 = vmatpush1.xpose.msra.mxu0 0.0
    %1106 = vmatprep.subr.mxu0 0.0
    %1107 = vmatpush1.xpose.msra.mxu0 0.0
    %1108 = vmatprep.subr.mxu0 0.0
    %1109 = vmatpush1.xpose.msra.mxu0 0.0
    %1110 = vmatprep.subr.mxu0 0.0
    %1111 = vmatpush1.xpose.msra.mxu0 0.0
    %1112 = vmatprep.subr.mxu0 0.0
    %1113 = vmatpush1.xpose.msra.mxu0 0.0
    %1114 = vmatprep.subr.mxu0 0.0
    %1115 = vmatpush1.xpose.msra.mxu0 0.0
    %1116 = vmatprep.subr.mxu0 0.0
    %1117 = vmatpush1.xpose.msra.mxu0 0.0
    %1118 = vmatprep.subr.mxu0 0.0
    %1119 = vmatpush1.xpose.msra.mxu0 %v1086
    %1120 = vmatprep.subr.mxu0 0.0
    %1121 = vmatpush2.xpose.msra.mxu0 0.0
    %1122 = vmatprep.subr.mxu0 0.0
    %1123 = vmatpush2.xpose.msra.mxu0 0.0
    %1124 = vmatprep.subr.mxu0 0.0
    %1125 = vmatpush2.xpose.msra.mxu0 0.0
    %1126 = vmatprep.subr.mxu0 0.0
    %1127 = vmatpush2.xpose.msra.mxu0 0.0
    %1128 = vmatprep.subr.mxu0 0.0
    %1129 = vmatpush2.xpose.msra.mxu0 0.0
    %1130 = vmatprep.subr.mxu0 0.0
    %1131 = vmatpush2.xpose.msra.mxu0 0.0
    %1132 = vmatprep.subr.mxu0 0.0
    %1133 = vmatpush2.xpose.msra.mxu0 0.0
    %1134 = vmatprep.subr.mxu0 0.0
    %1135 = vmatpush2.xpose.msra.mxu0 0.0
    %1136 = vmatprep.subr.mxu0 0.0
    %1137 = vmatpush2.xpose.msra.mxu0 0.0
    %1138 = vmatprep.subr.mxu0 0.0
    %1139 = vmatpush2.xpose.msra.mxu0 0.0
    %1140 = vmatprep.subr.mxu0 0.0
    %1141 = vmatpush2.xpose.msra.mxu0 0.0
    %1142 = vmatprep.subr.mxu0 0.0
    %1143 = vmatpush2.xpose.msra.mxu0 0.0
    %1144 = vmatprep.subr.mxu0 0.0
    %1145 = vmatpush2.xpose.msra.mxu0 0.0
    %1146 = vmatprep.subr.mxu0 0.0
    %1147 = vmatpush2.xpose.msra.mxu0 0.0
    %1148 = vmatprep.subr.mxu0 0.0
    %1149 = vmatpush2.xpose.msra.mxu0 0.0
    %1150 = vmatprep.subr.mxu0 0.0
    %1151 = vmatpush2.xpose.msra.mxu0 0.0
    %1152 = vmatprep.mubr.f32.mxu0 0.0
    %1153 = vmatmul.mubr.f32.gmra.mxu0 %v1083
    %v1154 = vpop.f32.mrf.mxu0
    %v1155 = vadd.f32 0.0, %v1154
    %v1156 = vpop.f32.mrf.mxu0
    %1157 = vdwg.mxu0
    %v1159 = vsel %vm128, %v299, 0
    %v1162 = vsel %vm128, %v119, 0
    %1164 = vmatprep.subr.mxu0 0.0
    %1165 = vmatpush1.xpose.msra.mxu0 0.0
    %1166 = vmatprep.subr.mxu0 0.0
    %1167 = vmatpush1.xpose.msra.mxu0 0.0
    %1168 = vmatprep.subr.mxu0 0.0
    %1169 = vmatpush1.xpose.msra.mxu0 0.0
    %1170 = vmatprep.subr.mxu0 0.0
    %1171 = vmatpush1.xpose.msra.mxu0 0.0
    %1172 = vmatprep.subr.mxu0 0.0
    %1173 = vmatpush1.xpose.msra.mxu0 0.0
    %1174 = vmatprep.subr.mxu0 0.0
    %1175 = vmatpush1.xpose.msra.mxu0 0.0
    %1176 = vmatprep.subr.mxu0 0.0
    %1177 = vmatpush1.xpose.msra.mxu0 0.0
    %1178 = vmatprep.subr.mxu0 0.0
    %1179 = vmatpush1.xpose.msra.mxu0 0.0
    %1180 = vmatprep.subr.mxu0 0.0
    %1181 = vmatpush1.xpose.msra.mxu0 0.0
    %1182 = vmatprep.subr.mxu0 0.0
    %1183 = vmatpush1.xpose.msra.mxu0 0.0
    %1184 = vmatprep.subr.mxu0 0.0
    %1185 = vmatpush1.xpose.msra.mxu0 0.0
    %1186 = vmatprep.subr.mxu0 0.0
    %1187 = vmatpush1.xpose.msra.mxu0 0.0
    %1188 = vmatprep.subr.mxu0 0.0
    %1189 = vmatpush1.xpose.msra.mxu0 0.0
    %1190 = vmatprep.subr.mxu0 0.0
    %1191 = vmatpush1.xpose.msra.mxu0 0.0
    %1192 = vmatprep.subr.mxu0 0.0
    %1193 = vmatpush1.xpose.msra.mxu0 0.0
    %1194 = vmatprep.subr.mxu0 0.0
    %1195 = vmatpush1.xpose.msra.mxu0 %v1162
    %1196 = vmatprep.subr.mxu0 0.0
    %1197 = vmatpush2.xpose.msra.mxu0 0.0
    %1198 = vmatprep.subr.mxu0 0.0
    %1199 = vmatpush2.xpose.msra.mxu0 0.0
    %1200 = vmatprep.subr.mxu0 0.0
    %1201 = vmatpush2.xpose.msra.mxu0 0.0
    %1202 = vmatprep.subr.mxu0 0.0
    %1203 = vmatpush2.xpose.msra.mxu0 0.0
    %1204 = vmatprep.subr.mxu0 0.0
    %1205 = vmatpush2.xpose.msra.mxu0 0.0
    %1206 = vmatprep.subr.mxu0 0.0
    %1207 = vmatpush2.xpose.msra.mxu0 0.0
    %1208 = vmatprep.subr.mxu0 0.0
    %1209 = vmatpush2.xpose.msra.mxu0 0.0
    %1210 = vmatprep.subr.mxu0 0.0
    %1211 = vmatpush2.xpose.msra.mxu0 0.0
    %1212 = vmatprep.subr.mxu0 0.0
    %1213 = vmatpush2.xpose.msra.mxu0 0.0
    %1214 = vmatprep.subr.mxu0 0.0
    %1215 = vmatpush2.xpose.msra.mxu0 0.0
    %1216 = vmatprep.subr.mxu0 0.0
    %1217 = vmatpush2.xpose.msra.mxu0 0.0
    %1218 = vmatprep.subr.mxu0 0.0
    %1219 = vmatpush2.xpose.msra.mxu0 0.0
    %1220 = vmatprep.subr.mxu0 0.0
    %1221 = vmatpush2.xpose.msra.mxu0 0.0
    %1222 = vmatprep.subr.mxu0 0.0
    %1223 = vmatpush2.xpose.msra.mxu0 0.0
    %1224 = vmatprep.subr.mxu0 0.0
    %1225 = vmatpush2.xpose.msra.mxu0 0.0
    %1226 = vmatprep.subr.mxu0 0.0
    %1227 = vmatpush2.xpose.msra.mxu0 0.0
    %1228 = vmatprep.mubr.f32.mxu0 0.0
    %1229 = vmatmul.mubr.f32.gmra.mxu0 %v1159
    %v1230 = vpop.f32.mrf.mxu0
    %v1231 = vadd.f32 0.0, %v1230
    %v1232 = vpop.f32.mrf.mxu0
    %1233 = vdwg.mxu0
    %v1235 = vsel %vm128, %v304, 0
    %v1238 = vsel %vm128, %v120, 0
    %1240 = vmatprep.subr.mxu0 0.0
    %1241 = vmatpush1.xpose.msra.mxu0 0.0
    %1242 = vmatprep.subr.mxu0 0.0
    %1243 = vmatpush1.xpose.msra.mxu0 0.0
    %1244 = vmatprep.subr.mxu0 0.0
    %1245 = vmatpush1.xpose.msra.mxu0 0.0
    %1246 = vmatprep.subr.mxu0 0.0
    %1247 = vmatpush1.xpose.msra.mxu0 0.0
    %1248 = vmatprep.subr.mxu0 0.0
    %1249 = vmatpush1.xpose.msra.mxu0 0.0
    %1250 = vmatprep.subr.mxu0 0.0
    %1251 = vmatpush1.xpose.msra.mxu0 0.0
    %1252 = vmatprep.subr.mxu0 0.0
    %1253 = vmatpush1.xpose.msra.mxu0 0.0
    %1254 = vmatprep.subr.mxu0 0.0
    %1255 = vmatpush1.xpose.msra.mxu0 0.0
    %1256 = vmatprep.subr.mxu0 0.0
    %1257 = vmatpush1.xpose.msra.mxu0 0.0
    %1258 = vmatprep.subr.mxu0 0.0
    %1259 = vmatpush1.xpose.msra.mxu0 0.0
    %1260 = vmatprep.subr.mxu0 0.0
    %1261 = vmatpush1.xpose.msra.mxu0 0.0
    %1262 = vmatprep.subr.mxu0 0.0
    %1263 = vmatpush1.xpose.msra.mxu0 0.0
    %1264 = vmatprep.subr.mxu0 0.0
    %1265 = vmatpush1.xpose.msra.mxu0 0.0
    %1266 = vmatprep.subr.mxu0 0.0
    %1267 = vmatpush1.xpose.msra.mxu0 0.0
    %1268 = vmatprep.subr.mxu0 0.0
    %1269 = vmatpush1.xpose.msra.mxu0 0.0
    %1270 = vmatprep.subr.mxu0 0.0
    %1271 = vmatpush1.xpose.msra.mxu0 %v1238
    %1272 = vmatprep.subr.mxu0 0.0
    %1273 = vmatpush2.xpose.msra.mxu0 0.0
    %1274 = vmatprep.subr.mxu0 0.0
    %1275 = vmatpush2.xpose.msra.mxu0 0.0
    %1276 = vmatprep.subr.mxu0 0.0
    %1277 = vmatpush2.xpose.msra.mxu0 0.0
    %1278 = vmatprep.subr.mxu0 0.0
    %1279 = vmatpush2.xpose.msra.mxu0 0.0
    %1280 = vmatprep.subr.mxu0 0.0
    %1281 = vmatpush2.xpose.msra.mxu0 0.0
    %1282 = vmatprep.subr.mxu0 0.0
    %1283 = vmatpush2.xpose.msra.mxu0 0.0
    %1284 = vmatprep.subr.mxu0 0.0
    %1285 = vmatpush2.xpose.msra.mxu0 0.0
    %1286 = vmatprep.subr.mxu0 0.0
    %1287 = vmatpush2.xpose.msra.mxu0 0.0
    %1288 = vmatprep.subr.mxu0 0.0
    %1289 = vmatpush2.xpose.msra.mxu0 0.0
    %1290 = vmatprep.subr.mxu0 0.0
    %1291 = vmatpush2.xpose.msra.mxu0 0.0
    %1292 = vmatprep.subr.mxu0 0.0
    %1293 = vmatpush2.xpose.msra.mxu0 0.0
    %1294 = vmatprep.subr.mxu0 0.0
    %1295 = vmatpush2.xpose.msra.mxu0 0.0
    %1296 = vmatprep.subr.mxu0 0.0
    %1297 = vmatpush2.xpose.msra.mxu0 0.0
    %1298 = vmatprep.subr.mxu0 0.0
    %1299 = vmatpush2.xpose.msra.mxu0 0.0
    %1300 = vmatprep.subr.mxu0 0.0
    %1301 = vmatpush2.xpose.msra.mxu0 0.0
    %1302 = vmatprep.subr.mxu0 0.0
    %1303 = vmatpush2.xpose.msra.mxu0 0.0
    %1304 = vmatprep.mubr.f32.mxu0 0.0
    %1305 = vmatmul.mubr.f32.gmra.mxu0 %v1235
    %v1306 = vpop.f32.mrf.mxu0
    %v1307 = vadd.f32 0.0, %v1306
    %v1308 = vpop.f32.mrf.mxu0
    %1309 = vdwg.mxu0
    %v1311 = vsel %vm128, %v309, 0
    %v1314 = vsel %vm128, %v121, 0
    %1316 = vmatprep.subr.mxu0 0.0
    %1317 = vmatpush1.xpose.msra.mxu0 0.0
    %1318 = vmatprep.subr.mxu0 0.0
    %1319 = vmatpush1.xpose.msra.mxu0 0.0
    %1320 = vmatprep.subr.mxu0 0.0
    %1321 = vmatpush1.xpose.msra.mxu0 0.0
    %1322 = vmatprep.subr.mxu0 0.0
    %1323 = vmatpush1.xpose.msra.mxu0 0.0
    %1324 = vmatprep.subr.mxu0 0.0
    %1325 = vmatpush1.xpose.msra.mxu0 0.0
    %1326 = vmatprep.subr.mxu0 0.0
    %1327 = vmatpush1.xpose.msra.mxu0 0.0
    %1328 = vmatprep.subr.mxu0 0.0
    %1329 = vmatpush1.xpose.msra.mxu0 0.0
    %1330 = vmatprep.subr.mxu0 0.0
    %1331 = vmatpush1.xpose.msra.mxu0 0.0
    %1332 = vmatprep.subr.mxu0 0.0
    %1333 = vmatpush1.xpose.msra.mxu0 0.0
    %1334 = vmatprep.subr.mxu0 0.0
    %1335 = vmatpush1.xpose.msra.mxu0 0.0
    %1336 = vmatprep.subr.mxu0 0.0
    %1337 = vmatpush1.xpose.msra.mxu0 0.0
    %1338 = vmatprep.subr.mxu0 0.0
    %1339 = vmatpush1.xpose.msra.mxu0 0.0
    %1340 = vmatprep.subr.mxu0 0.0
    %1341 = vmatpush1.xpose.msra.mxu0 0.0
    %1342 = vmatprep.subr.mxu0 0.0
    %1343 = vmatpush1.xpose.msra.mxu0 0.0
    %1344 = vmatprep.subr.mxu0 0.0
    %1345 = vmatpush1.xpose.msra.mxu0 0.0
    %1346 = vmatprep.subr.mxu0 0.0
    %1347 = vmatpush1.xpose.msra.mxu0 %v1314
    %1348 = vmatprep.subr.mxu0 0.0
    %1349 = vmatpush2.xpose.msra.mxu0 0.0
    %1350 = vmatprep.subr.mxu0 0.0
    %1351 = vmatpush2.xpose.msra.mxu0 0.0
    %1352 = vmatprep.subr.mxu0 0.0
    %1353 = vmatpush2.xpose.msra.mxu0 0.0
    %1354 = vmatprep.subr.mxu0 0.0
    %1355 = vmatpush2.xpose.msra.mxu0 0.0
    %1356 = vmatprep.subr.mxu0 0.0
    %1357 = vmatpush2.xpose.msra.mxu0 0.0
    %1358 = vmatprep.subr.mxu0 0.0
    %1359 = vmatpush2.xpose.msra.mxu0 0.0
    %1360 = vmatprep.subr.mxu0 0.0
    %1361 = vmatpush2.xpose.msra.mxu0 0.0
    %1362 = vmatprep.subr.mxu0 0.0
    %1363 = vmatpush2.xpose.msra.mxu0 0.0
    %1364 = vmatprep.subr.mxu0 0.0
    %1365 = vmatpush2.xpose.msra.mxu0 0.0
    %1366 = vmatprep.subr.mxu0 0.0
    %1367 = vmatpush2.xpose.msra.mxu0 0.0
    %1368 = vmatprep.subr.mxu0 0.0
    %1369 = vmatpush2.xpose.msra.mxu0 0.0
    %1370 = vmatprep.subr.mxu0 0.0
    %1371 = vmatpush2.xpose.msra.mxu0 0.0
    %1372 = vmatprep.subr.mxu0 0.0
    %1373 = vmatpush2.xpose.msra.mxu0 0.0
    %1374 = vmatprep.subr.mxu0 0.0
    %1375 = vmatpush2.xpose.msra.mxu0 0.0
    %1376 = vmatprep.subr.mxu0 0.0
    %1377 = vmatpush2.xpose.msra.mxu0 0.0
    %1378 = vmatprep.subr.mxu0 0.0
    %1379 = vmatpush2.xpose.msra.mxu0 0.0
    %1380 = vmatprep.mubr.f32.mxu0 0.0
    %1381 = vmatmul.mubr.f32.gmra.mxu0 %v1311
    %v1382 = vpop.f32.mrf.mxu0
    %v1383 = vadd.f32 0.0, %v1382
    %v1384 = vpop.f32.mrf.mxu0
    %1385 = vdwg.mxu0
    %v1387 = vsel %vm128, %v314, 0
    %v1390 = vsel %vm128, %v122, 0
    %1392 = vmatprep.subr.mxu0 0.0
    %1393 = vmatpush1.xpose.msra.mxu0 0.0
    %1394 = vmatprep.subr.mxu0 0.0
    %1395 = vmatpush1.xpose.msra.mxu0 0.0
    %1396 = vmatprep.subr.mxu0 0.0
    %1397 = vmatpush1.xpose.msra.mxu0 0.0
    %1398 = vmatprep.subr.mxu0 0.0
    %1399 = vmatpush1.xpose.msra.mxu0 0.0
    %1400 = vmatprep.subr.mxu0 0.0
    %1401 = vmatpush1.xpose.msra.mxu0 0.0
    %1402 = vmatprep.subr.mxu0 0.0
    %1403 = vmatpush1.xpose.msra.mxu0 0.0
    %1404 = vmatprep.subr.mxu0 0.0
    %1405 = vmatpush1.xpose.msra.mxu0 0.0
    %1406 = vmatprep.subr.mxu0 0.0
    %1407 = vmatpush1.xpose.msra.mxu0 0.0
    %1408 = vmatprep.subr.mxu0 0.0
    %1409 = vmatpush1.xpose.msra.mxu0 0.0
    %1410 = vmatprep.subr.mxu0 0.0
    %1411 = vmatpush1.xpose.msra.mxu0 0.0
    %1412 = vmatprep.subr.mxu0 0.0
    %1413 = vmatpush1.xpose.msra.mxu0 0.0
    %1414 = vmatprep.subr.mxu0 0.0
    %1415 = vmatpush1.xpose.msra.mxu0 0.0
    %1416 = vmatprep.subr.mxu0 0.0
    %1417 = vmatpush1.xpose.msra.mxu0 0.0
    %1418 = vmatprep.subr.mxu0 0.0
    %1419 = vmatpush1.xpose.msra.mxu0 0.0
    %1420 = vmatprep.subr.mxu0 0.0
    %1421 = vmatpush1.xpose.msra.mxu0 0.0
    %1422 = vmatprep.subr.mxu0 0.0
    %1423 = vmatpush1.xpose.msra.mxu0 %v1390
    %1424 = vmatprep.subr.mxu0 0.0
    %1425 = vmatpush2.xpose.msra.mxu0 0.0
    %1426 = vmatprep.subr.mxu0 0.0
    %1427 = vmatpush2.xpose.msra.mxu0 0.0
    %1428 = vmatprep.subr.mxu0 0.0
    %1429 = vmatpush2.xpose.msra.mxu0 0.0
    %1430 = vmatprep.subr.mxu0 0.0
    %1431 = vmatpush2.xpose.msra.mxu0 0.0
    %1432 = vmatprep.subr.mxu0 0.0
    %1433 = vmatpush2.xpose.msra.mxu0 0.0
    %1434 = vmatprep.subr.mxu0 0.0
    %1435 = vmatpush2.xpose.msra.mxu0 0.0
    %1436 = vmatprep.subr.mxu0 0.0
    %1437 = vmatpush2.xpose.msra.mxu0 0.0
    %1438 = vmatprep.subr.mxu0 0.0
    %1439 = vmatpush2.xpose.msra.mxu0 0.0
    %1440 = vmatprep.subr.mxu0 0.0
    %1441 = vmatpush2.xpose.msra.mxu0 0.0
    %1442 = vmatprep.subr.mxu0 0.0
    %1443 = vmatpush2.xpose.msra.mxu0 0.0
    %1444 = vmatprep.subr.mxu0 0.0
    %1445 = vmatpush2.xpose.msra.mxu0 0.0
    %1446 = vmatprep.subr.mxu0 0.0
    %1447 = vmatpush2.xpose.msra.mxu0 0.0
    %1448 = vmatprep.subr.mxu0 0.0
    %1449 = vmatpush2.xpose.msra.mxu0 0.0
    %1450 = vmatprep.subr.mxu0 0.0
    %1451 = vmatpush2.xpose.msra.mxu0 0.0
    %1452 = vmatprep.subr.mxu0 0.0
    %1453 = vmatpush2.xpose.msra.mxu0 0.0
    %1454 = vmatprep.subr.mxu0 0.0
    %1455 = vmatpush2.xpose.msra.mxu0 0.0
    %1456 = vmatprep.mubr.f32.mxu0 0.0
    %1457 = vmatmul.mubr.f32.gmra.mxu0 %v1387
    %v1458 = vpop.f32.mrf.mxu0
    %v1459 = vadd.f32 0.0, %v1458
    %v1460 = vpop.f32.mrf.mxu0
    %1461 = vdwg.mxu0
    %v1463 = vsel %vm128, %v319, 0
    %v1466 = vsel %vm128, %v123, 0
    %1468 = vmatprep.subr.mxu0 0.0
    %1469 = vmatpush1.xpose.msra.mxu0 0.0
    %1470 = vmatprep.subr.mxu0 0.0
    %1471 = vmatpush1.xpose.msra.mxu0 0.0
    %1472 = vmatprep.subr.mxu0 0.0
    %1473 = vmatpush1.xpose.msra.mxu0 0.0
    %1474 = vmatprep.subr.mxu0 0.0
    %1475 = vmatpush1.xpose.msra.mxu0 0.0
    %1476 = vmatprep.subr.mxu0 0.0
    %1477 = vmatpush1.xpose.msra.mxu0 0.0
    %1478 = vmatprep.subr.mxu0 0.0
    %1479 = vmatpush1.xpose.msra.mxu0 0.0
    %1480 = vmatprep.subr.mxu0 0.0
    %1481 = vmatpush1.xpose.msra.mxu0 0.0
    %1482 = vmatprep.subr.mxu0 0.0
    %1483 = vmatpush1.xpose.msra.mxu0 0.0
    %1484 = vmatprep.subr.mxu0 0.0
    %1485 = vmatpush1.xpose.msra.mxu0 0.0
    %1486 = vmatprep.subr.mxu0 0.0
    %1487 = vmatpush1.xpose.msra.mxu0 0.0
    %1488 = vmatprep.subr.mxu0 0.0
    %1489 = vmatpush1.xpose.msra.mxu0 0.0
    %1490 = vmatprep.subr.mxu0 0.0
    %1491 = vmatpush1.xpose.msra.mxu0 0.0
    %1492 = vmatprep.subr.mxu0 0.0
    %1493 = vmatpush1.xpose.msra.mxu0 0.0
    %1494 = vmatprep.subr.mxu0 0.0
    %1495 = vmatpush1.xpose.msra.mxu0 0.0
    %1496 = vmatprep.subr.mxu0 0.0
    %1497 = vmatpush1.xpose.msra.mxu0 0.0
    %1498 = vmatprep.subr.mxu0 0.0
    %1499 = vmatpush1.xpose.msra.mxu0 %v1466
    %1500 = vmatprep.subr.mxu0 0.0
    %1501 = vmatpush2.xpose.msra.mxu0 0.0
    %1502 = vmatprep.subr.mxu0 0.0
    %1503 = vmatpush2.xpose.msra.mxu0 0.0
    %1504 = vmatprep.subr.mxu0 0.0
    %1505 = vmatpush2.xpose.msra.mxu0 0.0
    %1506 = vmatprep.subr.mxu0 0.0
    %1507 = vmatpush2.xpose.msra.mxu0 0.0
    %1508 = vmatprep.subr.mxu0 0.0
    %1509 = vmatpush2.xpose.msra.mxu0 0.0
    %1510 = vmatprep.subr.mxu0 0.0
    %1511 = vmatpush2.xpose.msra.mxu0 0.0
    %1512 = vmatprep.subr.mxu0 0.0
    %1513 = vmatpush2.xpose.msra.mxu0 0.0
    %1514 = vmatprep.subr.mxu0 0.0
    %1515 = vmatpush2.xpose.msra.mxu0 0.0
    %1516 = vmatprep.subr.mxu0 0.0
    %1517 = vmatpush2.xpose.msra.mxu0 0.0
    %1518 = vmatprep.subr.mxu0 0.0
    %1519 = vmatpush2.xpose.msra.mxu0 0.0
    %1520 = vmatprep.subr.mxu0 0.0
    %1521 = vmatpush2.xpose.msra.mxu0 0.0
    %1522 = vmatprep.subr.mxu0 0.0
    %1523 = vmatpush2.xpose.msra.mxu0 0.0
    %1524 = vmatprep.subr.mxu0 0.0
    %1525 = vmatpush2.xpose.msra.mxu0 0.0
    %1526 = vmatprep.subr.mxu0 0.0
    %1527 = vmatpush2.xpose.msra.mxu0 0.0
    %1528 = vmatprep.subr.mxu0 0.0
    %1529 = vmatpush2.xpose.msra.mxu0 0.0
    %1530 = vmatprep.subr.mxu0 0.0
    %1531 = vmatpush2.xpose.msra.mxu0 0.0
    %1532 = vmatprep.mubr.f32.mxu0 0.0
    %1533 = vmatmul.mubr.f32.gmra.mxu0 %v1463
    %v1534 = vpop.f32.mrf.mxu0
    %v1535 = vadd.f32 0.0, %v1534
    %v1536 = vpop.f32.mrf.mxu0
    %1537 = vdwg.mxu0
    %v1538 = vtanh.pop %v395
    %v1539 = vtanh.pop %v471
    %v1540 = vtanh.pop %v547
    %v1541 = vtanh.pop %v623
    %v1542 = vtanh.pop %v699
    %v1543 = vtanh.pop %v775
    %v1544 = vtanh.pop %v851
    %v1545 = vtanh.pop %v927
    %v1546 = vtanh.pop %v1003
    %v1547 = vtanh.pop %v1079
    %v1548 = vtanh.pop %v1155
    %v1549 = vtanh.pop %v1231
    %v1550 = vtanh.pop %v1307
    %v1551 = vtanh.pop %v1383
    %v1552 = vtanh.pop %v1459
    %v1553 = vtanh.pop %v1535
    %vm1554 = vcmask 64512
    %v1555 = vsel %vm1554, %v1538, 0.0
    %1556 = vadd.xlane.f32.xlu0 %v1555
    %v1557 = vpop.xlane.xlu0 %1556
    %v1558 = vsel %vm1554, %v1539, 0.0
    %1559 = vadd.xlane.f32.xlu0 %v1558
    %v1560 = vpop.xlane.xlu0 %1559
    %v1561 = vsel %vm1554, %v1540, 0.0
    %1562 = vadd.xlane.f32.xlu0 %v1561
    %v1563 = vpop.xlane.xlu0 %1562
    %v1564 = vsel %vm1554, %v1541, 0.0
    %1565 = vadd.xlane.f32.xlu0 %v1564
    %v1566 = vpop.xlane.xlu0 %1565
    %v1567 = vsel %vm1554, %v1542, 0.0
    %1568 = vadd.xlane.f32.xlu0 %v1567
    %v1569 = vpop.xlane.xlu0 %1568
    %v1570 = vsel %vm1554, %v1543, 0.0
    %1571 = vadd.xlane.f32.xlu0 %v1570
    %v1572 = vpop.xlane.xlu0 %1571
    %v1573 = vsel %vm1554, %v1544, 0.0
    %1574 = vadd.xlane.f32.xlu0 %v1573
    %v1575 = vpop.xlane.xlu0 %1574
    %v1576 = vsel %vm1554, %v1545, 0.0
    %1577 = vadd.xlane.f32.xlu0 %v1576
    %v1578 = vpop.xlane.xlu0 %1577
    %v1579 = vsel %vm1554, %v1546, 0.0
    %1580 = vadd.xlane.f32.xlu0 %v1579
    %v1581 = vpop.xlane.xlu0 %1580
    %v1582 = vsel %vm1554, %v1547, 0.0
    %1583 = vadd.xlane.f32.xlu0 %v1582
    %v1584 = vpop.xlane.xlu0 %1583
    %v1585 = vsel %vm1554, %v1548, 0.0
    %1586 = vadd.xlane.f32.xlu0 %v1585
    %v1587 = vpop.xlane.xlu0 %1586
    %v1588 = vsel %vm1554, %v1549, 0.0
    %1589 = vadd.xlane.f32.xlu0 %v1588
    %v1590 = vpop.xlane.xlu0 %1589
    %v1591 = vsel %vm1554, %v1550, 0.0
    %1592 = vadd.xlane.f32.xlu0 %v1591
    %v1593 = vpop.xlane.xlu0 %1592
    %v1594 = vsel %vm1554, %v1551, 0.0
    %1595 = vadd.xlane.f32.xlu0 %v1594
    %v1596 = vpop.xlane.xlu0 %1595
    %v1597 = vsel %vm1554, %v1552, 0.0
    %1598 = vadd.xlane.f32.xlu0 %v1597
    %v1599 = vpop.xlane.xlu0 %1598
    %v1600 = vsel %vm1554, %v1553, 0.0
    %1601 = vadd.xlane.f32.xlu0 %v1600
    %v1602 = vpop.xlane.xlu0 %1601
    %v1619 = vlaneseq
    %v1620 = vand.u32 %v1619, 127
    %v1621 = vlaneseq
    %v1622 = vshrl.u32 %v1621, 7
    %v1623 = vsub.s32 %v1620, %v1622
    %v1624 = vrot.slane %v1557, %v1623
    %v1625 = vlaneseq
    %v1626 = vshrl.u32 %v1625, 7
    %v1627 = vsub.s32 %v1620, %v1626
    %v1628 = vrot.slane %v1560, %v1627
    %v1629 = vlaneseq
    %v1630 = vshrl.u32 %v1629, 7
    %v1631 = vsub.s32 %v1620, %v1630
    %v1632 = vrot.slane %v1563, %v1631
    %v1633 = vlaneseq
    %v1634 = vshrl.u32 %v1633, 7
    %v1635 = vsub.s32 %v1620, %v1634
    %v1636 = vrot.slane %v1566, %v1635
    %v1637 = vlaneseq
    %v1638 = vshrl.u32 %v1637, 7
    %v1639 = vsub.s32 %v1620, %v1638
    %v1640 = vrot.slane %v1569, %v1639
    %v1641 = vlaneseq
    %v1642 = vshrl.u32 %v1641, 7
    %v1643 = vsub.s32 %v1620, %v1642
    %v1644 = vrot.slane %v1572, %v1643
    %v1645 = vlaneseq
    %v1646 = vshrl.u32 %v1645, 7
    %v1647 = vsub.s32 %v1620, %v1646
    %v1648 = vrot.slane %v1575, %v1647
    %v1649 = vlaneseq
    %v1650 = vshrl.u32 %v1649, 7
    %v1651 = vsub.s32 %v1620, %v1650
    %v1652 = vrot.slane %v1578, %v1651
    %v1653 = vlaneseq
    %v1654 = vshrl.u32 %v1653, 7
    %v1655 = vsub.s32 %v1620, %v1654
    %v1656 = vrot.slane %v1581, %v1655
    %v1657 = vlaneseq
    %v1658 = vshrl.u32 %v1657, 7
    %v1659 = vsub.s32 %v1620, %v1658
    %v1660 = vrot.slane %v1584, %v1659
    %v1661 = vlaneseq
    %v1662 = vshrl.u32 %v1661, 7
    %v1663 = vsub.s32 %v1620, %v1662
    %v1664 = vrot.slane %v1587, %v1663
    %v1665 = vlaneseq
    %v1666 = vshrl.u32 %v1665, 7
    %v1667 = vsub.s32 %v1620, %v1666
    %v1668 = vrot.slane %v1590, %v1667
    %v1669 = vlaneseq
    %v1670 = vshrl.u32 %v1669, 7
    %v1671 = vsub.s32 %v1620, %v1670
    %v1672 = vrot.slane %v1593, %v1671
    %v1673 = vlaneseq
    %v1674 = vshrl.u32 %v1673, 7
    %v1675 = vsub.s32 %v1620, %v1674
    %v1676 = vrot.slane %v1596, %v1675
    %v1677 = vlaneseq
    %v1678 = vshrl.u32 %v1677, 7
    %v1679 = vsub.s32 %v1620, %v1678
    %v1680 = vrot.slane %v1599, %v1679
    %v1681 = vlaneseq
    %v1682 = vshrl.u32 %v1681, 7
    %v1683 = vsub.s32 %v1620, %v1682
    %v1684 = vrot.slane %v1602, %v1683
    %vm1685 = vcmask 1041409
    %v1686 = vsel %vm1685, %v1628, %v1624
    %vm1687 = vcmask 1042434
    %v1688 = vsel %vm1687, %v1632, %v1686
    %vm1689 = vcmask 1043459
    %v1690 = vsel %vm1689, %v1636, %v1688
    %vm1691 = vcmask 1044484
    %v1692 = vsel %vm1691, %v1640, %v1690
    %vm1693 = vcmask 1045509
    %v1694 = vsel %vm1693, %v1644, %v1692
    %vm1695 = vcmask 1046534
    %v1696 = vsel %vm1695, %v1648, %v1694
    %vm1697 = vcmask 1047559
    %v1698 = vsel %vm1697, %v1652, %v1696
    %v1699 = vsel %vm1685, %v1660, %v1656
    %v1700 = vsel %vm1687, %v1664, %v1699
    %v1701 = vsel %vm1689, %v1668, %v1700
    %v1702 = vsel %vm1691, %v1672, %v1701
    %v1703 = vsel %vm1693, %v1676, %v1702
    %v1704 = vsel %vm1695, %v1680, %v1703
    %v1705 = vsel %vm1697, %v1684, %v1704
    %v1708 = vsel %vm1554, %v1698, -inf
    %1709 = vmax.xlane.f32.xlu0 %v1708
    %v1710 = vpop.xlane.xlu0 %1709
    %v1711 = vsel %vm1554, %v1705, -inf
    %1712 = vmax.xlane.f32.xlu0 %v1711
    %v1713 = vpop.xlane.xlu0 %1712
    %v1716 = vlaneseq
    %v1717 = vshrl.u32 %v1716, 7
    %v1718 = vsub.s32 0, %v1717
    %v1719 = vrot.slane %v1710, %v1718
    %v1720 = vlaneseq
    %v1721 = vshrl.u32 %v1720, 7
    %v1722 = vsub.s32 1, %v1721
    %v1723 = vrot.slane %v1710, %v1722
    %v1724 = vlaneseq
    %v1725 = vshrl.u32 %v1724, 7
    %v1726 = vsub.s32 2, %v1725
    %v1727 = vrot.slane %v1710, %v1726
    %v1728 = vlaneseq
    %v1729 = vshrl.u32 %v1728, 7
    %v1730 = vsub.s32 3, %v1729
    %v1731 = vrot.slane %v1710, %v1730
    %v1732 = vlaneseq
    %v1733 = vshrl.u32 %v1732, 7
    %v1734 = vsub.s32 4, %v1733
    %v1735 = vrot.slane %v1710, %v1734
    %v1736 = vlaneseq
    %v1737 = vshrl.u32 %v1736, 7
    %v1738 = vsub.s32 5, %v1737
    %v1739 = vrot.slane %v1710, %v1738
    %v1740 = vlaneseq
    %v1741 = vshrl.u32 %v1740, 7
    %v1742 = vsub.s32 6, %v1741
    %v1743 = vrot.slane %v1710, %v1742
    %v1744 = vlaneseq
    %v1745 = vshrl.u32 %v1744, 7
    %v1746 = vsub.s32 7, %v1745
    %v1747 = vrot.slane %v1710, %v1746
    %v1748 = vlaneseq
    %v1749 = vshrl.u32 %v1748, 7
    %v1750 = vsub.s32 0, %v1749
    %v1751 = vrot.slane %v1713, %v1750
    %v1752 = vlaneseq
    %v1753 = vshrl.u32 %v1752, 7
    %v1754 = vsub.s32 1, %v1753
    %v1755 = vrot.slane %v1713, %v1754
    %v1756 = vlaneseq
    %v1757 = vshrl.u32 %v1756, 7
    %v1758 = vsub.s32 2, %v1757
    %v1759 = vrot.slane %v1713, %v1758
    %v1760 = vlaneseq
    %v1761 = vshrl.u32 %v1760, 7
    %v1762 = vsub.s32 3, %v1761
    %v1763 = vrot.slane %v1713, %v1762
    %v1764 = vlaneseq
    %v1765 = vshrl.u32 %v1764, 7
    %v1766 = vsub.s32 4, %v1765
    %v1767 = vrot.slane %v1713, %v1766
    %v1768 = vlaneseq
    %v1769 = vshrl.u32 %v1768, 7
    %v1770 = vsub.s32 5, %v1769
    %v1771 = vrot.slane %v1713, %v1770
    %v1772 = vlaneseq
    %v1773 = vshrl.u32 %v1772, 7
    %v1774 = vsub.s32 6, %v1773
    %v1775 = vrot.slane %v1713, %v1774
    %v1776 = vlaneseq
    %v1777 = vshrl.u32 %v1776, 7
    %v1778 = vsub.s32 7, %v1777
    %v1779 = vrot.slane %v1713, %v1778
    %v1796 = vsub.f32 %v1557, %v1719
    %v1797 = vsub.f32 %v1560, %v1723
    %v1798 = vsub.f32 %v1563, %v1727
    %v1799 = vsub.f32 %v1566, %v1731
    %v1800 = vsub.f32 %v1569, %v1735
    %v1801 = vsub.f32 %v1572, %v1739
    %v1802 = vsub.f32 %v1575, %v1743
    %v1803 = vsub.f32 %v1578, %v1747
    %v1804 = vsub.f32 %v1581, %v1751
    %v1805 = vsub.f32 %v1584, %v1755
    %v1806 = vsub.f32 %v1587, %v1759
    %v1807 = vsub.f32 %v1590, %v1763
    %v1808 = vsub.f32 %v1593, %v1767
    %v1809 = vsub.f32 %v1596, %v1771
    %v1810 = vsub.f32 %v1599, %v1775
    %v1811 = vsub.f32 %v1602, %v1779
    %v1812 = vmul.f32 %v1796, 1.442695
    %v1813 = vpow.pop %v1812
    %v1814 = vmul.f32 %v1797, 1.442695
    %v1815 = vpow.pop %v1814
    %v1816 = vmul.f32 %v1798, 1.442695
    %v1817 = vpow.pop %v1816
    %v1818 = vmul.f32 %v1799, 1.442695
    %v1819 = vpow.pop %v1818
    %v1820 = vmul.f32 %v1800, 1.442695
    %v1821 = vpow.pop %v1820
    %v1822 = vmul.f32 %v1801, 1.442695
    %v1823 = vpow.pop %v1822
    %v1824 = vmul.f32 %v1802, 1.442695
    %v1825 = vpow.pop %v1824
    %v1826 = vmul.f32 %v1803, 1.442695
    %v1827 = vpow.pop %v1826
    %v1828 = vmul.f32 %v1804, 1.442695
    %v1829 = vpow.pop %v1828
    %v1830 = vmul.f32 %v1805, 1.442695
    %v1831 = vpow.pop %v1830
    %v1832 = vmul.f32 %v1806, 1.442695
    %v1833 = vpow.pop %v1832
    %v1834 = vmul.f32 %v1807, 1.442695
    %v1835 = vpow.pop %v1834
    %v1836 = vmul.f32 %v1808, 1.442695
    %v1837 = vpow.pop %v1836
    %v1838 = vmul.f32 %v1809, 1.442695
    %v1839 = vpow.pop %v1838
    %v1840 = vmul.f32 %v1810, 1.442695
    %v1841 = vpow.pop %v1840
    %v1842 = vmul.f32 %v1811, 1.442695
    %v1843 = vpow.pop %v1842
    %1860 = vset.pattern.permute.xlu0 0
    %1861 = vperm.xlu0 %1860, %v1813
    %v1862 = vpop.permute.xlu0 %1861
    %1863 = vset.pattern.permute.xlu0 0
    %1864 = vperm.xlu0 %1863, %v1815
    %v1865 = vpop.permute.xlu0 %1864
    %1866 = vset.pattern.permute.xlu0 0
    %1867 = vperm.xlu0 %1866, %v1817
    %v1868 = vpop.permute.xlu0 %1867
    %1869 = vset.pattern.permute.xlu0 0
    %1870 = vperm.xlu0 %1869, %v1819
    %v1871 = vpop.permute.xlu0 %1870
    %1872 = vset.pattern.permute.xlu0 0
    %1873 = vperm.xlu0 %1872, %v1821
    %v1874 = vpop.permute.xlu0 %1873
    %1875 = vset.pattern.permute.xlu0 0
    %1876 = vperm.xlu0 %1875, %v1823
    %v1877 = vpop.permute.xlu0 %1876
    %1878 = vset.pattern.permute.xlu0 0
    %1879 = vperm.xlu0 %1878, %v1825
    %v1880 = vpop.permute.xlu0 %1879
    %1881 = vset.pattern.permute.xlu0 0
    %1882 = vperm.xlu0 %1881, %v1827
    %v1883 = vpop.permute.xlu0 %1882
    %1884 = vset.pattern.permute.xlu0 0
    %1885 = vperm.xlu0 %1884, %v1829
    %v1886 = vpop.permute.xlu0 %1885
    %1887 = vset.pattern.permute.xlu0 0
    %1888 = vperm.xlu0 %1887, %v1831
    %v1889 = vpop.permute.xlu0 %1888
    %1890 = vset.pattern.permute.xlu0 0
    %1891 = vperm.xlu0 %1890, %v1833
    %v1892 = vpop.permute.xlu0 %1891
    %1893 = vset.pattern.permute.xlu0 0
    %1894 = vperm.xlu0 %1893, %v1835
    %v1895 = vpop.permute.xlu0 %1894
    %1896 = vset.pattern.permute.xlu0 0
    %1897 = vperm.xlu0 %1896, %v1837
    %v1898 = vpop.permute.xlu0 %1897
    %1899 = vset.pattern.permute.xlu0 0
    %1900 = vperm.xlu0 %1899, %v1839
    %v1901 = vpop.permute.xlu0 %1900
    %1902 = vset.pattern.permute.xlu0 0
    %1903 = vperm.xlu0 %1902, %v1841
    %v1904 = vpop.permute.xlu0 %1903
    %1905 = vset.pattern.permute.xlu0 0
    %1906 = vperm.xlu0 %1905, %v1843
    %v1907 = vpop.permute.xlu0 %1906
    %v1908 = vlaneseq
    %v1909 = vshrl.u32 %v1908, 7
    %v1910 = vsub.s32 %v1620, %v1909
    %v1911 = vrot.slane %v1862, %v1910
    %v1912 = vlaneseq
    %v1913 = vshrl.u32 %v1912, 7
    %v1914 = vsub.s32 %v1620, %v1913
    %v1915 = vrot.slane %v1865, %v1914
    %v1916 = vlaneseq
    %v1917 = vshrl.u32 %v1916, 7
    %v1918 = vsub.s32 %v1620, %v1917
    %v1919 = vrot.slane %v1868, %v1918
    %v1920 = vlaneseq
    %v1921 = vshrl.u32 %v1920, 7
    %v1922 = vsub.s32 %v1620, %v1921
    %v1923 = vrot.slane %v1871, %v1922
    %v1924 = vlaneseq
    %v1925 = vshrl.u32 %v1924, 7
    %v1926 = vsub.s32 %v1620, %v1925
    %v1927 = vrot.slane %v1874, %v1926
    %v1928 = vlaneseq
    %v1929 = vshrl.u32 %v1928, 7
    %v1930 = vsub.s32 %v1620, %v1929
    %v1931 = vrot.slane %v1877, %v1930
    %v1932 = vlaneseq
    %v1933 = vshrl.u32 %v1932, 7
    %v1934 = vsub.s32 %v1620, %v1933
    %v1935 = vrot.slane %v1880, %v1934
    %v1936 = vlaneseq
    %v1937 = vshrl.u32 %v1936, 7
    %v1938 = vsub.s32 %v1620, %v1937
    %v1939 = vrot.slane %v1883, %v1938
    %v1940 = vlaneseq
    %v1941 = vshrl.u32 %v1940, 7
    %v1942 = vsub.s32 %v1620, %v1941
    %v1943 = vrot.slane %v1886, %v1942
    %v1944 = vlaneseq
    %v1945 = vshrl.u32 %v1944, 7
    %v1946 = vsub.s32 %v1620, %v1945
    %v1947 = vrot.slane %v1889, %v1946
    %v1948 = vlaneseq
    %v1949 = vshrl.u32 %v1948, 7
    %v1950 = vsub.s32 %v1620, %v1949
    %v1951 = vrot.slane %v1892, %v1950
    %v1952 = vlaneseq
    %v1953 = vshrl.u32 %v1952, 7
    %v1954 = vsub.s32 %v1620, %v1953
    %v1955 = vrot.slane %v1895, %v1954
    %v1956 = vlaneseq
    %v1957 = vshrl.u32 %v1956, 7
    %v1958 = vsub.s32 %v1620, %v1957
    %v1959 = vrot.slane %v1898, %v1958
    %v1960 = vlaneseq
    %v1961 = vshrl.u32 %v1960, 7
    %v1962 = vsub.s32 %v1620, %v1961
    %v1963 = vrot.slane %v1901, %v1962
    %v1964 = vlaneseq
    %v1965 = vshrl.u32 %v1964, 7
    %v1966 = vsub.s32 %v1620, %v1965
    %v1967 = vrot.slane %v1904, %v1966
    %v1968 = vlaneseq
    %v1969 = vshrl.u32 %v1968, 7
    %v1970 = vsub.s32 %v1620, %v1969
    %v1971 = vrot.slane %v1907, %v1970
    %v1972 = vsel %vm1685, %v1915, %v1911
    %v1973 = vsel %vm1687, %v1919, %v1972
    %v1974 = vsel %vm1689, %v1923, %v1973
    %v1975 = vsel %vm1691, %v1927, %v1974
    %v1976 = vsel %vm1693, %v1931, %v1975
    %v1977 = vsel %vm1695, %v1935, %v1976
    %v1978 = vsel %vm1697, %v1939, %v1977
    %v1979 = vsel %vm1685, %v1947, %v1943
    %v1980 = vsel %vm1687, %v1951, %v1979
    %v1981 = vsel %vm1689, %v1955, %v1980
    %v1982 = vsel %vm1691, %v1959, %v1981
    %v1983 = vsel %vm1693, %v1963, %v1982
    %v1984 = vsel %vm1695, %v1967, %v1983
    %v1985 = vsel %vm1697, %v1971, %v1984
    %v1988 = vsel %vm1554, %v1978, 0.0
    %1989 = vadd.xlane.f32.xlu0 %v1988
    %v1990 = vpop.xlane.xlu0 %1989
    %v1991 = vsel %vm1554, %v1985, 0.0
    %1992 = vadd.xlane.f32.xlu0 %v1991
    %v1993 = vpop.xlane.xlu0 %1992
    %v1994 = vrcp.pop %v1990
    %v1995 = vrcp.pop %v1993
    %v1996 = vmul.f32 %v1990, %v1994
    %v1997 = vmul.f32 %v1993, %v1995
    %v1998 = vsub.f32 2.0, %v1996
    %v1999 = vsub.f32 2.0, %v1997
    %v2000 = vmul.f32 %v1994, %v1998
    %v2001 = vmul.f32 %v1995, %v1999
    %v2004 = vlaneseq
    %v2005 = vshrl.u32 %v2004, 7
    %v2006 = vsub.s32 0, %v2005
    %v2007 = vrot.slane %v2000, %v2006
    %v2008 = vlaneseq
    %v2009 = vshrl.u32 %v2008, 7
    %v2010 = vsub.s32 1, %v2009
    %v2011 = vrot.slane %v2000, %v2010
    %v2012 = vlaneseq
    %v2013 = vshrl.u32 %v2012, 7
    %v2014 = vsub.s32 2, %v2013
    %v2015 = vrot.slane %v2000, %v2014
    %v2016 = vlaneseq
    %v2017 = vshrl.u32 %v2016, 7
    %v2018 = vsub.s32 3, %v2017
    %v2019 = vrot.slane %v2000, %v2018
    %v2020 = vlaneseq
    %v2021 = vshrl.u32 %v2020, 7
    %v2022 = vsub.s32 4, %v2021
    %v2023 = vrot.slane %v2000, %v2022
    %v2024 = vlaneseq
    %v2025 = vshrl.u32 %v2024, 7
    %v2026 = vsub.s32 5, %v2025
    %v2027 = vrot.slane %v2000, %v2026
    %v2028 = vlaneseq
    %v2029 = vshrl.u32 %v2028, 7
    %v2030 = vsub.s32 6, %v2029
    %v2031 = vrot.slane %v2000, %v2030
    %v2032 = vlaneseq
    %v2033 = vshrl.u32 %v2032, 7
    %v2034 = vsub.s32 7, %v2033
    %v2035 = vrot.slane %v2000, %v2034
    %v2036 = vlaneseq
    %v2037 = vshrl.u32 %v2036, 7
    %v2038 = vsub.s32 0, %v2037
    %v2039 = vrot.slane %v2001, %v2038
    %v2040 = vlaneseq
    %v2041 = vshrl.u32 %v2040, 7
    %v2042 = vsub.s32 1, %v2041
    %v2043 = vrot.slane %v2001, %v2042
    %v2044 = vlaneseq
    %v2045 = vshrl.u32 %v2044, 7
    %v2046 = vsub.s32 2, %v2045
    %v2047 = vrot.slane %v2001, %v2046
    %v2048 = vlaneseq
    %v2049 = vshrl.u32 %v2048, 7
    %v2050 = vsub.s32 3, %v2049
    %v2051 = vrot.slane %v2001, %v2050
    %v2052 = vlaneseq
    %v2053 = vshrl.u32 %v2052, 7
    %v2054 = vsub.s32 4, %v2053
    %v2055 = vrot.slane %v2001, %v2054
    %v2056 = vlaneseq
    %v2057 = vshrl.u32 %v2056, 7
    %v2058 = vsub.s32 5, %v2057
    %v2059 = vrot.slane %v2001, %v2058
    %v2060 = vlaneseq
    %v2061 = vshrl.u32 %v2060, 7
    %v2062 = vsub.s32 6, %v2061
    %v2063 = vrot.slane %v2001, %v2062
    %v2064 = vlaneseq
    %v2065 = vshrl.u32 %v2064, 7
    %v2066 = vsub.s32 7, %v2065
    %v2067 = vrot.slane %v2001, %v2066
    %v2084 = vmul.f32 %v1813, %v2007
    %v2085 = vmul.f32 %v1815, %v2011
    %v2086 = vmul.f32 %v1817, %v2015
    %v2087 = vmul.f32 %v1819, %v2019
    %v2088 = vmul.f32 %v1821, %v2023
    %v2089 = vmul.f32 %v1823, %v2027
    %v2090 = vmul.f32 %v1825, %v2031
    %v2091 = vmul.f32 %v1827, %v2035
    %v2092 = vmul.f32 %v1829, %v2039
    %v2093 = vmul.f32 %v1831, %v2043
    %v2094 = vmul.f32 %v1833, %v2047
    %v2095 = vmul.f32 %v1835, %v2051
    %v2096 = vmul.f32 %v1837, %v2055
    %v2097 = vmul.f32 %v1839, %v2059
    %v2098 = vmul.f32 %v1841, %v2063
    %v2099 = vmul.f32 %v1843, %v2067
    %v2100 = vrot.slane %v1555, 4
    %v2101 = vadd.f32 %v1555, %v2100
    %v2102 = vrot.slane %v2101, 2
    %v2103 = vadd.f32 %v2101, %v2102
    %v2104 = vrot.slane %v2103, 1
    %v2105 = vadd.f32 %v2103, %v2104
    %v2106 = vrot.slane %v1558, 4
    %v2107 = vadd.f32 %v1558, %v2106
    %v2108 = vrot.slane %v2107, 2
    %v2109 = vadd.f32 %v2107, %v2108
    %v2110 = vrot.slane %v2109, 1
    %v2111 = vadd.f32 %v2109, %v2110
    %v2112 = vrot.slane %v1561, 4
    %v2113 = vadd.f32 %v1561, %v2112
    %v2114 = vrot.slane %v2113, 2
    %v2115 = vadd.f32 %v2113, %v2114
    %v2116 = vrot.slane %v2115, 1
    %v2117 = vadd.f32 %v2115, %v2116
    %v2118 = vrot.slane %v1564, 4
    %v2119 = vadd.f32 %v1564, %v2118
    %v2120 = vrot.slane %v2119, 2
    %v2121 = vadd.f32 %v2119, %v2120
    %v2122 = vrot.slane %v2121, 1
    %v2123 = vadd.f32 %v2121, %v2122
    %v2124 = vrot.slane %v1567, 4
    %v2125 = vadd.f32 %v1567, %v2124
    %v2126 = vrot.slane %v2125, 2
    %v2127 = vadd.f32 %v2125, %v2126
    %v2128 = vrot.slane %v2127, 1
    %v2129 = vadd.f32 %v2127, %v2128
    %v2130 = vrot.slane %v1570, 4
    %v2131 = vadd.f32 %v1570, %v2130
    %v2132 = vrot.slane %v2131, 2
    %v2133 = vadd.f32 %v2131, %v2132
    %v2134 = vrot.slane %v2133, 1
    %v2135 = vadd.f32 %v2133, %v2134
    %v2136 = vrot.slane %v1573, 4
    %v2137 = vadd.f32 %v1573, %v2136
    %v2138 = vrot.slane %v2137, 2
    %v2139 = vadd.f32 %v2137, %v2138
    %v2140 = vrot.slane %v2139, 1
    %v2141 = vadd.f32 %v2139, %v2140
    %v2142 = vrot.slane %v1576, 4
    %v2143 = vadd.f32 %v1576, %v2142
    %v2144 = vrot.slane %v2143, 2
    %v2145 = vadd.f32 %v2143, %v2144
    %v2146 = vrot.slane %v2145, 1
    %v2147 = vadd.f32 %v2145, %v2146
    %v2148 = vrot.slane %v1579, 4
    %v2149 = vadd.f32 %v1579, %v2148
    %v2150 = vrot.slane %v2149, 2
    %v2151 = vadd.f32 %v2149, %v2150
    %v2152 = vrot.slane %v2151, 1
    %v2153 = vadd.f32 %v2151, %v2152
    %v2154 = vrot.slane %v1582, 4
    %v2155 = vadd.f32 %v1582, %v2154
    %v2156 = vrot.slane %v2155, 2
    %v2157 = vadd.f32 %v2155, %v2156
    %v2158 = vrot.slane %v2157, 1
    %v2159 = vadd.f32 %v2157, %v2158
    %v2160 = vrot.slane %v1585, 4
    %v2161 = vadd.f32 %v1585, %v2160
    %v2162 = vrot.slane %v2161, 2
    %v2163 = vadd.f32 %v2161, %v2162
    %v2164 = vrot.slane %v2163, 1
    %v2165 = vadd.f32 %v2163, %v2164
    %v2166 = vrot.slane %v1588, 4
    %v2167 = vadd.f32 %v1588, %v2166
    %v2168 = vrot.slane %v2167, 2
    %v2169 = vadd.f32 %v2167, %v2168
    %v2170 = vrot.slane %v2169, 1
    %v2171 = vadd.f32 %v2169, %v2170
    %v2172 = vrot.slane %v1591, 4
    %v2173 = vadd.f32 %v1591, %v2172
    %v2174 = vrot.slane %v2173, 2
    %v2175 = vadd.f32 %v2173, %v2174
    %v2176 = vrot.slane %v2175, 1
    %v2177 = vadd.f32 %v2175, %v2176
    %v2178 = vrot.slane %v1594, 4
    %v2179 = vadd.f32 %v1594, %v2178
    %v2180 = vrot.slane %v2179, 2
    %v2181 = vadd.f32 %v2179, %v2180
    %v2182 = vrot.slane %v2181, 1
    %v2183 = vadd.f32 %v2181, %v2182
    %v2184 = vrot.slane %v1597, 4
    %v2185 = vadd.f32 %v1597, %v2184
    %v2186 = vrot.slane %v2185, 2
    %v2187 = vadd.f32 %v2185, %v2186
    %v2188 = vrot.slane %v2187, 1
    %v2189 = vadd.f32 %v2187, %v2188
    %v2190 = vrot.slane %v1600, 4
    %v2191 = vadd.f32 %v1600, %v2190
    %v2192 = vrot.slane %v2191, 2
    %v2193 = vadd.f32 %v2191, %v2192
    %v2194 = vrot.slane %v2193, 1
    %v2195 = vadd.f32 %v2193, %v2194
    %v2212 = vsel %vm1685, %v2111, %v2105
    %v2213 = vsel %vm1687, %v2117, %v2212
    %v2214 = vsel %vm1689, %v2123, %v2213
    %v2215 = vsel %vm1691, %v2129, %v2214
    %v2216 = vsel %vm1693, %v2135, %v2215
    %v2217 = vsel %vm1695, %v2141, %v2216
    %v2218 = vsel %vm1697, %v2147, %v2217
    %v2219 = vsel %vm1685, %v2159, %v2153
    %v2220 = vsel %vm1687, %v2165, %v2219
    %v2221 = vsel %vm1689, %v2171, %v2220
    %v2222 = vsel %vm1691, %v2177, %v2221
    %v2223 = vsel %vm1693, %v2183, %v2222
    %v2224 = vsel %vm1695, %v2189, %v2223
    %v2225 = vsel %vm1697, %v2195, %v2224
    %v2228 = vsel %vm1554, %v2218, -inf
    %2229 = vmax.xlane.f32.xlu0 %v2228
    %v2230 = vpop.xlane.xlu0 %2229
    %v2231 = vsel %vm1554, %v2225, -inf
    %2232 = vmax.xlane.f32.xlu0 %v2231
    %v2233 = vpop.xlane.xlu0 %2232
    %v2236 = vrot.slane %v2230, 1
    %v2237 = vrot.slane %v2230, 2
    %v2238 = vrot.slane %v2230, 3
    %v2239 = vrot.slane %v2230, 4
    %v2240 = vrot.slane %v2230, 5
    %v2241 = vrot.slane %v2230, 6
    %v2242 = vrot.slane %v2230, 7
    %v2243 = vrot.slane %v2233, 1
    %v2244 = vrot.slane %v2233, 2
    %v2245 = vrot.slane %v2233, 3
    %v2246 = vrot.slane %v2233, 4
    %v2247 = vrot.slane %v2233, 5
    %v2248 = vrot.slane %v2233, 6
    %v2249 = vrot.slane %v2233, 7
    %v2266 = vsub.f32 %v2105, %v2230
    %v2267 = vsub.f32 %v2111, %v2236
    %v2268 = vsub.f32 %v2117, %v2237
    %v2269 = vsub.f32 %v2123, %v2238
    %v2270 = vsub.f32 %v2129, %v2239
    %v2271 = vsub.f32 %v2135, %v2240
    %v2272 = vsub.f32 %v2141, %v2241
    %v2273 = vsub.f32 %v2147, %v2242
    %v2274 = vsub.f32 %v2153, %v2233
    %v2275 = vsub.f32 %v2159, %v2243
    %v2276 = vsub.f32 %v2165, %v2244
    %v2277 = vsub.f32 %v2171, %v2245
    %v2278 = vsub.f32 %v2177, %v2246
    %v2279 = vsub.f32 %v2183, %v2247
    %v2280 = vsub.f32 %v2189, %v2248
    %v2281 = vsub.f32 %v2195, %v2249
    %v2282 = vmul.f32 %v2266, 1.442695
    %v2283 = vpow.pop %v2282
    %v2284 = vmul.f32 %v2267, 1.442695
    %v2285 = vpow.pop %v2284
    %v2286 = vmul.f32 %v2268, 1.442695
    %v2287 = vpow.pop %v2286
    %v2288 = vmul.f32 %v2269, 1.442695
    %v2289 = vpow.pop %v2288
    %v2290 = vmul.f32 %v2270, 1.442695
    %v2291 = vpow.pop %v2290
    %v2292 = vmul.f32 %v2271, 1.442695
    %v2293 = vpow.pop %v2292
    %v2294 = vmul.f32 %v2272, 1.442695
    %v2295 = vpow.pop %v2294
    %v2296 = vmul.f32 %v2273, 1.442695
    %v2297 = vpow.pop %v2296
    %v2298 = vmul.f32 %v2274, 1.442695
    %v2299 = vpow.pop %v2298
    %v2300 = vmul.f32 %v2275, 1.442695
    %v2301 = vpow.pop %v2300
    %v2302 = vmul.f32 %v2276, 1.442695
    %v2303 = vpow.pop %v2302
    %v2304 = vmul.f32 %v2277, 1.442695
    %v2305 = vpow.pop %v2304
    %v2306 = vmul.f32 %v2278, 1.442695
    %v2307 = vpow.pop %v2306
    %v2308 = vmul.f32 %v2279, 1.442695
    %v2309 = vpow.pop %v2308
    %v2310 = vmul.f32 %v2280, 1.442695
    %v2311 = vpow.pop %v2310
    %v2312 = vmul.f32 %v2281, 1.442695
    %v2313 = vpow.pop %v2312
    %v2330 = vrot.slane %v2285, 7
    %v2331 = vsel %vm1685, %v2330, %v2283
    %v2332 = vrot.slane %v2287, 6
    %v2333 = vsel %vm1687, %v2332, %v2331
    %v2334 = vrot.slane %v2289, 5
    %v2335 = vsel %vm1689, %v2334, %v2333
    %v2336 = vrot.slane %v2291, 4
    %v2337 = vsel %vm1691, %v2336, %v2335
    %v2338 = vrot.slane %v2293, 3
    %v2339 = vsel %vm1693, %v2338, %v2337
    %v2340 = vrot.slane %v2295, 2
    %v2341 = vsel %vm1695, %v2340, %v2339
    %v2342 = vrot.slane %v2297, 1
    %v2343 = vsel %vm1697, %v2342, %v2341
    %v2344 = vrot.slane %v2301, 7
    %v2345 = vsel %vm1685, %v2344, %v2299
    %v2346 = vrot.slane %v2303, 6
    %v2347 = vsel %vm1687, %v2346, %v2345
    %v2348 = vrot.slane %v2305, 5
    %v2349 = vsel %vm1689, %v2348, %v2347
    %v2350 = vrot.slane %v2307, 4
    %v2351 = vsel %vm1691, %v2350, %v2349
    %v2352 = vrot.slane %v2309, 3
    %v2353 = vsel %vm1693, %v2352, %v2351
    %v2354 = vrot.slane %v2311, 2
    %v2355 = vsel %vm1695, %v2354, %v2353
    %v2356 = vrot.slane %v2313, 1
    %v2357 = vsel %vm1697, %v2356, %v2355
    %v2360 = vsel %vm1554, %v2343, 0.0
    %2361 = vadd.xlane.f32.xlu0 %v2360
    %v2362 = vpop.xlane.xlu0 %2361
    %v2363 = vsel %vm1554, %v2357, 0.0
    %2364 = vadd.xlane.f32.xlu0 %v2363
    %v2365 = vpop.xlane.xlu0 %2364
    %v2366 = vrcp.pop %v2362
    %v2367 = vrcp.pop %v2365
    %v2368 = vmul.f32 %v2362, %v2366
    %v2369 = vmul.f32 %v2365, %v2367
    %v2370 = vsub.f32 2.0, %v2368
    %v2371 = vsub.f32 2.0, %v2369
    %v2372 = vmul.f32 %v2366, %v2370
    %v2373 = vmul.f32 %v2367, %v2371
    %v2376 = vrot.slane %v2372, 1
    %v2377 = vrot.slane %v2372, 2
    %v2378 = vrot.slane %v2372, 3
    %v2379 = vrot.slane %v2372, 4
    %v2380 = vrot.slane %v2372, 5
    %v2381 = vrot.slane %v2372, 6
    %v2382 = vrot.slane %v2372, 7
    %v2383 = vrot.slane %v2373, 1
    %v2384 = vrot.slane %v2373, 2
    %v2385 = vrot.slane %v2373, 3
    %v2386 = vrot.slane %v2373, 4
    %v2387 = vrot.slane %v2373, 5
    %v2388 = vrot.slane %v2373, 6
    %v2389 = vrot.slane %v2373, 7
    %v2406 = vmul.f32 %v2283, %v2372
    %v2407 = vmul.f32 %v2285, %v2376
    %v2408 = vmul.f32 %v2287, %v2377
    %v2409 = vmul.f32 %v2289, %v2378
    %v2410 = vmul.f32 %v2291, %v2379
    %v2411 = vmul.f32 %v2293, %v2380
    %v2412 = vmul.f32 %v2295, %v2381
    %v2413 = vmul.f32 %v2297, %v2382
    %v2414 = vmul.f32 %v2299, %v2373
    %v2415 = vmul.f32 %v2301, %v2383
    %v2416 = vmul.f32 %v2303, %v2384
    %v2417 = vmul.f32 %v2305, %v2385
    %v2418 = vmul.f32 %v2307, %v2386
    %v2419 = vmul.f32 %v2309, %v2387
    %v2420 = vmul.f32 %v2311, %v2388
    %v2421 = vmul.f32 %v2313, %v2389
    %2423 = vset.pattern.permute.xlu0 0
    %2424 = vperm.xlu0 %2423, %v2084
    %v2425 = vpop.permute.xlu0 %2424
    %2428 = vset.pattern.permute.xlu0 0
    %2429 = vperm.xlu0 %2428, %v2085
    %v2430 = vpop.permute.xlu0 %2429
    %2433 = vset.pattern.permute.xlu0 0
    %2434 = vperm.xlu0 %2433, %v2086
    %v2435 = vpop.permute.xlu0 %2434
    %2438 = vset.pattern.permute.xlu0 0
    %2439 = vperm.xlu0 %2438, %v2087
    %v2440 = vpop.permute.xlu0 %2439
    %2443 = vset.pattern.permute.xlu0 0
    %2444 = vperm.xlu0 %2443, %v2088
    %v2445 = vpop.permute.xlu0 %2444
    %2448 = vset.pattern.permute.xlu0 0
    %2449 = vperm.xlu0 %2448, %v2089
    %v2450 = vpop.permute.xlu0 %2449
    %2453 = vset.pattern.permute.xlu0 0
    %2454 = vperm.xlu0 %2453, %v2090
    %v2455 = vpop.permute.xlu0 %2454
    %2458 = vset.pattern.permute.xlu0 0
    %2459 = vperm.xlu0 %2458, %v2091
    %v2460 = vpop.permute.xlu0 %2459
    %2463 = vset.pattern.permute.xlu0 0
    %2464 = vperm.xlu0 %2463, %v2092
    %v2465 = vpop.permute.xlu0 %2464
    %2468 = vset.pattern.permute.xlu0 0
    %2469 = vperm.xlu0 %2468, %v2093
    %v2470 = vpop.permute.xlu0 %2469
    %2473 = vset.pattern.permute.xlu0 0
    %2474 = vperm.xlu0 %2473, %v2094
    %v2475 = vpop.permute.xlu0 %2474
    %2478 = vset.pattern.permute.xlu0 0
    %2479 = vperm.xlu0 %2478, %v2095
    %v2480 = vpop.permute.xlu0 %2479
    %2483 = vset.pattern.permute.xlu0 0
    %2484 = vperm.xlu0 %2483, %v2096
    %v2485 = vpop.permute.xlu0 %2484
    %2488 = vset.pattern.permute.xlu0 0
    %2489 = vperm.xlu0 %2488, %v2097
    %v2490 = vpop.permute.xlu0 %2489
    %2493 = vset.pattern.permute.xlu0 0
    %2494 = vperm.xlu0 %2493, %v2098
    %v2495 = vpop.permute.xlu0 %2494
    %2498 = vset.pattern.permute.xlu0 0
    %2499 = vperm.xlu0 %2498, %v2099
    %v2500 = vpop.permute.xlu0 %2499
    %v2502 = vmul.f32 %v2425, %v92
    %v2503 = vmul.f32 %v2430, %v93
    %v2504 = vmul.f32 %v2435, %v94
    %v2505 = vmul.f32 %v2440, %v95
    %v2506 = vmul.f32 %v2445, %v96
    %v2507 = vmul.f32 %v2450, %v97
    %v2508 = vmul.f32 %v2455, %v98
    %v2509 = vmul.f32 %v2460, %v99
    %v2510 = vmul.f32 %v2465, %v100
    %v2511 = vmul.f32 %v2470, %v101
    %v2512 = vmul.f32 %v2475, %v102
    %v2513 = vmul.f32 %v2480, %v103
    %v2514 = vmul.f32 %v2485, %v104
    %v2515 = vmul.f32 %v2490, %v105
    %v2516 = vmul.f32 %v2495, %v106
    %v2517 = vmul.f32 %v2500, %v107
    %v2518 = vsel %vm128, %v2502, 0.0
    %v2519 = vrot.slane %v2518, 4
    %v2520 = vadd.f32 %v2518, %v2519
    %v2521 = vrot.slane %v2520, 2
    %v2522 = vadd.f32 %v2520, %v2521
    %v2523 = vrot.slane %v2522, 1
    %v2524 = vadd.f32 %v2522, %v2523
    %v2525 = vsel %vm128, %v2503, 0.0
    %v2526 = vrot.slane %v2525, 4
    %v2527 = vadd.f32 %v2525, %v2526
    %v2528 = vrot.slane %v2527, 2
    %v2529 = vadd.f32 %v2527, %v2528
    %v2530 = vrot.slane %v2529, 1
    %v2531 = vadd.f32 %v2529, %v2530
    %v2532 = vsel %vm128, %v2504, 0.0
    %v2533 = vrot.slane %v2532, 4
    %v2534 = vadd.f32 %v2532, %v2533
    %v2535 = vrot.slane %v2534, 2
    %v2536 = vadd.f32 %v2534, %v2535
    %v2537 = vrot.slane %v2536, 1
    %v2538 = vadd.f32 %v2536, %v2537
    %v2539 = vsel %vm128, %v2505, 0.0
    %v2540 = vrot.slane %v2539, 4
    %v2541 = vadd.f32 %v2539, %v2540
    %v2542 = vrot.slane %v2541, 2
    %v2543 = vadd.f32 %v2541, %v2542
    %v2544 = vrot.slane %v2543, 1
    %v2545 = vadd.f32 %v2543, %v2544
    %v2546 = vsel %vm128, %v2506, 0.0
    %v2547 = vrot.slane %v2546, 4
    %v2548 = vadd.f32 %v2546, %v2547
    %v2549 = vrot.slane %v2548, 2
    %v2550 = vadd.f32 %v2548, %v2549
    %v2551 = vrot.slane %v2550, 1
    %v2552 = vadd.f32 %v2550, %v2551
    %v2553 = vsel %vm128, %v2507, 0.0
    %v2554 = vrot.slane %v2553, 4
    %v2555 = vadd.f32 %v2553, %v2554
    %v2556 = vrot.slane %v2555, 2
    %v2557 = vadd.f32 %v2555, %v2556
    %v2558 = vrot.slane %v2557, 1
    %v2559 = vadd.f32 %v2557, %v2558
    %v2560 = vsel %vm128, %v2508, 0.0
    %v2561 = vrot.slane %v2560, 4
    %v2562 = vadd.f32 %v2560, %v2561
    %v2563 = vrot.slane %v2562, 2
    %v2564 = vadd.f32 %v2562, %v2563
    %v2565 = vrot.slane %v2564, 1
    %v2566 = vadd.f32 %v2564, %v2565
    %v2567 = vsel %vm128, %v2509, 0.0
    %v2568 = vrot.slane %v2567, 4
    %v2569 = vadd.f32 %v2567, %v2568
    %v2570 = vrot.slane %v2569, 2
    %v2571 = vadd.f32 %v2569, %v2570
    %v2572 = vrot.slane %v2571, 1
    %v2573 = vadd.f32 %v2571, %v2572
    %v2574 = vsel %vm128, %v2510, 0.0
    %v2575 = vrot.slane %v2574, 4
    %v2576 = vadd.f32 %v2574, %v2575
    %v2577 = vrot.slane %v2576, 2
    %v2578 = vadd.f32 %v2576, %v2577
    %v2579 = vrot.slane %v2578, 1
    %v2580 = vadd.f32 %v2578, %v2579
    %v2581 = vsel %vm128, %v2511, 0.0
    %v2582 = vrot.slane %v2581, 4
    %v2583 = vadd.f32 %v2581, %v2582
    %v2584 = vrot.slane %v2583, 2
    %v2585 = vadd.f32 %v2583, %v2584
    %v2586 = vrot.slane %v2585, 1
    %v2587 = vadd.f32 %v2585, %v2586
    %v2588 = vsel %vm128, %v2512, 0.0
    %v2589 = vrot.slane %v2588, 4
    %v2590 = vadd.f32 %v2588, %v2589
    %v2591 = vrot.slane %v2590, 2
    %v2592 = vadd.f32 %v2590, %v2591
    %v2593 = vrot.slane %v2592, 1
    %v2594 = vadd.f32 %v2592, %v2593
    %v2595 = vsel %vm128, %v2513, 0.0
    %v2596 = vrot.slane %v2595, 4
    %v2597 = vadd.f32 %v2595, %v2596
    %v2598 = vrot.slane %v2597, 2
    %v2599 = vadd.f32 %v2597, %v2598
    %v2600 = vrot.slane %v2599, 1
    %v2601 = vadd.f32 %v2599, %v2600
    %v2602 = vsel %vm128, %v2514, 0.0
    %v2603 = vrot.slane %v2602, 4
    %v2604 = vadd.f32 %v2602, %v2603
    %v2605 = vrot.slane %v2604, 2
    %v2606 = vadd.f32 %v2604, %v2605
    %v2607 = vrot.slane %v2606, 1
    %v2608 = vadd.f32 %v2606, %v2607
    %v2609 = vsel %vm128, %v2515, 0.0
    %v2610 = vrot.slane %v2609, 4
    %v2611 = vadd.f32 %v2609, %v2610
    %v2612 = vrot.slane %v2611, 2
    %v2613 = vadd.f32 %v2611, %v2612
    %v2614 = vrot.slane %v2613, 1
    %v2615 = vadd.f32 %v2613, %v2614
    %v2616 = vsel %vm128, %v2516, 0.0
    %v2617 = vrot.slane %v2616, 4
    %v2618 = vadd.f32 %v2616, %v2617
    %v2619 = vrot.slane %v2618, 2
    %v2620 = vadd.f32 %v2618, %v2619
    %v2621 = vrot.slane %v2620, 1
    %v2622 = vadd.f32 %v2620, %v2621
    %v2623 = vsel %vm128, %v2517, 0.0
    %v2624 = vrot.slane %v2623, 4
    %v2625 = vadd.f32 %v2623, %v2624
    %v2626 = vrot.slane %v2625, 2
    %v2627 = vadd.f32 %v2625, %v2626
    %v2628 = vrot.slane %v2627, 1
    %v2629 = vadd.f32 %v2627, %v2628
    %v2630 = vlaneseq
    %v2631 = vshrl.u32 %v2630, 7
    %v2632 = vsub.s32 0, %v2631
    %v2633 = vrot.slane %v2406, %v2632
    %2635 = vbcast.lane.b32.xlu0 %v2633, 256
    %v2636 = vpop.permute.xlu0 %2635
    %v2637 = vlaneseq
    %v2638 = vshrl.u32 %v2637, 7
    %v2639 = vsub.s32 0, %v2638
    %v2640 = vrot.slane %v2407, %v2639
    %2642 = vbcast.lane.b32.xlu0 %v2640, 256
    %v2643 = vpop.permute.xlu0 %2642
    %v2644 = vlaneseq
    %v2645 = vshrl.u32 %v2644, 7
    %v2646 = vsub.s32 0, %v2645
    %v2647 = vrot.slane %v2408, %v2646
    %2649 = vbcast.lane.b32.xlu0 %v2647, 256
    %v2650 = vpop.permute.xlu0 %2649
    %v2651 = vlaneseq
    %v2652 = vshrl.u32 %v2651, 7
    %v2653 = vsub.s32 0, %v2652
    %v2654 = vrot.slane %v2409, %v2653
    %2656 = vbcast.lane.b32.xlu0 %v2654, 256
    %v2657 = vpop.permute.xlu0 %2656
    %v2658 = vlaneseq
    %v2659 = vshrl.u32 %v2658, 7
    %v2660 = vsub.s32 0, %v2659
    %v2661 = vrot.slane %v2410, %v2660
    %2663 = vbcast.lane.b32.xlu0 %v2661, 256
    %v2664 = vpop.permute.xlu0 %2663
    %v2665 = vlaneseq
    %v2666 = vshrl.u32 %v2665, 7
    %v2667 = vsub.s32 0, %v2666
    %v2668 = vrot.slane %v2411, %v2667
    %2670 = vbcast.lane.b32.xlu0 %v2668, 256
    %v2671 = vpop.permute.xlu0 %2670
    %v2672 = vlaneseq
    %v2673 = vshrl.u32 %v2672, 7
    %v2674 = vsub.s32 0, %v2673
    %v2675 = vrot.slane %v2412, %v2674
    %2677 = vbcast.lane.b32.xlu0 %v2675, 256
    %v2678 = vpop.permute.xlu0 %2677
    %v2679 = vlaneseq
    %v2680 = vshrl.u32 %v2679, 7
    %v2681 = vsub.s32 0, %v2680
    %v2682 = vrot.slane %v2413, %v2681
    %2684 = vbcast.lane.b32.xlu0 %v2682, 256
    %v2685 = vpop.permute.xlu0 %2684
    %v2686 = vlaneseq
    %v2687 = vshrl.u32 %v2686, 7
    %v2688 = vsub.s32 0, %v2687
    %v2689 = vrot.slane %v2414, %v2688
    %2691 = vbcast.lane.b32.xlu0 %v2689, 256
    %v2692 = vpop.permute.xlu0 %2691
    %v2693 = vlaneseq
    %v2694 = vshrl.u32 %v2693, 7
    %v2695 = vsub.s32 0, %v2694
    %v2696 = vrot.slane %v2415, %v2695
    %2698 = vbcast.lane.b32.xlu0 %v2696, 256
    %v2699 = vpop.permute.xlu0 %2698
    %v2700 = vlaneseq
    %v2701 = vshrl.u32 %v2700, 7
    %v2702 = vsub.s32 0, %v2701
    %v2703 = vrot.slane %v2416, %v2702
    %2705 = vbcast.lane.b32.xlu0 %v2703, 256
    %v2706 = vpop.permute.xlu0 %2705
    %v2707 = vlaneseq
    %v2708 = vshrl.u32 %v2707, 7
    %v2709 = vsub.s32 0, %v2708
    %v2710 = vrot.slane %v2417, %v2709
    %2712 = vbcast.lane.b32.xlu0 %v2710, 256
    %v2713 = vpop.permute.xlu0 %2712
    %v2714 = vlaneseq
    %v2715 = vshrl.u32 %v2714, 7
    %v2716 = vsub.s32 0, %v2715
    %v2717 = vrot.slane %v2418, %v2716
    %2719 = vbcast.lane.b32.xlu0 %v2717, 256
    %v2720 = vpop.permute.xlu0 %2719
    %v2721 = vlaneseq
    %v2722 = vshrl.u32 %v2721, 7
    %v2723 = vsub.s32 0, %v2722
    %v2724 = vrot.slane %v2419, %v2723
    %2726 = vbcast.lane.b32.xlu0 %v2724, 256
    %v2727 = vpop.permute.xlu0 %2726
    %v2728 = vlaneseq
    %v2729 = vshrl.u32 %v2728, 7
    %v2730 = vsub.s32 0, %v2729
    %v2731 = vrot.slane %v2420, %v2730
    %2733 = vbcast.lane.b32.xlu0 %v2731, 256
    %v2734 = vpop.permute.xlu0 %2733
    %v2735 = vlaneseq
    %v2736 = vshrl.u32 %v2735, 7
    %v2737 = vsub.s32 0, %v2736
    %v2738 = vrot.slane %v2421, %v2737
    %2740 = vbcast.lane.b32.xlu0 %v2738, 256
    %v2741 = vpop.permute.xlu0 %2740
    %v2742 = vmul.f32 %v2636, %v108
    %v2743 = vmul.f32 %v2643, %v109
    %v2744 = vmul.f32 %v2650, %v110
    %v2745 = vmul.f32 %v2657, %v111
    %v2746 = vmul.f32 %v2664, %v112
    %v2747 = vmul.f32 %v2671, %v113
    %v2748 = vmul.f32 %v2678, %v114
    %v2749 = vmul.f32 %v2685, %v115
    %v2750 = vmul.f32 %v2692, %v116
    %v2751 = vmul.f32 %v2699, %v117
    %v2752 = vmul.f32 %v2706, %v118
    %v2753 = vmul.f32 %v2713, %v119
    %v2754 = vmul.f32 %v2720, %v120
    %v2755 = vmul.f32 %v2727, %v121
    %v2756 = vmul.f32 %v2734, %v122
    %v2757 = vmul.f32 %v2741, %v123
    %v2758 = vsel %vm128, %v2742, 0.0
    %v2759 = vrot.slane %v2758, 4
    %v2760 = vadd.f32 %v2758, %v2759
    %v2761 = vrot.slane %v2760, 2
    %v2762 = vadd.f32 %v2760, %v2761
    %v2763 = vrot.slane %v2762, 1
    %v2764 = vadd.f32 %v2762, %v2763
    %v2765 = vsel %vm128, %v2743, 0.0
    %v2766 = vrot.slane %v2765, 4
    %v2767 = vadd.f32 %v2765, %v2766
    %v2768 = vrot.slane %v2767, 2
    %v2769 = vadd.f32 %v2767, %v2768
    %v2770 = vrot.slane %v2769, 1
    %v2771 = vadd.f32 %v2769, %v2770
    %v2772 = vsel %vm128, %v2744, 0.0
    %v2773 = vrot.slane %v2772, 4
    %v2774 = vadd.f32 %v2772, %v2773
    %v2775 = vrot.slane %v2774, 2
    %v2776 = vadd.f32 %v2774, %v2775
    %v2777 = vrot.slane %v2776, 1
    %v2778 = vadd.f32 %v2776, %v2777
    %v2779 = vsel %vm128, %v2745, 0.0
    %v2780 = vrot.slane %v2779, 4
    %v2781 = vadd.f32 %v2779, %v2780
    %v2782 = vrot.slane %v2781, 2
    %v2783 = vadd.f32 %v2781, %v2782
    %v2784 = vrot.slane %v2783, 1
    %v2785 = vadd.f32 %v2783, %v2784
    %v2786 = vsel %vm128, %v2746, 0.0
    %v2787 = vrot.slane %v2786, 4
    %v2788 = vadd.f32 %v2786, %v2787
    %v2789 = vrot.slane %v2788, 2
    %v2790 = vadd.f32 %v2788, %v2789
    %v2791 = vrot.slane %v2790, 1
    %v2792 = vadd.f32 %v2790, %v2791
    %v2793 = vsel %vm128, %v2747, 0.0
    %v2794 = vrot.slane %v2793, 4
    %v2795 = vadd.f32 %v2793, %v2794
    %v2796 = vrot.slane %v2795, 2
    %v2797 = vadd.f32 %v2795, %v2796
    %v2798 = vrot.slane %v2797, 1
    %v2799 = vadd.f32 %v2797, %v2798
    %v2800 = vsel %vm128, %v2748, 0.0
    %v2801 = vrot.slane %v2800, 4
    %v2802 = vadd.f32 %v2800, %v2801
    %v2803 = vrot.slane %v2802, 2
    %v2804 = vadd.f32 %v2802, %v2803
    %v2805 = vrot.slane %v2804, 1
    %v2806 = vadd.f32 %v2804, %v2805
    %v2807 = vsel %vm128, %v2749, 0.0
    %v2808 = vrot.slane %v2807, 4
    %v2809 = vadd.f32 %v2807, %v2808
    %v2810 = vrot.slane %v2809, 2
    %v2811 = vadd.f32 %v2809, %v2810
    %v2812 = vrot.slane %v2811, 1
    %v2813 = vadd.f32 %v2811, %v2812
    %v2814 = vsel %vm128, %v2750, 0.0
    %v2815 = vrot.slane %v2814, 4
    %v2816 = vadd.f32 %v2814, %v2815
    %v2817 = vrot.slane %v2816, 2
    %v2818 = vadd.f32 %v2816, %v2817
    %v2819 = vrot.slane %v2818, 1
    %v2820 = vadd.f32 %v2818, %v2819
    %v2821 = vsel %vm128, %v2751, 0.0
    %v2822 = vrot.slane %v2821, 4
    %v2823 = vadd.f32 %v2821, %v2822
    %v2824 = vrot.slane %v2823, 2
    %v2825 = vadd.f32 %v2823, %v2824
    %v2826 = vrot.slane %v2825, 1
    %v2827 = vadd.f32 %v2825, %v2826
    %v2828 = vsel %vm128, %v2752, 0.0
    %v2829 = vrot.slane %v2828, 4
    %v2830 = vadd.f32 %v2828, %v2829
    %v2831 = vrot.slane %v2830, 2
    %v2832 = vadd.f32 %v2830, %v2831
    %v2833 = vrot.slane %v2832, 1
    %v2834 = vadd.f32 %v2832, %v2833
    %v2835 = vsel %vm128, %v2753, 0.0
    %v2836 = vrot.slane %v2835, 4
    %v2837 = vadd.f32 %v2835, %v2836
    %v2838 = vrot.slane %v2837, 2
    %v2839 = vadd.f32 %v2837, %v2838
    %v2840 = vrot.slane %v2839, 1
    %v2841 = vadd.f32 %v2839, %v2840
    %v2842 = vsel %vm128, %v2754, 0.0
    %v2843 = vrot.slane %v2842, 4
    %v2844 = vadd.f32 %v2842, %v2843
    %v2845 = vrot.slane %v2844, 2
    %v2846 = vadd.f32 %v2844, %v2845
    %v2847 = vrot.slane %v2846, 1
    %v2848 = vadd.f32 %v2846, %v2847
    %v2849 = vsel %vm128, %v2755, 0.0
    %v2850 = vrot.slane %v2849, 4
    %v2851 = vadd.f32 %v2849, %v2850
    %v2852 = vrot.slane %v2851, 2
    %v2853 = vadd.f32 %v2851, %v2852
    %v2854 = vrot.slane %v2853, 1
    %v2855 = vadd.f32 %v2853, %v2854
    %v2856 = vsel %vm128, %v2756, 0.0
    %v2857 = vrot.slane %v2856, 4
    %v2858 = vadd.f32 %v2856, %v2857
    %v2859 = vrot.slane %v2858, 2
    %v2860 = vadd.f32 %v2858, %v2859
    %v2861 = vrot.slane %v2860, 1
    %v2862 = vadd.f32 %v2860, %v2861
    %v2863 = vsel %vm128, %v2757, 0.0
    %v2864 = vrot.slane %v2863, 4
    %v2865 = vadd.f32 %v2863, %v2864
    %v2866 = vrot.slane %v2865, 2
    %v2867 = vadd.f32 %v2865, %v2866
    %v2868 = vrot.slane %v2867, 1
    %v2869 = vadd.f32 %v2867, %v2868
    %v2870 = vld [vmem:[#allocation8] sm:$0xff]
    %v2871 = vld [vmem:[#allocation8 + $0x8] sm:$0xff]
    %v2872 = vld [vmem:[#allocation8 + $0x10] sm:$0xff]
    %v2873 = vld [vmem:[#allocation8 + $0x18] sm:$0xff]
    %v2874 = vld [vmem:[#allocation10] sm:$0xff]
    %v2875 = vld [vmem:[#allocation10 + $0x8] sm:$0xff]
    %v2876 = vld [vmem:[#allocation10 + $0x10] sm:$0xff]
    %v2877 = vld [vmem:[#allocation10 + $0x18] sm:$0xff]
    %v2894 = vsel %vm1685, %v2771, %v2764
    %v2895 = vsel %vm1687, %v2778, %v2894
    %v2896 = vsel %vm1689, %v2785, %v2895
    %v2897 = vsel %vm1691, %v2792, %v2896
    %v2898 = vsel %vm1693, %v2799, %v2897
    %v2899 = vsel %vm1695, %v2806, %v2898
    %v2900 = vsel %vm1697, %v2813, %v2899
    %v2901 = vsel %vm1685, %v2827, %v2820
    %v2902 = vsel %vm1687, %v2834, %v2901
    %v2903 = vsel %vm1689, %v2841, %v2902
    %v2904 = vsel %vm1691, %v2848, %v2903
    %v2905 = vsel %vm1693, %v2855, %v2904
    %v2906 = vsel %vm1695, %v2862, %v2905
    %v2907 = vsel %vm1697, %v2869, %v2906
    %v2908 = vsel %vm128, %v2900, 0
    %v2910 = vsel %vm128, %v2907, 0
    %2912 = vmatprep.subr.mxu0 0.0
    %2913 = vmatpush1.msra.mxu0 0.0
    %2914 = vmatprep.subr.mxu0 0.0
    %2915 = vmatpush1.msra.mxu0 0.0
    %2916 = vmatprep.subr.mxu0 0.0
    %2917 = vmatpush1.msra.mxu0 0.0
    %2918 = vmatprep.subr.mxu0 0.0
    %2919 = vmatpush1.msra.mxu0 0.0
    %2920 = vmatprep.subr.mxu0 0.0
    %2921 = vmatpush1.msra.mxu0 0.0
    %2922 = vmatprep.subr.mxu0 0.0
    %2923 = vmatpush1.msra.mxu0 0.0
    %2924 = vmatprep.subr.mxu0 0.0
    %2925 = vmatpush1.msra.mxu0 0.0
    %2926 = vmatprep.subr.mxu0 0.0
    %2927 = vmatpush1.msra.mxu0 0.0
    %2928 = vmatprep.subr.mxu0 0.0
    %2929 = vmatpush1.msra.mxu0 0.0
    %2930 = vmatprep.subr.mxu0 0.0
    %2931 = vmatpush1.msra.mxu0 0.0
    %2932 = vmatprep.subr.mxu0 0.0
    %2933 = vmatpush1.msra.mxu0 0.0
    %2934 = vmatprep.subr.mxu0 0.0
    %2935 = vmatpush1.msra.mxu0 0.0
    %2936 = vmatprep.subr.mxu0 0.0
    %2937 = vmatpush1.msra.mxu0 %v2877
    %2938 = vmatprep.subr.mxu0 0.0
    %2939 = vmatpush1.msra.mxu0 %v2876
    %2940 = vmatprep.subr.mxu0 0.0
    %2941 = vmatpush1.msra.mxu0 %v2875
    %2942 = vmatprep.subr.mxu0 0.0
    %2943 = vmatpush1.msra.mxu0 %v2874
    %2944 = vmatprep.subr.mxu0 0.0
    %2945 = vmatpush2.msra.mxu0 0.0
    %2946 = vmatprep.subr.mxu0 0.0
    %2947 = vmatpush2.msra.mxu0 0.0
    %2948 = vmatprep.subr.mxu0 0.0
    %2949 = vmatpush2.msra.mxu0 0.0
    %2950 = vmatprep.subr.mxu0 0.0
    %2951 = vmatpush2.msra.mxu0 0.0
    %2952 = vmatprep.subr.mxu0 0.0
    %2953 = vmatpush2.msra.mxu0 0.0
    %2954 = vmatprep.subr.mxu0 0.0
    %2955 = vmatpush2.msra.mxu0 0.0
    %2956 = vmatprep.subr.mxu0 0.0
    %2957 = vmatpush2.msra.mxu0 0.0
    %2958 = vmatprep.subr.mxu0 0.0
    %2959 = vmatpush2.msra.mxu0 0.0
    %2960 = vmatprep.subr.mxu0 0.0
    %2961 = vmatpush2.msra.mxu0 0.0
    %2962 = vmatprep.subr.mxu0 0.0
    %2963 = vmatpush2.msra.mxu0 0.0
    %2964 = vmatprep.subr.mxu0 0.0
    %2965 = vmatpush2.msra.mxu0 0.0
    %2966 = vmatprep.subr.mxu0 0.0
    %2967 = vmatpush2.msra.mxu0 0.0
    %2968 = vmatprep.subr.mxu0 0.0
    %2969 = vmatpush2.msra.mxu0 0.0
    %2970 = vmatprep.subr.mxu0 0.0
    %2971 = vmatpush2.msra.mxu0 0.0
    %2972 = vmatprep.subr.mxu0 0.0
    %2973 = vmatpush2.msra.mxu0 0.0
    %2974 = vmatprep.subr.mxu0 0.0
    %2975 = vmatpush2.msra.mxu0 0.0
    %2976 = vmatprep.mubr.f32.mxu0 0.0
    %2977 = vmatmul.mubr.f32.gmra.mxu0 %v2908
    %v2978 = vpop.f32.mrf.mxu0
    %v2979 = vadd.f32 0.0, %v2978
    %v2980 = vpop.f32.mrf.mxu0
    %2981 = vmatprep.mubr.f32.mxu0 0.0
    %2982 = vmatmul.mubr.f32.gmra.mxu0 %v2910
    %v2983 = vpop.f32.mrf.mxu0
    %v2984 = vadd.f32 0.0, %v2983
    %v2985 = vpop.f32.mrf.mxu0
    %2986 = vdwg.mxu0
    %v3003 = vsel %vm1685, %v2531, %v2524
    %v3004 = vsel %vm1687, %v2538, %v3003
    %v3005 = vsel %vm1689, %v2545, %v3004
    %v3006 = vsel %vm1691, %v2552, %v3005
    %v3007 = vsel %vm1693, %v2559, %v3006
    %v3008 = vsel %vm1695, %v2566, %v3007
    %v3009 = vsel %vm1697, %v2573, %v3008
    %v3010 = vsel %vm1685, %v2587, %v2580
    %v3011 = vsel %vm1687, %v2594, %v3010
    %v3012 = vsel %vm1689, %v2601, %v3011
    %v3013 = vsel %vm1691, %v2608, %v3012
    %v3014 = vsel %vm1693, %v2615, %v3013
    %v3015 = vsel %vm1695, %v2622, %v3014
    %v3016 = vsel %vm1697, %v2629, %v3015
    %v3017 = vsel %vm128, %v3009, 0
    %v3019 = vsel %vm128, %v3016, 0
    %3021 = vmatprep.subr.mxu0 0.0
    %3022 = vmatpush1.msra.mxu0 0.0
    %3023 = vmatprep.subr.mxu0 0.0
    %3024 = vmatpush1.msra.mxu0 0.0
    %3025 = vmatprep.subr.mxu0 0.0
    %3026 = vmatpush1.msra.mxu0 0.0
    %3027 = vmatprep.subr.mxu0 0.0
    %3028 = vmatpush1.msra.mxu0 0.0
    %3029 = vmatprep.subr.mxu0 0.0
    %3030 = vmatpush1.msra.mxu0 0.0
    %3031 = vmatprep.subr.mxu0 0.0
    %3032 = vmatpush1.msra.mxu0 0.0
    %3033 = vmatprep.subr.mxu0 0.0
    %3034 = vmatpush1.msra.mxu0 0.0
    %3035 = vmatprep.subr.mxu0 0.0
    %3036 = vmatpush1.msra.mxu0 0.0
    %3037 = vmatprep.subr.mxu0 0.0
    %3038 = vmatpush1.msra.mxu0 0.0
    %3039 = vmatprep.subr.mxu0 0.0
    %3040 = vmatpush1.msra.mxu0 0.0
    %3041 = vmatprep.subr.mxu0 0.0
    %3042 = vmatpush1.msra.mxu0 0.0
    %3043 = vmatprep.subr.mxu0 0.0
    %3044 = vmatpush1.msra.mxu0 0.0
    %3045 = vmatprep.subr.mxu0 0.0
    %3046 = vmatpush1.msra.mxu0 %v2873
    %3047 = vmatprep.subr.mxu0 0.0
    %3048 = vmatpush1.msra.mxu0 %v2872
    %3049 = vmatprep.subr.mxu0 0.0
    %3050 = vmatpush1.msra.mxu0 %v2871
    %3051 = vmatprep.subr.mxu0 0.0
    %3052 = vmatpush1.msra.mxu0 %v2870
    %3053 = vmatprep.subr.mxu0 0.0
    %3054 = vmatpush2.msra.mxu0 0.0
    %3055 = vmatprep.subr.mxu0 0.0
    %3056 = vmatpush2.msra.mxu0 0.0
    %3057 = vmatprep.subr.mxu0 0.0
    %3058 = vmatpush2.msra.mxu0 0.0
    %3059 = vmatprep.subr.mxu0 0.0
    %3060 = vmatpush2.msra.mxu0 0.0
    %3061 = vmatprep.subr.mxu0 0.0
    %3062 = vmatpush2.msra.mxu0 0.0
    %3063 = vmatprep.subr.mxu0 0.0
    %3064 = vmatpush2.msra.mxu0 0.0
    %3065 = vmatprep.subr.mxu0 0.0
    %3066 = vmatpush2.msra.mxu0 0.0
    %3067 = vmatprep.subr.mxu0 0.0
    %3068 = vmatpush2.msra.mxu0 0.0
    %3069 = vmatprep.subr.mxu0 0.0
    %3070 = vmatpush2.msra.mxu0 0.0
    %3071 = vmatprep.subr.mxu0 0.0
    %3072 = vmatpush2.msra.mxu0 0.0
    %3073 = vmatprep.subr.mxu0 0.0
    %3074 = vmatpush2.msra.mxu0 0.0
    %3075 = vmatprep.subr.mxu0 0.0
    %3076 = vmatpush2.msra.mxu0 0.0
    %3077 = vmatprep.subr.mxu0 0.0
    %3078 = vmatpush2.msra.mxu0 0.0
    %3079 = vmatprep.subr.mxu0 0.0
    %3080 = vmatpush2.msra.mxu0 0.0
    %3081 = vmatprep.subr.mxu0 0.0
    %3082 = vmatpush2.msra.mxu0 0.0
    %3083 = vmatprep.subr.mxu0 0.0
    %3084 = vmatpush2.msra.mxu0 0.0
    %3085 = vmatprep.mubr.f32.mxu0 0.0
    %3086 = vmatmul.mubr.f32.gmra.mxu0 %v3017
    %v3087 = vpop.f32.mrf.mxu0
    %v3088 = vadd.f32 %v2979, %v3087
    %v3089 = vpop.f32.mrf.mxu0
    %3090 = vmatprep.mubr.f32.mxu0 0.0
    %3091 = vmatmul.mubr.f32.gmra.mxu0 %v3019
    %v3092 = vpop.f32.mrf.mxu0
    %v3093 = vadd.f32 %v2984, %v3092
    %v3094 = vpop.f32.mrf.mxu0
    %3095 = vdwg.mxu0
    %v3096 = vld [vmem:[%s5] sm:$0x1]
    %v3098 = vlaneseq
    %v3099 = vshrl.u32 %v3098, 7
    %v3100 = vsub.s32 0, %v3099
    %v3101 = vrot.slane %v3096, %v3100
    %v3103 = vadd.f32 %v3088, %v3101
    %v3104 = vadd.f32 %v3093, %v3101
    %3105 = vst.msk [vmem:[#allocation11] sm:$0xff] %vm128, %v3103
    %3106 = vst.msk [vmem:[#allocation11 + $0x8] sm:$0xff] %vm128, %v3104
    // Predicated region
    $region46: #{tpu_custom_call.1} parent=1 // pred_check
      _
    $region47: #{tpu_custom_call.1} parent=1 // pred_check_branch
      %3108 = sbr.rel (0) target = $region49
    $region48: #{tpu_custom_call.1} parent=1 // pred_region
      %s3110 = ssub.s32 256, 256
      %3111 = vsyncadd [#allocation4], %s3110
      %s3112 = sshll.u32 [#allocation11], 4
      %s3113 = int_to_ptr.vmem [resolvable:$true] %s3112
      %3118 = dma.vmem_to_hbm [thread:$0]  %s3113, 256, %s6, [#allocation4], 128, 128, 8
    $region49: #{tpu_custom_call.1} parent=1 // pred_fallthru
      _
    // Predicated region
    $region50: #{tpu_custom_call.1} parent=1 // pred_check
      _
    $region51: #{tpu_custom_call.1} parent=1 // pred_check_branch
      %3120 = sbr.rel (0) target = $region53
    $region52: #{tpu_custom_call.1} parent=1 // pred_region
      %3121 = dma.done [#allocation4], 256
    $region53: #{tpu_custom_call.1} parent=1 // pred_fallthru
      _
    %3122 = vsyncpa [#allocation3], 1
    %3123 = vsyncpa [#allocation6], 1
    %3124 = vsyncpa [#allocation9], 1
    %3125 = vsyncpa [#allocation4], 1

// kernel: tpu_custom_call.1
$region0: #{tpu_custom_call.1}
  #allocation0 [shape = 'u32[]', space=smem, size = 0x4, offset = 0x4, fixed_abs, tag = 'smem constant byte address 0x4 - core index']
  #allocation1 [shape = 'u32[144,128]{1,0:T(1,128)}', space=vmem, size = 0x12000, scoped, tag = 'internal scratch']
  %s0 = inlined_call_operand.hbm [shape: f32[16,8,32], index: 0, kind: input, shape index: {}]
  %s1 = inlined_call_operand.hbm [shape: f32[16,8,32], index: 1, kind: input, shape index: {}]
  %s2 = inlined_call_operand.hbm [shape: f32[32,32], index: 2, kind: input, shape index: {}]
  %s3 = inlined_call_operand.hbm [shape: f32[32,32], index: 3, kind: input, shape index: {}]
  %s4 = inlined_call_operand.hbm [shape: f32[32,32], index: 4, kind: input, shape index: {}]
  %s5 = inlined_call_operand.vmem [shape: f32[1,32], index: 5, kind: input, shape index: {}]
  %s6 = inlined_call_operand.hbm [shape: f32[16,32], index: 6, kind: output, shape index: {}]
  %s7 = sld [smem:[#allocation0]]
  $region54: #{tpu_custom_call.1} parent=0
    _
  %s9 = ssub.s32 1, %s7
  %s10 = scalar_select 0, %s9, %s7
  $region1: #{tpu_custom_call.1} parent=0
    #allocation2 [shape = 'u8[65536]{0}', space=vmem, size = 0x10000, scoped, tag = 'input window, operand 0, single buffered']
    #allocation3 [shape = 's32[1]{0}', space=sflag, size = 0x4, scoped, tag = 'scoped memory for tpu_custom_call.1']
    #allocation4 [shape = 's32[1]{0}', space=sflag, size = 0x4, scoped, tag = 'scoped memory for tpu_custom_call.1']
    #allocation5 [shape = 'u8[65536]{0}', space=vmem, size = 0x10000, scoped, tag = 'input window, operand 1, single buffered']
    #allocation6 [shape = 's32[1]{0}', space=sflag, size = 0x4, scoped, tag = 'scoped memory for tpu_custom_call.1']
    #allocation7 [shape = 'u8[16384]{0}', space=vmem, size = 0x4000, scoped, tag = 'input window, operand 2, single buffered']
    #allocation8 [shape = 'u8[16384]{0}', space=vmem, size = 0x4000, scoped, tag = 'input window, operand 3, single buffered']
    #allocation9 [shape = 's32[1]{0}', space=sflag, size = 0x4, scoped, tag = 'scoped memory for tpu_custom_call.1']
    #allocation10 [shape = 'u8[16384]{0}', space=vmem, size = 0x4000, scoped, tag = 'input window, operand 4, single buffered']
    #allocation11 [shape = 'u8[8192]{0}', space=vmem, size = 0x2000, scoped, tag = 'output window, operand 0, single buffered']
    %11 = vsyncpa [#allocation3], 0
    %12 = vsyncpa [#allocation6], 0
    %13 = vsyncpa [#allocation9], 0
    %14 = vsyncpa [#allocation4], 0
    // Predicated region
    $region2: #{tpu_custom_call.1} parent=1 // pred_check
      _
    $region3: #{tpu_custom_call.1} parent=1 // pred_check_branch
      %16 = sbr.rel (0) target = $region5
    $region4: #{tpu_custom_call.1} parent=1 // pred_region
      %s18 = ssub.s32 2048, 2048
      %19 = vsyncadd [#allocation3], %s18
      %s20 = sshll.u32 [#allocation2], 4
      %s21 = int_to_ptr.vmem [resolvable:$true] %s20
      %26 = dma.hbm_to_vmem [thread:$0]  %s0, 2048, %s21, [#allocation3], 128, 128, 8
    $region5: #{tpu_custom_call.1} parent=1 // pred_fallthru
      _
    // Predicated region
    $region6: #{tpu_custom_call.1} parent=1 // pred_check
      _
    $region7: #{tpu_custom_call.1} parent=1 // pred_check_branch
      %28 = sbr.rel (0) target = $region9
    $region8: #{tpu_custom_call.1} parent=1 // pred_region
      %s30 = ssub.s32 2048, 2048
      %31 = vsyncadd [#allocation6], %s30
      %s32 = sshll.u32 [#allocation5], 4
      %s33 = int_to_ptr.vmem [resolvable:$true] %s32
      %38 = dma.hbm_to_vmem [thread:$0]  %s1, 2048, %s33, [#allocation6], 128, 128, 8
    $region9: #{tpu_custom_call.1} parent=1 // pred_fallthru
      _
    // Predicated region
    $region10: #{tpu_custom_call.1} parent=1 // pred_check
      _
    $region11: #{tpu_custom_call.1} parent=1 // pred_check_branch
      %40 = sbr.rel (0) target = $region13
    $region12: #{tpu_custom_call.1} parent=1 // pred_region
      %s42 = ssub.s32 512, 512
      %43 = vsyncadd [#allocation6], %s42
      %s44 = sshll.u32 [#allocation7], 4
      %s45 = int_to_ptr.vmem [resolvable:$true] %s44
      %50 = dma.hbm_to_vmem [thread:$0]  %s2, 512, %s45, [#allocation6], 128, 128, 8
    $region13: #{tpu_custom_call.1} parent=1 // pred_fallthru
      _
    // Predicated region
    $region14: #{tpu_custom_call.1} parent=1 // pred_check
      _
    $region15: #{tpu_custom_call.1} parent=1 // pred_check_branch
      %52 = sbr.rel (0) target = $region17
    $region16: #{tpu_custom_call.1} parent=1 // pred_region
      %s54 = ssub.s32 512, 512
      %55 = vsyncadd [#allocation9], %s54
      %s56 = sshll.u32 [#allocation8], 4
      %s57 = int_to_ptr.vmem [resolvable:$true] %s56
      %62 = dma.hbm_to_vmem [thread:$0]  %s3, 512, %s57, [#allocation9], 128, 128, 8
    $region17: #{tpu_custom_call.1} parent=1 // pred_fallthru
      _
    // Predicated region
    $region18: #{tpu_custom_call.1} parent=1 // pred_check
      _
    $region19: #{tpu_custom_call.1} parent=1 // pred_check_branch
      %64 = sbr.rel (0) target = $region21
    $region20: #{tpu_custom_call.1} parent=1 // pred_region
      %s66 = ssub.s32 512, 512
      %67 = vsyncadd [#allocation9], %s66
      %s68 = sshll.u32 [#allocation10], 4
      %s69 = int_to_ptr.vmem [resolvable:$true] %s68
      %74 = dma.hbm_to_vmem [thread:$0]  %s4, 512, %s69, [#allocation9], 128, 128, 8
    $region21: #{tpu_custom_call.1} parent=1 // pred_fallthru
      _
    // Predicated region
    $region22: #{tpu_custom_call.1} parent=1 // pred_check
      _
    $region23: #{tpu_custom_call.1} parent=1 // pred_check_branch
      %76 = sbr.rel (0) target = $region25
    $region24: #{tpu_custom_call.1} parent=1 // pred_region
      _
    $region25: #{tpu_custom_call.1} parent=1 // pred_fallthru
      _
    // Predicated region
    $region26: #{tpu_custom_call.1} parent=1 // pred_check
      _
    $region27: #{tpu_custom_call.1} parent=1 // pred_check_branch
      %78 = sbr.rel (0) target = $region29
    $region28: #{tpu_custom_call.1} parent=1 // pred_region
      %79 = dma.done [#allocation3], 2048
    $region29: #{tpu_custom_call.1} parent=1 // pred_fallthru
      _
    // Predicated region
    $region30: #{tpu_custom_call.1} parent=1 // pred_check
      _
    $region31: #{tpu_custom_call.1} parent=1 // pred_check_branch
      %81 = sbr.rel (0) target = $region33
    $region32: #{tpu_custom_call.1} parent=1 // pred_region
      %82 = dma.done [#allocation6], 2048
    $region33: #{tpu_custom_call.1} parent=1 // pred_fallthru
      _
    // Predicated region
    $region34: #{tpu_custom_call.1} parent=1 // pred_check
      _
    $region35: #{tpu_custom_call.1} parent=1 // pred_check_branch
      %84 = sbr.rel (0) target = $region37
    $region36: #{tpu_custom_call.1} parent=1 // pred_region
      %85 = dma.done [#allocation6], 512
    $region37: #{tpu_custom_call.1} parent=1 // pred_fallthru
      _
    // Predicated region
    $region38: #{tpu_custom_call.1} parent=1 // pred_check
      _
    $region39: #{tpu_custom_call.1} parent=1 // pred_check_branch
      %87 = sbr.rel (0) target = $region41
    $region40: #{tpu_custom_call.1} parent=1 // pred_region
      %88 = dma.done [#allocation9], 512
    $region41: #{tpu_custom_call.1} parent=1 // pred_fallthru
      _
    // Predicated region
    $region42: #{tpu_custom_call.1} parent=1 // pred_check
      _
    $region43: #{tpu_custom_call.1} parent=1 // pred_check_branch
      %90 = sbr.rel (0) target = $region45
    $region44: #{tpu_custom_call.1} parent=1 // pred_region
      %91 = dma.done [#allocation9], 512
    $region45: #{tpu_custom_call.1} parent=1 // pred_fallthru
      _
    %v92 = vld [vmem:[#allocation2] sm:$0xff]
    %v93 = vld [vmem:[#allocation2 + $0x8] sm:$0xff]
    %v94 = vld [vmem:[#allocation2 + $0x10] sm:$0xff]
    %v95 = vld [vmem:[#allocation2 + $0x18] sm:$0xff]
    %v96 = vld [vmem:[#allocation2 + $0x20] sm:$0xff]
    %v97 = vld [vmem:[#allocation2 + $0x28] sm:$0xff]
    %v98 = vld [vmem:[#allocation2 + $0x30] sm:$0xff]
    %v99 = vld [vmem:[#allocation2 + $0x38] sm:$0xff]
    %v100 = vld [vmem:[#allocation2 + $0x40] sm:$0xff]
    %v101 = vld [vmem:[#allocation2 + $0x48] sm:$0xff]
    %v102 = vld [vmem:[#allocation2 + $0x50] sm:$0xff]
    %v103 = vld [vmem:[#allocation2 + $0x58] sm:$0xff]
    %v104 = vld [vmem:[#allocation2 + $0x60] sm:$0xff]
    %v105 = vld [vmem:[#allocation2 + $0x68] sm:$0xff]
    %v106 = vld [vmem:[#allocation2 + $0x70] sm:$0xff]
    %v107 = vld [vmem:[#allocation2 + $0x78] sm:$0xff]
    %v108 = vld [vmem:[#allocation5] sm:$0xff]
    %v109 = vld [vmem:[#allocation5 + $0x8] sm:$0xff]
    %v110 = vld [vmem:[#allocation5 + $0x10] sm:$0xff]
    %v111 = vld [vmem:[#allocation5 + $0x18] sm:$0xff]
    %v112 = vld [vmem:[#allocation5 + $0x20] sm:$0xff]
    %v113 = vld [vmem:[#allocation5 + $0x28] sm:$0xff]
    %v114 = vld [vmem:[#allocation5 + $0x30] sm:$0xff]
    %v115 = vld [vmem:[#allocation5 + $0x38] sm:$0xff]
    %v116 = vld [vmem:[#allocation5 + $0x40] sm:$0xff]
    %v117 = vld [vmem:[#allocation5 + $0x48] sm:$0xff]
    %v118 = vld [vmem:[#allocation5 + $0x50] sm:$0xff]
    %v119 = vld [vmem:[#allocation5 + $0x58] sm:$0xff]
    %v120 = vld [vmem:[#allocation5 + $0x60] sm:$0xff]
    %v121 = vld [vmem:[#allocation5 + $0x68] sm:$0xff]
    %v122 = vld [vmem:[#allocation5 + $0x70] sm:$0xff]
    %v123 = vld [vmem:[#allocation5 + $0x78] sm:$0xff]
    %v124 = vld [vmem:[#allocation7] sm:$0xff]
    %v125 = vld [vmem:[#allocation7 + $0x8] sm:$0xff]
    %v126 = vld [vmem:[#allocation7 + $0x10] sm:$0xff]
    %v127 = vld [vmem:[#allocation7 + $0x18] sm:$0xff]
    %vm128 = vcmask 261120
    %v130 = vsel %vm128, %v92, 0
    %v133 = vsel %vm128, %v93, 0
    %v136 = vsel %vm128, %v94, 0
    %v139 = vsel %vm128, %v95, 0
    %v142 = vsel %vm128, %v96, 0
    %v145 = vsel %vm128, %v97, 0
    %v148 = vsel %vm128, %v98, 0
    %v151 = vsel %vm128, %v99, 0
    %v154 = vsel %vm128, %v100, 0
    %v157 = vsel %vm128, %v101, 0
    %v160 = vsel %vm128, %v102, 0
    %v163 = vsel %vm128, %v103, 0
    %v166 = vsel %vm128, %v104, 0
    %v169 = vsel %vm128, %v105, 0
    %v172 = vsel %vm128, %v106, 0
    %v175 = vsel %vm128, %v107, 0
    %177 = vmatprep.subr.mxu0 0.0
    %178 = vmatpush1.msra.mxu0 0.0
    %179 = vmatprep.subr.mxu0 0.0
    %180 = vmatpush1.msra.mxu0 0.0
    %181 = vmatprep.subr.mxu0 0.0
    %182 = vmatpush1.msra.mxu0 0.0
    %183 = vmatprep.subr.mxu0 0.0
    %184 = vmatpush1.msra.mxu0 0.0
    %185 = vmatprep.subr.mxu0 0.0
    %186 = vmatpush1.msra.mxu0 0.0
    %187 = vmatprep.subr.mxu0 0.0
    %188 = vmatpush1.msra.mxu0 0.0
    %189 = vmatprep.subr.mxu0 0.0
    %190 = vmatpush1.msra.mxu0 0.0
    %191 = vmatprep.subr.mxu0 0.0
    %192 = vmatpush1.msra.mxu0 0.0
    %193 = vmatprep.subr.mxu0 0.0
    %194 = vmatpush1.msra.mxu0 0.0
    %195 = vmatprep.subr.mxu0 0.0
    %196 = vmatpush1.msra.mxu0 0.0
    %197 = vmatprep.subr.mxu0 0.0
    %198 = vmatpush1.msra.mxu0 0.0
    %199 = vmatprep.subr.mxu0 0.0
    %200 = vmatpush1.msra.mxu0 0.0
    %201 = vmatprep.subr.mxu0 0.0
    %202 = vmatpush1.msra.mxu0 %v127
    %203 = vmatprep.subr.mxu0 0.0
    %204 = vmatpush1.msra.mxu0 %v126
    %205 = vmatprep.subr.mxu0 0.0
    %206 = vmatpush1.msra.mxu0 %v125
    %207 = vmatprep.subr.mxu0 0.0
    %208 = vmatpush1.msra.mxu0 %v124
    %209 = vmatprep.subr.mxu0 0.0
    %210 = vmatpush2.msra.mxu0 0.0
    %211 = vmatprep.subr.mxu0 0.0
    %212 = vmatpush2.msra.mxu0 0.0
    %213 = vmatprep.subr.mxu0 0.0
    %214 = vmatpush2.msra.mxu0 0.0
    %215 = vmatprep.subr.mxu0 0.0
    %216 = vmatpush2.msra.mxu0 0.0
    %217 = vmatprep.subr.mxu0 0.0
    %218 = vmatpush2.msra.mxu0 0.0
    %219 = vmatprep.subr.mxu0 0.0
    %220 = vmatpush2.msra.mxu0 0.0
    %221 = vmatprep.subr.mxu0 0.0
    %222 = vmatpush2.msra.mxu0 0.0
    %223 = vmatprep.subr.mxu0 0.0
    %224 = vmatpush2.msra.mxu0 0.0
    %225 = vmatprep.subr.mxu0 0.0
    %226 = vmatpush2.msra.mxu0 0.0
    %227 = vmatprep.subr.mxu0 0.0
    %228 = vmatpush2.msra.mxu0 0.0
    %229 = vmatprep.subr.mxu0 0.0
    %230 = vmatpush2.msra.mxu0 0.0
    %231 = vmatprep.subr.mxu0 0.0
    %232 = vmatpush2.msra.mxu0 0.0
    %233 = vmatprep.subr.mxu0 0.0
    %234 = vmatpush2.msra.mxu0 0.0
    %235 = vmatprep.subr.mxu0 0.0
    %236 = vmatpush2.msra.mxu0 0.0
    %237 = vmatprep.subr.mxu0 0.0
    %238 = vmatpush2.msra.mxu0 0.0
    %239 = vmatprep.subr.mxu0 0.0
    %240 = vmatpush2.msra.mxu0 0.0
    %241 = vmatprep.mubr.f32.mxu0 0.0
    %242 = vmatmul.mubr.f32.gmra.mxu0 %v130
    %v243 = vpop.f32.mrf.mxu0
    %v244 = vadd.f32 0.0, %v243
    %v245 = vpop.f32.mrf.mxu0
    %246 = vmatprep.mubr.f32.mxu0 0.0
    %247 = vmatmul.mubr.f32.gmra.mxu0 %v133
    %v248 = vpop.f32.mrf.mxu0
    %v249 = vadd.f32 0.0, %v248
    %v250 = vpop.f32.mrf.mxu0
    %251 = vmatprep.mubr.f32.mxu0 0.0
    %252 = vmatmul.mubr.f32.gmra.mxu0 %v136
    %v253 = vpop.f32.mrf.mxu0
    %v254 = vadd.f32 0.0, %v253
    %v255 = vpop.f32.mrf.mxu0
    %256 = vmatprep.mubr.f32.mxu0 0.0
    %257 = vmatmul.mubr.f32.gmra.mxu0 %v139
    %v258 = vpop.f32.mrf.mxu0
    %v259 = vadd.f32 0.0, %v258
    %v260 = vpop.f32.mrf.mxu0
    %261 = vmatprep.mubr.f32.mxu0 0.0
    %262 = vmatmul.mubr.f32.gmra.mxu0 %v142
    %v263 = vpop.f32.mrf.mxu0
    %v264 = vadd.f32 0.0, %v263
    %v265 = vpop.f32.mrf.mxu0
    %266 = vmatprep.mubr.f32.mxu0 0.0
    %267 = vmatmul.mubr.f32.gmra.mxu0 %v145
    %v268 = vpop.f32.mrf.mxu0
    %v269 = vadd.f32 0.0, %v268
    %v270 = vpop.f32.mrf.mxu0
    %271 = vmatprep.mubr.f32.mxu0 0.0
    %272 = vmatmul.mubr.f32.gmra.mxu0 %v148
    %v273 = vpop.f32.mrf.mxu0
    %v274 = vadd.f32 0.0, %v273
    %v275 = vpop.f32.mrf.mxu0
    %276 = vmatprep.mubr.f32.mxu0 0.0
    %277 = vmatmul.mubr.f32.gmra.mxu0 %v151
    %v278 = vpop.f32.mrf.mxu0
    %v279 = vadd.f32 0.0, %v278
    %v280 = vpop.f32.mrf.mxu0
    %281 = vmatprep.mubr.f32.mxu0 0.0
    %282 = vmatmul.mubr.f32.gmra.mxu0 %v154
    %v283 = vpop.f32.mrf.mxu0
    %v284 = vadd.f32 0.0, %v283
    %v285 = vpop.f32.mrf.mxu0
    %286 = vmatprep.mubr.f32.mxu0 0.0
    %287 = vmatmul.mubr.f32.gmra.mxu0 %v157
    %v288 = vpop.f32.mrf.mxu0
    %v289 = vadd.f32 0.0, %v288
    %v290 = vpop.f32.mrf.mxu0
    %291 = vmatprep.mubr.f32.mxu0 0.0
    %292 = vmatmul.mubr.f32.gmra.mxu0 %v160
    %v293 = vpop.f32.mrf.mxu0
    %v294 = vadd.f32 0.0, %v293
    %v295 = vpop.f32.mrf.mxu0
    %296 = vmatprep.mubr.f32.mxu0 0.0
    %297 = vmatmul.mubr.f32.gmra.mxu0 %v163
    %v298 = vpop.f32.mrf.mxu0
    %v299 = vadd.f32 0.0, %v298
    %v300 = vpop.f32.mrf.mxu0
    %301 = vmatprep.mubr.f32.mxu0 0.0
    %302 = vmatmul.mubr.f32.gmra.mxu0 %v166
    %v303 = vpop.f32.mrf.mxu0
    %v304 = vadd.f32 0.0, %v303
    %v305 = vpop.f32.mrf.mxu0
    %306 = vmatprep.mubr.f32.mxu0 0.0
    %307 = vmatmul.mubr.f32.gmra.mxu0 %v169
    %v308 = vpop.f32.mrf.mxu0
    %v309 = vadd.f32 0.0, %v308
    %v310 = vpop.f32.mrf.mxu0
    %311 = vmatprep.mubr.f32.mxu0 0.0
    %312 = vmatmul.mubr.f32.gmra.mxu0 %v172
    %v313 = vpop.f32.mrf.mxu0
    %v314 = vadd.f32 0.0, %v313
    %v315 = vpop.f32.mrf.mxu0
    %316 = vmatprep.mubr.f32.mxu0 0.0
    %317 = vmatmul.mubr.f32.gmra.mxu0 %v175
    %v318 = vpop.f32.mrf.mxu0
    %v319 = vadd.f32 0.0, %v318
    %v320 = vpop.f32.mrf.mxu0
    %321 = vdwg.mxu0
    %v323 = vsel %vm128, %v244, 0
    %v326 = vsel %vm128, %v108, 0
    %328 = vmatprep.subr.mxu0 0.0
    %329 = vmatpush1.xpose.msra.mxu0 0.0
    %330 = vmatprep.subr.mxu0 0.0
    %331 = vmatpush1.xpose.msra.mxu0 0.0
    %332 = vmatprep.subr.mxu0 0.0
    %333 = vmatpush1.xpose.msra.mxu0 0.0
    %334 = vmatprep.subr.mxu0 0.0
    %335 = vmatpush1.xpose.msra.mxu0 0.0
    %336 = vmatprep.subr.mxu0 0.0
    %337 = vmatpush1.xpose.msra.mxu0 0.0
    %338 = vmatprep.subr.mxu0 0.0
    %339 = vmatpush1.xpose.msra.mxu0 0.0
    %340 = vmatprep.subr.mxu0 0.0
    %341 = vmatpush1.xpose.msra.mxu0 0.0
    %342 = vmatprep.subr.mxu0 0.0
    %343 = vmatpush1.xpose.msra.mxu0 0.0
    %344 = vmatprep.subr.mxu0 0.0
    %345 = vmatpush1.xpose.msra.mxu0 0.0
    %346 = vmatprep.subr.mxu0 0.0
    %347 = vmatpush1.xpose.msra.mxu0 0.0
    %348 = vmatprep.subr.mxu0 0.0
    %349 = vmatpush1.xpose.msra.mxu0 0.0
    %350 = vmatprep.subr.mxu0 0.0
    %351 = vmatpush1.xpose.msra.mxu0 0.0
    %352 = vmatprep.subr.mxu0 0.0
    %353 = vmatpush1.xpose.msra.mxu0 0.0
    %354 = vmatprep.subr.mxu0 0.0
    %355 = vmatpush1.xpose.msra.mxu0 0.0
    %356 = vmatprep.subr.mxu0 0.0
    %357 = vmatpush1.xpose.msra.mxu0 0.0
    %358 = vmatprep.subr.mxu0 0.0
    %359 = vmatpush1.xpose.msra.mxu0 %v326
    %360 = vmatprep.subr.mxu0 0.0
    %361 = vmatpush2.xpose.msra.mxu0 0.0
    %362 = vmatprep.subr.mxu0 0.0
    %363 = vmatpush2.xpose.msra.mxu0 0.0
    %364 = vmatprep.subr.mxu0 0.0
    %365 = vmatpush2.xpose.msra.mxu0 0.0
    %366 = vmatprep.subr.mxu0 0.0
    %367 = vmatpush2.xpose.msra.mxu0 0.0
    %368 = vmatprep.subr.mxu0 0.0
    %369 = vmatpush2.xpose.msra.mxu0 0.0
    %370 = vmatprep.subr.mxu0 0.0
    %371 = vmatpush2.xpose.msra.mxu0 0.0
    %372 = vmatprep.subr.mxu0 0.0
    %373 = vmatpush2.xpose.msra.mxu0 0.0
    %374 = vmatprep.subr.mxu0 0.0
    %375 = vmatpush2.xpose.msra.mxu0 0.0
    %376 = vmatprep.subr.mxu0 0.0
    %377 = vmatpush2.xpose.msra.mxu0 0.0
    %378 = vmatprep.subr.mxu0 0.0
    %379 = vmatpush2.xpose.msra.mxu0 0.0
    %380 = vmatprep.subr.mxu0 0.0
    %381 = vmatpush2.xpose.msra.mxu0 0.0
    %382 = vmatprep.subr.mxu0 0.0
    %383 = vmatpush2.xpose.msra.mxu0 0.0
    %384 = vmatprep.subr.mxu0 0.0
    %385 = vmatpush2.xpose.msra.mxu0 0.0
    %386 = vmatprep.subr.mxu0 0.0
    %387 = vmatpush2.xpose.msra.mxu0 0.0
    %388 = vmatprep.subr.mxu0 0.0
    %389 = vmatpush2.xpose.msra.mxu0 0.0
    %390 = vmatprep.subr.mxu0 0.0
    %391 = vmatpush2.xpose.msra.mxu0 0.0
    %392 = vmatprep.mubr.f32.mxu0 0.0
    %393 = vmatmul.mubr.f32.gmra.mxu0 %v323
    %v394 = vpop.f32.mrf.mxu0
    %v395 = vadd.f32 0.0, %v394
    %v396 = vpop.f32.mrf.mxu0
    %397 = vdwg.mxu0
    %v399 = vsel %vm128, %v249, 0
    %v402 = vsel %vm128, %v109, 0
    %404 = vmatprep.subr.mxu0 0.0
    %405 = vmatpush1.xpose.msra.mxu0 0.0
    %406 = vmatprep.subr.mxu0 0.0
    %407 = vmatpush1.xpose.msra.mxu0 0.0
    %408 = vmatprep.subr.mxu0 0.0
    %409 = vmatpush1.xpose.msra.mxu0 0.0
    %410 = vmatprep.subr.mxu0 0.0
    %411 = vmatpush1.xpose.msra.mxu0 0.0
    %412 = vmatprep.subr.mxu0 0.0
    %413 = vmatpush1.xpose.msra.mxu0 0.0
    %414 = vmatprep.subr.mxu0 0.0
    %415 = vmatpush1.xpose.msra.mxu0 0.0
    %416 = vmatprep.subr.mxu0 0.0
    %417 = vmatpush1.xpose.msra.mxu0 0.0
    %418 = vmatprep.subr.mxu0 0.0
    %419 = vmatpush1.xpose.msra.mxu0 0.0
    %420 = vmatprep.subr.mxu0 0.0
    %421 = vmatpush1.xpose.msra.mxu0 0.0
    %422 = vmatprep.subr.mxu0 0.0
    %423 = vmatpush1.xpose.msra.mxu0 0.0
    %424 = vmatprep.subr.mxu0 0.0
    %425 = vmatpush1.xpose.msra.mxu0 0.0
    %426 = vmatprep.subr.mxu0 0.0
    %427 = vmatpush1.xpose.msra.mxu0 0.0
    %428 = vmatprep.subr.mxu0 0.0
    %429 = vmatpush1.xpose.msra.mxu0 0.0
    %430 = vmatprep.subr.mxu0 0.0
    %431 = vmatpush1.xpose.msra.mxu0 0.0
    %432 = vmatprep.subr.mxu0 0.0
    %433 = vmatpush1.xpose.msra.mxu0 0.0
    %434 = vmatprep.subr.mxu0 0.0
    %435 = vmatpush1.xpose.msra.mxu0 %v402
    %436 = vmatprep.subr.mxu0 0.0
    %437 = vmatpush2.xpose.msra.mxu0 0.0
    %438 = vmatprep.subr.mxu0 0.0
    %439 = vmatpush2.xpose.msra.mxu0 0.0
    %440 = vmatprep.subr.mxu0 0.0
    %441 = vmatpush2.xpose.msra.mxu0 0.0
    %442 = vmatprep.subr.mxu0 0.0
    %443 = vmatpush2.xpose.msra.mxu0 0.0
    %444 = vmatprep.subr.mxu0 0.0
    %445 = vmatpush2.xpose.msra.mxu0 0.0
    %446 = vmatprep.subr.mxu0 0.0
    %447 = vmatpush2.xpose.msra.mxu0 0.0
    %448 = vmatprep.subr.mxu0 0.0
    %449 = vmatpush2.xpose.msra.mxu0 0.0
    %450 = vmatprep.subr.mxu0 0.0
    %451 = vmatpush2.xpose.msra.mxu0 0.0
    %452 = vmatprep.subr.mxu0 0.0
    %453 = vmatpush2.xpose.msra.mxu0 0.0
    %454 = vmatprep.subr.mxu0 0.0
    %455 = vmatpush2.xpose.msra.mxu0 0.0
    %456 = vmatprep.subr.mxu0 0.0
    %457 = vmatpush2.xpose.msra.mxu0 0.0
    %458 = vmatprep.subr.mxu0 0.0
    %459 = vmatpush2.xpose.msra.mxu0 0.0
    %460 = vmatprep.subr.mxu0 0.0
    %461 = vmatpush2.xpose.msra.mxu0 0.0
    %462 = vmatprep.subr.mxu0 0.0
    %463 = vmatpush2.xpose.msra.mxu0 0.0
    %464 = vmatprep.subr.mxu0 0.0
    %465 = vmatpush2.xpose.msra.mxu0 0.0
    %466 = vmatprep.subr.mxu0 0.0
    %467 = vmatpush2.xpose.msra.mxu0 0.0
    %468 = vmatprep.mubr.f32.mxu0 0.0
    %469 = vmatmul.mubr.f32.gmra.mxu0 %v399
    %v470 = vpop.f32.mrf.mxu0
    %v471 = vadd.f32 0.0, %v470
    %v472 = vpop.f32.mrf.mxu0
    %473 = vdwg.mxu0
    %v475 = vsel %vm128, %v254, 0
    %v478 = vsel %vm128, %v110, 0
    %480 = vmatprep.subr.mxu0 0.0
    %481 = vmatpush1.xpose.msra.mxu0 0.0
    %482 = vmatprep.subr.mxu0 0.0
    %483 = vmatpush1.xpose.msra.mxu0 0.0
    %484 = vmatprep.subr.mxu0 0.0
    %485 = vmatpush1.xpose.msra.mxu0 0.0
    %486 = vmatprep.subr.mxu0 0.0
    %487 = vmatpush1.xpose.msra.mxu0 0.0
    %488 = vmatprep.subr.mxu0 0.0
    %489 = vmatpush1.xpose.msra.mxu0 0.0
    %490 = vmatprep.subr.mxu0 0.0
    %491 = vmatpush1.xpose.msra.mxu0 0.0
    %492 = vmatprep.subr.mxu0 0.0
    %493 = vmatpush1.xpose.msra.mxu0 0.0
    %494 = vmatprep.subr.mxu0 0.0
    %495 = vmatpush1.xpose.msra.mxu0 0.0
    %496 = vmatprep.subr.mxu0 0.0
    %497 = vmatpush1.xpose.msra.mxu0 0.0
    %498 = vmatprep.subr.mxu0 0.0
    %499 = vmatpush1.xpose.msra.mxu0 0.0
    %500 = vmatprep.subr.mxu0 0.0
    %501 = vmatpush1.xpose.msra.mxu0 0.0
    %502 = vmatprep.subr.mxu0 0.0
    %503 = vmatpush1.xpose.msra.mxu0 0.0
    %504 = vmatprep.subr.mxu0 0.0
    %505 = vmatpush1.xpose.msra.mxu0 0.0
    %506 = vmatprep.subr.mxu0 0.0
    %507 = vmatpush1.xpose.msra.mxu0 0.0
    %508 = vmatprep.subr.mxu0 0.0
    %509 = vmatpush1.xpose.msra.mxu0 0.0
    %510 = vmatprep.subr.mxu0 0.0
    %511 = vmatpush1.xpose.msra.mxu0 %v478
    %512 = vmatprep.subr.mxu0 0.0
    %513 = vmatpush2.xpose.msra.mxu0 0.0
    %514 = vmatprep.subr.mxu0 0.0
    %515 = vmatpush2.xpose.msra.mxu0 0.0
    %516 = vmatprep.subr.mxu0 0.0
    %517 = vmatpush2.xpose.msra.mxu0 0.0
    %518 = vmatprep.subr.mxu0 0.0
    %519 = vmatpush2.xpose.msra.mxu0 0.0
    %520 = vmatprep.subr.mxu0 0.0
    %521 = vmatpush2.xpose.msra.mxu0 0.0
    %522 = vmatprep.subr.mxu0 0.0
    %523 = vmatpush2.xpose.msra.mxu0 0.0
    %524 = vmatprep.subr.mxu0 0.0
    %525 = vmatpush2.xpose.msra.mxu0 0.0
    %526 = vmatprep.subr.mxu0 0.0
    %527 = vmatpush2.xpose.msra.mxu0 0.0
    %528 = vmatprep.subr.mxu0 0.0
    %529 = vmatpush2.xpose.msra.mxu0 0.0
    %530 = vmatprep.subr.mxu0 0.0
    %531 = vmatpush2.xpose.msra.mxu0 0.0
    %532 = vmatprep.subr.mxu0 0.0
    %533 = vmatpush2.xpose.msra.mxu0 0.0
    %534 = vmatprep.subr.mxu0 0.0
    %535 = vmatpush2.xpose.msra.mxu0 0.0
    %536 = vmatprep.subr.mxu0 0.0
    %537 = vmatpush2.xpose.msra.mxu0 0.0
    %538 = vmatprep.subr.mxu0 0.0
    %539 = vmatpush2.xpose.msra.mxu0 0.0
    %540 = vmatprep.subr.mxu0 0.0
    %541 = vmatpush2.xpose.msra.mxu0 0.0
    %542 = vmatprep.subr.mxu0 0.0
    %543 = vmatpush2.xpose.msra.mxu0 0.0
    %544 = vmatprep.mubr.f32.mxu0 0.0
    %545 = vmatmul.mubr.f32.gmra.mxu0 %v475
    %v546 = vpop.f32.mrf.mxu0
    %v547 = vadd.f32 0.0, %v546
    %v548 = vpop.f32.mrf.mxu0
    %549 = vdwg.mxu0
    %v551 = vsel %vm128, %v259, 0
    %v554 = vsel %vm128, %v111, 0
    %556 = vmatprep.subr.mxu0 0.0
    %557 = vmatpush1.xpose.msra.mxu0 0.0
    %558 = vmatprep.subr.mxu0 0.0
    %559 = vmatpush1.xpose.msra.mxu0 0.0
    %560 = vmatprep.subr.mxu0 0.0
    %561 = vmatpush1.xpose.msra.mxu0 0.0
    %562 = vmatprep.subr.mxu0 0.0
    %563 = vmatpush1.xpose.msra.mxu0 0.0
    %564 = vmatprep.subr.mxu0 0.0
    %565 = vmatpush1.xpose.msra.mxu0 0.0
    %566 = vmatprep.subr.mxu0 0.0
    %567 = vmatpush1.xpose.msra.mxu0 0.0
    %568 = vmatprep.subr.mxu0 0.0
    %569 = vmatpush1.xpose.msra.mxu0 0.0
    %570 = vmatprep.subr.mxu0 0.0
    %571 = vmatpush1.xpose.msra.mxu0 0.0
    %572 = vmatprep.subr.mxu0 0.0
    %573 = vmatpush1.xpose.msra.mxu0 0.0
    %574 = vmatprep.subr.mxu0 0.0
    %575 = vmatpush1.xpose.msra.mxu0 0.0
    %576 = vmatprep.subr.mxu0 0.0
    %577 = vmatpush1.xpose.msra.mxu0 0.0
    %578 = vmatprep.subr.mxu0 0.0
    %579 = vmatpush1.xpose.msra.mxu0 0.0
    %580 = vmatprep.subr.mxu0 0.0
    %581 = vmatpush1.xpose.msra.mxu0 0.0
    %582 = vmatprep.subr.mxu0 0.0
    %583 = vmatpush1.xpose.msra.mxu0 0.0
    %584 = vmatprep.subr.mxu0 0.0
    %585 = vmatpush1.xpose.msra.mxu0 0.0
    %586 = vmatprep.subr.mxu0 0.0
    %587 = vmatpush1.xpose.msra.mxu0 %v554
    %588 = vmatprep.subr.mxu0 0.0
    %589 = vmatpush2.xpose.msra.mxu0 0.0
    %590 = vmatprep.subr.mxu0 0.0
    %591 = vmatpush2.xpose.msra.mxu0 0.0
    %592 = vmatprep.subr.mxu0 0.0
    %593 = vmatpush2.xpose.msra.mxu0 0.0
    %594 = vmatprep.subr.mxu0 0.0
    %595 = vmatpush2.xpose.msra.mxu0 0.0
    %596 = vmatprep.subr.mxu0 0.0
    %597 = vmatpush2.xpose.msra.mxu0 0.0
    %598 = vmatprep.subr.mxu0 0.0
    %599 = vmatpush2.xpose.msra.mxu0 0.0
    %600 = vmatprep.subr.mxu0 0.0
    %601 = vmatpush2.xpose.msra.mxu0 0.0
    %602 = vmatprep.subr.mxu0 0.0
    %603 = vmatpush2.xpose.msra.mxu0 0.0
    %604 = vmatprep.subr.mxu0 0.0
    %605 = vmatpush2.xpose.msra.mxu0 0.0
    %606 = vmatprep.subr.mxu0 0.0
    %607 = vmatpush2.xpose.msra.mxu0 0.0
    %608 = vmatprep.subr.mxu0 0.0
    %609 = vmatpush2.xpose.msra.mxu0 0.0
    %610 = vmatprep.subr.mxu0 0.0
    %611 = vmatpush2.xpose.msra.mxu0 0.0
    %612 = vmatprep.subr.mxu0 0.0
    %613 = vmatpush2.xpose.msra.mxu0 0.0
    %614 = vmatprep.subr.mxu0 0.0
    %615 = vmatpush2.xpose.msra.mxu0 0.0
    %616 = vmatprep.subr.mxu0 0.0
    %617 = vmatpush2.xpose.msra.mxu0 0.0
    %618 = vmatprep.subr.mxu0 0.0
    %619 = vmatpush2.xpose.msra.mxu0 0.0
    %620 = vmatprep.mubr.f32.mxu0 0.0
    %621 = vmatmul.mubr.f32.gmra.mxu0 %v551
    %v622 = vpop.f32.mrf.mxu0
    %v623 = vadd.f32 0.0, %v622
    %v624 = vpop.f32.mrf.mxu0
    %625 = vdwg.mxu0
    %v627 = vsel %vm128, %v264, 0
    %v630 = vsel %vm128, %v112, 0
    %632 = vmatprep.subr.mxu0 0.0
    %633 = vmatpush1.xpose.msra.mxu0 0.0
    %634 = vmatprep.subr.mxu0 0.0
    %635 = vmatpush1.xpose.msra.mxu0 0.0
    %636 = vmatprep.subr.mxu0 0.0
    %637 = vmatpush1.xpose.msra.mxu0 0.0
    %638 = vmatprep.subr.mxu0 0.0
    %639 = vmatpush1.xpose.msra.mxu0 0.0
    %640 = vmatprep.subr.mxu0 0.0
    %641 = vmatpush1.xpose.msra.mxu0 0.0
    %642 = vmatprep.subr.mxu0 0.0
    %643 = vmatpush1.xpose.msra.mxu0 0.0
    %644 = vmatprep.subr.mxu0 0.0
    %645 = vmatpush1.xpose.msra.mxu0 0.0
    %646 = vmatprep.subr.mxu0 0.0
    %647 = vmatpush1.xpose.msra.mxu0 0.0
    %648 = vmatprep.subr.mxu0 0.0
    %649 = vmatpush1.xpose.msra.mxu0 0.0
    %650 = vmatprep.subr.mxu0 0.0
    %651 = vmatpush1.xpose.msra.mxu0 0.0
    %652 = vmatprep.subr.mxu0 0.0
    %653 = vmatpush1.xpose.msra.mxu0 0.0
    %654 = vmatprep.subr.mxu0 0.0
    %655 = vmatpush1.xpose.msra.mxu0 0.0
    %656 = vmatprep.subr.mxu0 0.0
    %657 = vmatpush1.xpose.msra.mxu0 0.0
    %658 = vmatprep.subr.mxu0 0.0
    %659 = vmatpush1.xpose.msra.mxu0 0.0
    %660 = vmatprep.subr.mxu0 0.0
    %661 = vmatpush1.xpose.msra.mxu0 0.0
    %662 = vmatprep.subr.mxu0 0.0
    %663 = vmatpush1.xpose.msra.mxu0 %v630
    %664 = vmatprep.subr.mxu0 0.0
    %665 = vmatpush2.xpose.msra.mxu0 0.0
    %666 = vmatprep.subr.mxu0 0.0
    %667 = vmatpush2.xpose.msra.mxu0 0.0
    %668 = vmatprep.subr.mxu0 0.0
    %669 = vmatpush2.xpose.msra.mxu0 0.0
    %670 = vmatprep.subr.mxu0 0.0
    %671 = vmatpush2.xpose.msra.mxu0 0.0
    %672 = vmatprep.subr.mxu0 0.0
    %673 = vmatpush2.xpose.msra.mxu0 0.0
    %674 = vmatprep.subr.mxu0 0.0
    %675 = vmatpush2.xpose.msra.mxu0 0.0
    %676 = vmatprep.subr.mxu0 0.0
    %677 = vmatpush2.xpose.msra.mxu0 0.0
    %678 = vmatprep.subr.mxu0 0.0
    %679 = vmatpush2.xpose.msra.mxu0 0.0
    %680 = vmatprep.subr.mxu0 0.0
    %681 = vmatpush2.xpose.msra.mxu0 0.0
    %682 = vmatprep.subr.mxu0 0.0
    %683 = vmatpush2.xpose.msra.mxu0 0.0
    %684 = vmatprep.subr.mxu0 0.0
    %685 = vmatpush2.xpose.msra.mxu0 0.0
    %686 = vmatprep.subr.mxu0 0.0
    %687 = vmatpush2.xpose.msra.mxu0 0.0
    %688 = vmatprep.subr.mxu0 0.0
    %689 = vmatpush2.xpose.msra.mxu0 0.0
    %690 = vmatprep.subr.mxu0 0.0
    %691 = vmatpush2.xpose.msra.mxu0 0.0
    %692 = vmatprep.subr.mxu0 0.0
    %693 = vmatpush2.xpose.msra.mxu0 0.0
    %694 = vmatprep.subr.mxu0 0.0
    %695 = vmatpush2.xpose.msra.mxu0 0.0
    %696 = vmatprep.mubr.f32.mxu0 0.0
    %697 = vmatmul.mubr.f32.gmra.mxu0 %v627
    %v698 = vpop.f32.mrf.mxu0
    %v699 = vadd.f32 0.0, %v698
    %v700 = vpop.f32.mrf.mxu0
    %701 = vdwg.mxu0
    %v703 = vsel %vm128, %v269, 0
    %v706 = vsel %vm128, %v113, 0
    %708 = vmatprep.subr.mxu0 0.0
    %709 = vmatpush1.xpose.msra.mxu0 0.0
    %710 = vmatprep.subr.mxu0 0.0
    %711 = vmatpush1.xpose.msra.mxu0 0.0
    %712 = vmatprep.subr.mxu0 0.0
    %713 = vmatpush1.xpose.msra.mxu0 0.0
    %714 = vmatprep.subr.mxu0 0.0
    %715 = vmatpush1.xpose.msra.mxu0 0.0
    %716 = vmatprep.subr.mxu0 0.0
    %717 = vmatpush1.xpose.msra.mxu0 0.0
    %718 = vmatprep.subr.mxu0 0.0
    %719 = vmatpush1.xpose.msra.mxu0 0.0
    %720 = vmatprep.subr.mxu0 0.0
    %721 = vmatpush1.xpose.msra.mxu0 0.0
    %722 = vmatprep.subr.mxu0 0.0
    %723 = vmatpush1.xpose.msra.mxu0 0.0
    %724 = vmatprep.subr.mxu0 0.0
    %725 = vmatpush1.xpose.msra.mxu0 0.0
    %726 = vmatprep.subr.mxu0 0.0
    %727 = vmatpush1.xpose.msra.mxu0 0.0
    %728 = vmatprep.subr.mxu0 0.0
    %729 = vmatpush1.xpose.msra.mxu0 0.0
    %730 = vmatprep.subr.mxu0 0.0
    %731 = vmatpush1.xpose.msra.mxu0 0.0
    %732 = vmatprep.subr.mxu0 0.0
    %733 = vmatpush1.xpose.msra.mxu0 0.0
    %734 = vmatprep.subr.mxu0 0.0
    %735 = vmatpush1.xpose.msra.mxu0 0.0
    %736 = vmatprep.subr.mxu0 0.0
    %737 = vmatpush1.xpose.msra.mxu0 0.0
    %738 = vmatprep.subr.mxu0 0.0
    %739 = vmatpush1.xpose.msra.mxu0 %v706
    %740 = vmatprep.subr.mxu0 0.0
    %741 = vmatpush2.xpose.msra.mxu0 0.0
    %742 = vmatprep.subr.mxu0 0.0
    %743 = vmatpush2.xpose.msra.mxu0 0.0
    %744 = vmatprep.subr.mxu0 0.0
    %745 = vmatpush2.xpose.msra.mxu0 0.0
    %746 = vmatprep.subr.mxu0 0.0
    %747 = vmatpush2.xpose.msra.mxu0 0.0
    %748 = vmatprep.subr.mxu0 0.0
    %749 = vmatpush2.xpose.msra.mxu0 0.0
    %750 = vmatprep.subr.mxu0 0.0
    %751 = vmatpush2.xpose.msra.mxu0 0.0
    %752 = vmatprep.subr.mxu0 0.0
    %753 = vmatpush2.xpose.msra.mxu0 0.0
    %754 = vmatprep.subr.mxu0 0.0
    %755 = vmatpush2.xpose.msra.mxu0 0.0
    %756 = vmatprep.subr.mxu0 0.0
    %757 = vmatpush2.xpose.msra.mxu0 0.0
    %758 = vmatprep.subr.mxu0 0.0
    %759 = vmatpush2.xpose.msra.mxu0 0.0
    %760 = vmatprep.subr.mxu0 0.0
    %761 = vmatpush2.xpose.msra.mxu0 0.0
    %762 = vmatprep.subr.mxu0 0.0
    %763 = vmatpush2.xpose.msra.mxu0 0.0
    %764 = vmatprep.subr.mxu0 0.0
    %765 = vmatpush2.xpose.msra.mxu0 0.0
    %766 = vmatprep.subr.mxu0 0.0
    %767 = vmatpush2.xpose.msra.mxu0 0.0
    %768 = vmatprep.subr.mxu0 0.0
    %769 = vmatpush2.xpose.msra.mxu0 0.0
    %770 = vmatprep.subr.mxu0 0.0
    %771 = vmatpush2.xpose.msra.mxu0 0.0
    %772 = vmatprep.mubr.f32.mxu0 0.0
    %773 = vmatmul.mubr.f32.gmra.mxu0 %v703
    %v774 = vpop.f32.mrf.mxu0
    %v775 = vadd.f32 0.0, %v774
    %v776 = vpop.f32.mrf.mxu0
    %777 = vdwg.mxu0
    %v779 = vsel %vm128, %v274, 0
    %v782 = vsel %vm128, %v114, 0
    %784 = vmatprep.subr.mxu0 0.0
    %785 = vmatpush1.xpose.msra.mxu0 0.0
    %786 = vmatprep.subr.mxu0 0.0
    %787 = vmatpush1.xpose.msra.mxu0 0.0
    %788 = vmatprep.subr.mxu0 0.0
    %789 = vmatpush1.xpose.msra.mxu0 0.0
    %790 = vmatprep.subr.mxu0 0.0
    %791 = vmatpush1.xpose.msra.mxu0 0.0
    %792 = vmatprep.subr.mxu0 0.0
    %793 = vmatpush1.xpose.msra.mxu0 0.0
    %794 = vmatprep.subr.mxu0 0.0
    %795 = vmatpush1.xpose.msra.mxu0 0.0
    %796 = vmatprep.subr.mxu0 0.0
    %797 = vmatpush1.xpose.msra.mxu0 0.0
    %798 = vmatprep.subr.mxu0 0.0
    %799 = vmatpush1.xpose.msra.mxu0 0.0
    %800 = vmatprep.subr.mxu0 0.0
    %801 = vmatpush1.xpose.msra.mxu0 0.0
    %802 = vmatprep.subr.mxu0 0.0
    %803 = vmatpush1.xpose.msra.mxu0 0.0
    %804 = vmatprep.subr.mxu0 0.0
    %805 = vmatpush1.xpose.msra.mxu0 0.0
    %806 = vmatprep.subr.mxu0 0.0
    %807 = vmatpush1.xpose.msra.mxu0 0.0
    %808 = vmatprep.subr.mxu0 0.0
    %809 = vmatpush1.xpose.msra.mxu0 0.0
    %810 = vmatprep.subr.mxu0 0.0
    %811 = vmatpush1.xpose.msra.mxu0 0.0
    %812 = vmatprep.subr.mxu0 0.0
    %813 = vmatpush1.xpose.msra.mxu0 0.0
    %814 = vmatprep.subr.mxu0 0.0
    %815 = vmatpush1.xpose.msra.mxu0 %v782
    %816 = vmatprep.subr.mxu0 0.0
    %817 = vmatpush2.xpose.msra.mxu0 0.0
    %818 = vmatprep.subr.mxu0 0.0
    %819 = vmatpush2.xpose.msra.mxu0 0.0
    %820 = vmatprep.subr.mxu0 0.0
    %821 = vmatpush2.xpose.msra.mxu0 0.0
    %822 = vmatprep.subr.mxu0 0.0
    %823 = vmatpush2.xpose.msra.mxu0 0.0
    %824 = vmatprep.subr.mxu0 0.0
    %825 = vmatpush2.xpose.msra.mxu0 0.0
    %826 = vmatprep.subr.mxu0 0.0
    %827 = vmatpush2.xpose.msra.mxu0 0.0
    %828 = vmatprep.subr.mxu0 0.0
    %829 = vmatpush2.xpose.msra.mxu0 0.0
    %830 = vmatprep.subr.mxu0 0.0
    %831 = vmatpush2.xpose.msra.mxu0 0.0
    %832 = vmatprep.subr.mxu0 0.0
    %833 = vmatpush2.xpose.msra.mxu0 0.0
    %834 = vmatprep.subr.mxu0 0.0
    %835 = vmatpush2.xpose.msra.mxu0 0.0
    %836 = vmatprep.subr.mxu0 0.0
    %837 = vmatpush2.xpose.msra.mxu0 0.0
    %838 = vmatprep.subr.mxu0 0.0
    %839 = vmatpush2.xpose.msra.mxu0 0.0
    %840 = vmatprep.subr.mxu0 0.0
    %841 = vmatpush2.xpose.msra.mxu0 0.0
    %842 = vmatprep.subr.mxu0 0.0
    %843 = vmatpush2.xpose.msra.mxu0 0.0
    %844 = vmatprep.subr.mxu0 0.0
    %845 = vmatpush2.xpose.msra.mxu0 0.0
    %846 = vmatprep.subr.mxu0 0.0
    %847 = vmatpush2.xpose.msra.mxu0 0.0
    %848 = vmatprep.mubr.f32.mxu0 0.0
    %849 = vmatmul.mubr.f32.gmra.mxu0 %v779
    %v850 = vpop.f32.mrf.mxu0
    %v851 = vadd.f32 0.0, %v850
    %v852 = vpop.f32.mrf.mxu0
    %853 = vdwg.mxu0
    %v855 = vsel %vm128, %v279, 0
    %v858 = vsel %vm128, %v115, 0
    %860 = vmatprep.subr.mxu0 0.0
    %861 = vmatpush1.xpose.msra.mxu0 0.0
    %862 = vmatprep.subr.mxu0 0.0
    %863 = vmatpush1.xpose.msra.mxu0 0.0
    %864 = vmatprep.subr.mxu0 0.0
    %865 = vmatpush1.xpose.msra.mxu0 0.0
    %866 = vmatprep.subr.mxu0 0.0
    %867 = vmatpush1.xpose.msra.mxu0 0.0
    %868 = vmatprep.subr.mxu0 0.0
    %869 = vmatpush1.xpose.msra.mxu0 0.0
    %870 = vmatprep.subr.mxu0 0.0
    %871 = vmatpush1.xpose.msra.mxu0 0.0
    %872 = vmatprep.subr.mxu0 0.0
    %873 = vmatpush1.xpose.msra.mxu0 0.0
    %874 = vmatprep.subr.mxu0 0.0
    %875 = vmatpush1.xpose.msra.mxu0 0.0
    %876 = vmatprep.subr.mxu0 0.0
    %877 = vmatpush1.xpose.msra.mxu0 0.0
    %878 = vmatprep.subr.mxu0 0.0
    %879 = vmatpush1.xpose.msra.mxu0 0.0
    %880 = vmatprep.subr.mxu0 0.0
    %881 = vmatpush1.xpose.msra.mxu0 0.0
    %882 = vmatprep.subr.mxu0 0.0
    %883 = vmatpush1.xpose.msra.mxu0 0.0
    %884 = vmatprep.subr.mxu0 0.0
    %885 = vmatpush1.xpose.msra.mxu0 0.0
    %886 = vmatprep.subr.mxu0 0.0
    %887 = vmatpush1.xpose.msra.mxu0 0.0
    %888 = vmatprep.subr.mxu0 0.0
    %889 = vmatpush1.xpose.msra.mxu0 0.0
    %890 = vmatprep.subr.mxu0 0.0
    %891 = vmatpush1.xpose.msra.mxu0 %v858
    %892 = vmatprep.subr.mxu0 0.0
    %893 = vmatpush2.xpose.msra.mxu0 0.0
    %894 = vmatprep.subr.mxu0 0.0
    %895 = vmatpush2.xpose.msra.mxu0 0.0
    %896 = vmatprep.subr.mxu0 0.0
    %897 = vmatpush2.xpose.msra.mxu0 0.0
    %898 = vmatprep.subr.mxu0 0.0
    %899 = vmatpush2.xpose.msra.mxu0 0.0
    %900 = vmatprep.subr.mxu0 0.0
    %901 = vmatpush2.xpose.msra.mxu0 0.0
    %902 = vmatprep.subr.mxu0 0.0
    %903 = vmatpush2.xpose.msra.mxu0 0.0
    %904 = vmatprep.subr.mxu0 0.0
    %905 = vmatpush2.xpose.msra.mxu0 0.0
    %906 = vmatprep.subr.mxu0 0.0
    %907 = vmatpush2.xpose.msra.mxu0 0.0
    %908 = vmatprep.subr.mxu0 0.0
    %909 = vmatpush2.xpose.msra.mxu0 0.0
    %910 = vmatprep.subr.mxu0 0.0
    %911 = vmatpush2.xpose.msra.mxu0 0.0
    %912 = vmatprep.subr.mxu0 0.0
    %913 = vmatpush2.xpose.msra.mxu0 0.0
    %914 = vmatprep.subr.mxu0 0.0
    %915 = vmatpush2.xpose.msra.mxu0 0.0
    %916 = vmatprep.subr.mxu0 0.0
    %917 = vmatpush2.xpose.msra.mxu0 0.0
    %918 = vmatprep.subr.mxu0 0.0
    %919 = vmatpush2.xpose.msra.mxu0 0.0
    %920 = vmatprep.subr.mxu0 0.0
    %921 = vmatpush2.xpose.msra.mxu0 0.0
    %922 = vmatprep.subr.mxu0 0.0
    %923 = vmatpush2.xpose.msra.mxu0 0.0
    %924 = vmatprep.mubr.f32.mxu0 0.0
    %925 = vmatmul.mubr.f32.gmra.mxu0 %v855
    %v926 = vpop.f32.mrf.mxu0
    %v927 = vadd.f32 0.0, %v926
    %v928 = vpop.f32.mrf.mxu0
    %929 = vdwg.mxu0
    %v931 = vsel %vm128, %v284, 0
    %v934 = vsel %vm128, %v116, 0
    %936 = vmatprep.subr.mxu0 0.0
    %937 = vmatpush1.xpose.msra.mxu0 0.0
    %938 = vmatprep.subr.mxu0 0.0
    %939 = vmatpush1.xpose.msra.mxu0 0.0
    %940 = vmatprep.subr.mxu0 0.0
    %941 = vmatpush1.xpose.msra.mxu0 0.0
    %942 = vmatprep.subr.mxu0 0.0
    %943 = vmatpush1.xpose.msra.mxu0 0.0
    %944 = vmatprep.subr.mxu0 0.0
    %945 = vmatpush1.xpose.msra.mxu0 0.0
    %946 = vmatprep.subr.mxu0 0.0
    %947 = vmatpush1.xpose.msra.mxu0 0.0
    %948 = vmatprep.subr.mxu0 0.0
    %949 = vmatpush1.xpose.msra.mxu0 0.0
    %950 = vmatprep.subr.mxu0 0.0
    %951 = vmatpush1.xpose.msra.mxu0 0.0
    %952 = vmatprep.subr.mxu0 0.0
    %953 = vmatpush1.xpose.msra.mxu0 0.0
    %954 = vmatprep.subr.mxu0 0.0
    %955 = vmatpush1.xpose.msra.mxu0 0.0
    %956 = vmatprep.subr.mxu0 0.0
    %957 = vmatpush1.xpose.msra.mxu0 0.0
    %958 = vmatprep.subr.mxu0 0.0
    %959 = vmatpush1.xpose.msra.mxu0 0.0
    %960 = vmatprep.subr.mxu0 0.0
    %961 = vmatpush1.xpose.msra.mxu0 0.0
    %962 = vmatprep.subr.mxu0 0.0
    %963 = vmatpush1.xpose.msra.mxu0 0.0
    %964 = vmatprep.subr.mxu0 0.0
    %965 = vmatpush1.xpose.msra.mxu0 0.0
    %966 = vmatprep.subr.mxu0 0.0
    %967 = vmatpush1.xpose.msra.mxu0 %v934
    %968 = vmatprep.subr.mxu0 0.0
    %969 = vmatpush2.xpose.msra.mxu0 0.0
    %970 = vmatprep.subr.mxu0 0.0
    %971 = vmatpush2.xpose.msra.mxu0 0.0
    %972 = vmatprep.subr.mxu0 0.0
    %973 = vmatpush2.xpose.msra.mxu0 0.0
    %974 = vmatprep.subr.mxu0 0.0
    %975 = vmatpush2.xpose.msra.mxu0 0.0
    %976 = vmatprep.subr.mxu0 0.0
    %977 = vmatpush2.xpose.msra.mxu0 0.0
    %978 = vmatprep.subr.mxu0 0.0
    %979 = vmatpush2.xpose.msra.mxu0 0.0
    %980 = vmatprep.subr.mxu0 0.0
    %981 = vmatpush2.xpose.msra.mxu0 0.0
    %982 = vmatprep.subr.mxu0 0.0
    %983 = vmatpush2.xpose.msra.mxu0 0.0
    %984 = vmatprep.subr.mxu0 0.0
    %985 = vmatpush2.xpose.msra.mxu0 0.0
    %986 = vmatprep.subr.mxu0 0.0
    %987 = vmatpush2.xpose.msra.mxu0 0.0
    %988 = vmatprep.subr.mxu0 0.0
    %989 = vmatpush2.xpose.msra.mxu0 0.0
    %990 = vmatprep.subr.mxu0 0.0
    %991 = vmatpush2.xpose.msra.mxu0 0.0
    %992 = vmatprep.subr.mxu0 0.0
    %993 = vmatpush2.xpose.msra.mxu0 0.0
    %994 = vmatprep.subr.mxu0 0.0
    %995 = vmatpush2.xpose.msra.mxu0 0.0
    %996 = vmatprep.subr.mxu0 0.0
    %997 = vmatpush2.xpose.msra.mxu0 0.0
    %998 = vmatprep.subr.mxu0 0.0
    %999 = vmatpush2.xpose.msra.mxu0 0.0
    %1000 = vmatprep.mubr.f32.mxu0 0.0
    %1001 = vmatmul.mubr.f32.gmra.mxu0 %v931
    %v1002 = vpop.f32.mrf.mxu0
    %v1003 = vadd.f32 0.0, %v1002
    %v1004 = vpop.f32.mrf.mxu0
    %1005 = vdwg.mxu0
    %v1007 = vsel %vm128, %v289, 0
    %v1010 = vsel %vm128, %v117, 0
    %1012 = vmatprep.subr.mxu0 0.0
    %1013 = vmatpush1.xpose.msra.mxu0 0.0
    %1014 = vmatprep.subr.mxu0 0.0
    %1015 = vmatpush1.xpose.msra.mxu0 0.0
    %1016 = vmatprep.subr.mxu0 0.0
    %1017 = vmatpush1.xpose.msra.mxu0 0.0
    %1018 = vmatprep.subr.mxu0 0.0
    %1019 = vmatpush1.xpose.msra.mxu0 0.0
    %1020 = vmatprep.subr.mxu0 0.0
    %1021 = vmatpush1.xpose.msra.mxu0 0.0
    %1022 = vmatprep.subr.mxu0 0.0
    %1023 = vmatpush1.xpose.msra.mxu0 0.0
    %1024 = vmatprep.subr.mxu0 0.0
    %1025 = vmatpush1.xpose.msra.mxu0 0.0
    %1026 = vmatprep.subr.mxu0 0.0
    %1027 = vmatpush1.xpose.msra.mxu0 0.0
    %1028 = vmatprep.subr.mxu0 0.0
    %1029 = vmatpush1.xpose.msra.mxu0 0.0
    %1030 = vmatprep.subr.mxu0 0.0
    %1031 = vmatpush1.xpose.msra.mxu0 0.0
    %1032 = vmatprep.subr.mxu0 0.0
    %1033 = vmatpush1.xpose.msra.mxu0 0.0
    %1034 = vmatprep.subr.mxu0 0.0
    %1035 = vmatpush1.xpose.msra.mxu0 0.0
    %1036 = vmatprep.subr.mxu0 0.0
    %1037 = vmatpush1.xpose.msra.mxu0 0.0
    %1038 = vmatprep.subr.mxu0 0.0
    %1039 = vmatpush1.xpose.msra.mxu0 0.0
    %1040 = vmatprep.subr.mxu0 0.0
    %1041 = vmatpush1.xpose.msra.mxu0 0.0
    %1042 = vmatprep.subr.mxu0 0.0
    %1043 = vmatpush1.xpose.msra.mxu0 %v1010
    %1044 = vmatprep.subr.mxu0 0.0
    %1045 = vmatpush2.xpose.msra.mxu0 0.0
    %1046 = vmatprep.subr.mxu0 0.0
    %1047 = vmatpush2.xpose.msra.mxu0 0.0
    %1048 = vmatprep.subr.mxu0 0.0
    %1049 = vmatpush2.xpose.msra.mxu0 0.0
    %1050 = vmatprep.subr.mxu0 0.0
    %1051 = vmatpush2.xpose.msra.mxu0 0.0
    %1052 = vmatprep.subr.mxu0 0.0
    %1053 = vmatpush2.xpose.msra.mxu0 0.0
    %1054 = vmatprep.subr.mxu0 0.0
    %1055 = vmatpush2.xpose.msra.mxu0 0.0
    %1056 = vmatprep.subr.mxu0 0.0
    %1057 = vmatpush2.xpose.msra.mxu0 0.0
    %1058 = vmatprep.subr.mxu0 0.0
    %1059 = vmatpush2.xpose.msra.mxu0 0.0
    %1060 = vmatprep.subr.mxu0 0.0
    %1061 = vmatpush2.xpose.msra.mxu0 0.0
    %1062 = vmatprep.subr.mxu0 0.0
    %1063 = vmatpush2.xpose.msra.mxu0 0.0
    %1064 = vmatprep.subr.mxu0 0.0
    %1065 = vmatpush2.xpose.msra.mxu0 0.0
    %1066 = vmatprep.subr.mxu0 0.0
    %1067 = vmatpush2.xpose.msra.mxu0 0.0
    %1068 = vmatprep.subr.mxu0 0.0
    %1069 = vmatpush2.xpose.msra.mxu0 0.0
    %1070 = vmatprep.subr.mxu0 0.0
    %1071 = vmatpush2.xpose.msra.mxu0 0.0
    %1072 = vmatprep.subr.mxu0 0.0
    %1073 = vmatpush2.xpose.msra.mxu0 0.0
    %1074 = vmatprep.subr.mxu0 0.0
    %1075 = vmatpush2.xpose.msra.mxu0 0.0
    %1076 = vmatprep.mubr.f32.mxu0 0.0
    %1077 = vmatmul.mubr.f32.gmra.mxu0 %v1007
    %v1078 = vpop.f32.mrf.mxu0
    %v1079 = vadd.f32 0.0, %v1078
    %v1080 = vpop.f32.mrf.mxu0
    %1081 = vdwg.mxu0
    %v1083 = vsel %vm128, %v294, 0
    %v1086 = vsel %vm128, %v118, 0
    %1088 = vmatprep.subr.mxu0 0.0
    %1089 = vmatpush1.xpose.msra.mxu0 0.0
    %1090 = vmatprep.subr.mxu0 0.0
    %1091 = vmatpush1.xpose.msra.mxu0 0.0
    %1092 = vmatprep.subr.mxu0 0.0
    %1093 = vmatpush1.xpose.msra.mxu0 0.0
    %1094 = vmatprep.subr.mxu0 0.0
    %1095 = vmatpush1.xpose.msra.mxu0 0.0
    %1096 = vmatprep.subr.mxu0 0.0
    %1097 = vmatpush1.xpose.msra.mxu0 0.0
    %1098 = vmatprep.subr.mxu0 0.0
    %1099 = vmatpush1.xpose.msra.mxu0 0.0
    %1100 = vmatprep.subr.mxu0 0.0
    %1101 = vmatpush1.xpose.msra.mxu0 0.0
    %1102 = vmatprep.subr.mxu0 0.0
    %1103 = vmatpush1.xpose.msra.mxu0 0.0
    %1104 = vmatprep.subr.mxu0 0.0
    %1105 = vmatpush1.xpose.msra.mxu0 0.0
    %1106 = vmatprep.subr.mxu0 0.0
    %1107 = vmatpush1.xpose.msra.mxu0 0.0
    %1108 = vmatprep.subr.mxu0 0.0
    %1109 = vmatpush1.xpose.msra.mxu0 0.0
    %1110 = vmatprep.subr.mxu0 0.0
    %1111 = vmatpush1.xpose.msra.mxu0 0.0
    %1112 = vmatprep.subr.mxu0 0.0
    %1113 = vmatpush1.xpose.msra.mxu0 0.0
    %1114 = vmatprep.subr.mxu0 0.0
    %1115 = vmatpush1.xpose.msra.mxu0 0.0
    %1116 = vmatprep.subr.mxu0 0.0
    %1117 = vmatpush1.xpose.msra.mxu0 0.0
    %1118 = vmatprep.subr.mxu0 0.0
    %1119 = vmatpush1.xpose.msra.mxu0 %v1086
    %1120 = vmatprep.subr.mxu0 0.0
    %1121 = vmatpush2.xpose.msra.mxu0 0.0
    %1122 = vmatprep.subr.mxu0 0.0
    %1123 = vmatpush2.xpose.msra.mxu0 0.0
    %1124 = vmatprep.subr.mxu0 0.0
    %1125 = vmatpush2.xpose.msra.mxu0 0.0
    %1126 = vmatprep.subr.mxu0 0.0
    %1127 = vmatpush2.xpose.msra.mxu0 0.0
    %1128 = vmatprep.subr.mxu0 0.0
    %1129 = vmatpush2.xpose.msra.mxu0 0.0
    %1130 = vmatprep.subr.mxu0 0.0
    %1131 = vmatpush2.xpose.msra.mxu0 0.0
    %1132 = vmatprep.subr.mxu0 0.0
    %1133 = vmatpush2.xpose.msra.mxu0 0.0
    %1134 = vmatprep.subr.mxu0 0.0
    %1135 = vmatpush2.xpose.msra.mxu0 0.0
    %1136 = vmatprep.subr.mxu0 0.0
    %1137 = vmatpush2.xpose.msra.mxu0 0.0
    %1138 = vmatprep.subr.mxu0 0.0
    %1139 = vmatpush2.xpose.msra.mxu0 0.0
    %1140 = vmatprep.subr.mxu0 0.0
    %1141 = vmatpush2.xpose.msra.mxu0 0.0
    %1142 = vmatprep.subr.mxu0 0.0
    %1143 = vmatpush2.xpose.msra.mxu0 0.0
    %1144 = vmatprep.subr.mxu0 0.0
    %1145 = vmatpush2.xpose.msra.mxu0 0.0
    %1146 = vmatprep.subr.mxu0 0.0
    %1147 = vmatpush2.xpose.msra.mxu0 0.0
    %1148 = vmatprep.subr.mxu0 0.0
    %1149 = vmatpush2.xpose.msra.mxu0 0.0
    %1150 = vmatprep.subr.mxu0 0.0
    %1151 = vmatpush2.xpose.msra.mxu0 0.0
    %1152 = vmatprep.mubr.f32.mxu0 0.0
    %1153 = vmatmul.mubr.f32.gmra.mxu0 %v1083
    %v1154 = vpop.f32.mrf.mxu0
    %v1155 = vadd.f32 0.0, %v1154
    %v1156 = vpop.f32.mrf.mxu0
    %1157 = vdwg.mxu0
    %v1159 = vsel %vm128, %v299, 0
    %v1162 = vsel %vm128, %v119, 0
    %1164 = vmatprep.subr.mxu0 0.0
    %1165 = vmatpush1.xpose.msra.mxu0 0.0
    %1166 = vmatprep.subr.mxu0 0.0
    %1167 = vmatpush1.xpose.msra.mxu0 0.0
    %1168 = vmatprep.subr.mxu0 0.0
    %1169 = vmatpush1.xpose.msra.mxu0 0.0
    %1170 = vmatprep.subr.mxu0 0.0
    %1171 = vmatpush1.xpose.msra.mxu0 0.0
    %1172 = vmatprep.subr.mxu0 0.0
    %1173 = vmatpush1.xpose.msra.mxu0 0.0
    %1174 = vmatprep.subr.mxu0 0.0
    %1175 = vmatpush1.xpose.msra.mxu0 0.0
    %1176 = vmatprep.subr.mxu0 0.0
    %1177 = vmatpush1.xpose.msra.mxu0 0.0
    %1178 = vmatprep.subr.mxu0 0.0
    %1179 = vmatpush1.xpose.msra.mxu0 0.0
    %1180 = vmatprep.subr.mxu0 0.0
    %1181 = vmatpush1.xpose.msra.mxu0 0.0
    %1182 = vmatprep.subr.mxu0 0.0
    %1183 = vmatpush1.xpose.msra.mxu0 0.0
    %1184 = vmatprep.subr.mxu0 0.0
    %1185 = vmatpush1.xpose.msra.mxu0 0.0
    %1186 = vmatprep.subr.mxu0 0.0
    %1187 = vmatpush1.xpose.msra.mxu0 0.0
    %1188 = vmatprep.subr.mxu0 0.0
    %1189 = vmatpush1.xpose.msra.mxu0 0.0
    %1190 = vmatprep.subr.mxu0 0.0
    %1191 = vmatpush1.xpose.msra.mxu0 0.0
    %1192 = vmatprep.subr.mxu0 0.0
    %1193 = vmatpush1.xpose.msra.mxu0 0.0
    %1194 = vmatprep.subr.mxu0 0.0
    %1195 = vmatpush1.xpose.msra.mxu0 %v1162
    %1196 = vmatprep.subr.mxu0 0.0
    %1197 = vmatpush2.xpose.msra.mxu0 0.0
    %1198 = vmatprep.subr.mxu0 0.0
    %1199 = vmatpush2.xpose.msra.mxu0 0.0
    %1200 = vmatprep.subr.mxu0 0.0
    %1201 = vmatpush2.xpose.msra.mxu0 0.0
    %1202 = vmatprep.subr.mxu0 0.0
    %1203 = vmatpush2.xpose.msra.mxu0 0.0
    %1204 = vmatprep.subr.mxu0 0.0
    %1205 = vmatpush2.xpose.msra.mxu0 0.0
    %1206 = vmatprep.subr.mxu0 0.0
    %1207 = vmatpush2.xpose.msra.mxu0 0.0
    %1208 = vmatprep.subr.mxu0 0.0
    %1209 = vmatpush2.xpose.msra.mxu0 0.0
    %1210 = vmatprep.subr.mxu0 0.0
    %1211 = vmatpush2.xpose.msra.mxu0 0.0
    %1212 = vmatprep.subr.mxu0 0.0
    %1213 = vmatpush2.xpose.msra.mxu0 0.0
    %1214 = vmatprep.subr.mxu0 0.0
    %1215 = vmatpush2.xpose.msra.mxu0 0.0
    %1216 = vmatprep.subr.mxu0 0.0
    %1217 = vmatpush2.xpose.msra.mxu0 0.0
    %1218 = vmatprep.subr.mxu0 0.0
    %1219 = vmatpush2.xpose.msra.mxu0 0.0
    %1220 = vmatprep.subr.mxu0 0.0
    %1221 = vmatpush2.xpose.msra.mxu0 0.0
    %1222 = vmatprep.subr.mxu0 0.0
    %1223 = vmatpush2.xpose.msra.mxu0 0.0
    %1224 = vmatprep.subr.mxu0 0.0
    %1225 = vmatpush2.xpose.msra.mxu0 0.0
    %1226 = vmatprep.subr.mxu0 0.0
    %1227 = vmatpush2.xpose.msra.mxu0 0.0
    %1228 = vmatprep.mubr.f32.mxu0 0.0
    %1229 = vmatmul.mubr.f32.gmra.mxu0 %v1159
    %v1230 = vpop.f32.mrf.mxu0
    %v1231 = vadd.f32 0.0, %v1230
    %v1232 = vpop.f32.mrf.mxu0
    %1233 = vdwg.mxu0
    %v1235 = vsel %vm128, %v304, 0
    %v1238 = vsel %vm128, %v120, 0
    %1240 = vmatprep.subr.mxu0 0.0
    %1241 = vmatpush1.xpose.msra.mxu0 0.0
    %1242 = vmatprep.subr.mxu0 0.0
    %1243 = vmatpush1.xpose.msra.mxu0 0.0
    %1244 = vmatprep.subr.mxu0 0.0
    %1245 = vmatpush1.xpose.msra.mxu0 0.0
    %1246 = vmatprep.subr.mxu0 0.0
    %1247 = vmatpush1.xpose.msra.mxu0 0.0
    %1248 = vmatprep.subr.mxu0 0.0
    %1249 = vmatpush1.xpose.msra.mxu0 0.0
    %1250 = vmatprep.subr.mxu0 0.0
    %1251 = vmatpush1.xpose.msra.mxu0 0.0
    %1252 = vmatprep.subr.mxu0 0.0
    %1253 = vmatpush1.xpose.msra.mxu0 0.0
    %1254 = vmatprep.subr.mxu0 0.0
    %1255 = vmatpush1.xpose.msra.mxu0 0.0
    %1256 = vmatprep.subr.mxu0 0.0
    %1257 = vmatpush1.xpose.msra.mxu0 0.0
    %1258 = vmatprep.subr.mxu0 0.0
    %1259 = vmatpush1.xpose.msra.mxu0 0.0
    %1260 = vmatprep.subr.mxu0 0.0
    %1261 = vmatpush1.xpose.msra.mxu0 0.0
    %1262 = vmatprep.subr.mxu0 0.0
    %1263 = vmatpush1.xpose.msra.mxu0 0.0
    %1264 = vmatprep.subr.mxu0 0.0
    %1265 = vmatpush1.xpose.msra.mxu0 0.0
    %1266 = vmatprep.subr.mxu0 0.0
    %1267 = vmatpush1.xpose.msra.mxu0 0.0
    %1268 = vmatprep.subr.mxu0 0.0
    %1269 = vmatpush1.xpose.msra.mxu0 0.0
    %1270 = vmatprep.subr.mxu0 0.0
    %1271 = vmatpush1.xpose.msra.mxu0 %v1238
    %1272 = vmatprep.subr.mxu0 0.0
    %1273 = vmatpush2.xpose.msra.mxu0 0.0
    %1274 = vmatprep.subr.mxu0 0.0
    %1275 = vmatpush2.xpose.msra.mxu0 0.0
    %1276 = vmatprep.subr.mxu0 0.0
    %1277 = vmatpush2.xpose.msra.mxu0 0.0
    %1278 = vmatprep.subr.mxu0 0.0
    %1279 = vmatpush2.xpose.msra.mxu0 0.0
    %1280 = vmatprep.subr.mxu0 0.0
    %1281 = vmatpush2.xpose.msra.mxu0 0.0
    %1282 = vmatprep.subr.mxu0 0.0
    %1283 = vmatpush2.xpose.msra.mxu0 0.0
    %1284 = vmatprep.subr.mxu0 0.0
    %1285 = vmatpush2.xpose.msra.mxu0 0.0
    %1286 = vmatprep.subr.mxu0 0.0
    %1287 = vmatpush2.xpose.msra.mxu0 0.0
    %1288 = vmatprep.subr.mxu0 0.0
    %1289 = vmatpush2.xpose.msra.mxu0 0.0
    %1290 = vmatprep.subr.mxu0 0.0
    %1291 = vmatpush2.xpose.msra.mxu0 0.0
    %1292 = vmatprep.subr.mxu0 0.0
    %1293 = vmatpush2.xpose.msra.mxu0 0.0
    %1294 = vmatprep.subr.mxu0 0.0
    %1295 = vmatpush2.xpose.msra.mxu0 0.0
    %1296 = vmatprep.subr.mxu0 0.0
    %1297 = vmatpush2.xpose.msra.mxu0 0.0
    %1298 = vmatprep.subr.mxu0 0.0
    %1299 = vmatpush2.xpose.msra.mxu0 0.0
    %1300 = vmatprep.subr.mxu0 0.0
    %1301 = vmatpush2.xpose.msra.mxu0 0.0
    %1302 = vmatprep.subr.mxu0 0.0
    %1303 = vmatpush2.xpose.msra.mxu0 0.0
    %1304 = vmatprep.mubr.f32.mxu0 0.0
    %1305 = vmatmul.mubr.f32.gmra.mxu0 %v1235
    %v1306 = vpop.f32.mrf.mxu0
    %v1307 = vadd.f32 0.0, %v1306
    %v1308 = vpop.f32.mrf.mxu0
    %1309 = vdwg.mxu0
    %v1311 = vsel %vm128, %v309, 0
    %v1314 = vsel %vm128, %v121, 0
    %1316 = vmatprep.subr.mxu0 0.0
    %1317 = vmatpush1.xpose.msra.mxu0 0.0
    %1318 = vmatprep.subr.mxu0 0.0
    %1319 = vmatpush1.xpose.msra.mxu0 0.0
    %1320 = vmatprep.subr.mxu0 0.0
    %1321 = vmatpush1.xpose.msra.mxu0 0.0
    %1322 = vmatprep.subr.mxu0 0.0
    %1323 = vmatpush1.xpose.msra.mxu0 0.0
    %1324 = vmatprep.subr.mxu0 0.0
    %1325 = vmatpush1.xpose.msra.mxu0 0.0
    %1326 = vmatprep.subr.mxu0 0.0
    %1327 = vmatpush1.xpose.msra.mxu0 0.0
    %1328 = vmatprep.subr.mxu0 0.0
    %1329 = vmatpush1.xpose.msra.mxu0 0.0
    %1330 = vmatprep.subr.mxu0 0.0
    %1331 = vmatpush1.xpose.msra.mxu0 0.0
    %1332 = vmatprep.subr.mxu0 0.0
    %1333 = vmatpush1.xpose.msra.mxu0 0.0
    %1334 = vmatprep.subr.mxu0 0.0
    %1335 = vmatpush1.xpose.msra.mxu0 0.0
    %1336 = vmatprep.subr.mxu0 0.0
    %1337 = vmatpush1.xpose.msra.mxu0 0.0
    %1338 = vmatprep.subr.mxu0 0.0
    %1339 = vmatpush1.xpose.msra.mxu0 0.0
    %1340 = vmatprep.subr.mxu0 0.0
    %1341 = vmatpush1.xpose.msra.mxu0 0.0
    %1342 = vmatprep.subr.mxu0 0.0
    %1343 = vmatpush1.xpose.msra.mxu0 0.0
    %1344 = vmatprep.subr.mxu0 0.0
    %1345 = vmatpush1.xpose.msra.mxu0 0.0
    %1346 = vmatprep.subr.mxu0 0.0
    %1347 = vmatpush1.xpose.msra.mxu0 %v1314
    %1348 = vmatprep.subr.mxu0 0.0
    %1349 = vmatpush2.xpose.msra.mxu0 0.0
    %1350 = vmatprep.subr.mxu0 0.0
    %1351 = vmatpush2.xpose.msra.mxu0 0.0
    %1352 = vmatprep.subr.mxu0 0.0
    %1353 = vmatpush2.xpose.msra.mxu0 0.0
    %1354 = vmatprep.subr.mxu0 0.0
    %1355 = vmatpush2.xpose.msra.mxu0 0.0
    %1356 = vmatprep.subr.mxu0 0.0
    %1357 = vmatpush2.xpose.msra.mxu0 0.0
    %1358 = vmatprep.subr.mxu0 0.0
    %1359 = vmatpush2.xpose.msra.mxu0 0.0
    %1360 = vmatprep.subr.mxu0 0.0
    %1361 = vmatpush2.xpose.msra.mxu0 0.0
    %1362 = vmatprep.subr.mxu0 0.0
    %1363 = vmatpush2.xpose.msra.mxu0 0.0
    %1364 = vmatprep.subr.mxu0 0.0
    %1365 = vmatpush2.xpose.msra.mxu0 0.0
    %1366 = vmatprep.subr.mxu0 0.0
    %1367 = vmatpush2.xpose.msra.mxu0 0.0
    %1368 = vmatprep.subr.mxu0 0.0
    %1369 = vmatpush2.xpose.msra.mxu0 0.0
    %1370 = vmatprep.subr.mxu0 0.0
    %1371 = vmatpush2.xpose.msra.mxu0 0.0
    %1372 = vmatprep.subr.mxu0 0.0
    %1373 = vmatpush2.xpose.msra.mxu0 0.0
    %1374 = vmatprep.subr.mxu0 0.0
    %1375 = vmatpush2.xpose.msra.mxu0 0.0
    %1376 = vmatprep.subr.mxu0 0.0
    %1377 = vmatpush2.xpose.msra.mxu0 0.0
    %1378 = vmatprep.subr.mxu0 0.0
    %1379 = vmatpush2.xpose.msra.mxu0 0.0
    %1380 = vmatprep.mubr.f32.mxu0 0.0
    %1381 = vmatmul.mubr.f32.gmra.mxu0 %v1311
    %v1382 = vpop.f32.mrf.mxu0
    %v1383 = vadd.f32 0.0, %v1382
    %v1384 = vpop.f32.mrf.mxu0
    %1385 = vdwg.mxu0
    %v1387 = vsel %vm128, %v314, 0
    %v1390 = vsel %vm128, %v122, 0
    %1392 = vmatprep.subr.mxu0 0.0
    %1393 = vmatpush1.xpose.msra.mxu0 0.0
    %1394 = vmatprep.subr.mxu0 0.0
    %1395 = vmatpush1.xpose.msra.mxu0 0.0
    %1396 = vmatprep.subr.mxu0 0.0
    %1397 = vmatpush1.xpose.msra.mxu0 0.0
    %1398 = vmatprep.subr.mxu0 0.0
    %1399 = vmatpush1.xpose.msra.mxu0 0.0
    %1400 = vmatprep.subr.mxu0 0.0
    %1401 = vmatpush1.xpose.msra.mxu0 0.0
    %1402 = vmatprep.subr.mxu0 0.0
    %1403 = vmatpush1.xpose.msra.mxu0 0.0
    %1404 = vmatprep.subr.mxu0 0.0
    %1405 = vmatpush1.xpose.msra.mxu0 0.0
    %1406 = vmatprep.subr.mxu0 0.0
    %1407 = vmatpush1.xpose.msra.mxu0 0.0
    %1408 = vmatprep.subr.mxu0 0.0
    %1409 = vmatpush1.xpose.msra.mxu0 0.0
    %1410 = vmatprep.subr.mxu0 0.0
    %1411 = vmatpush1.xpose.msra.mxu0 0.0
    %1412 = vmatprep.subr.mxu0 0.0
    %1413 = vmatpush1.xpose.msra.mxu0 0.0
    %1414 = vmatprep.subr.mxu0 0.0
    %1415 = vmatpush1.xpose.msra.mxu0 0.0
    %1416 = vmatprep.subr.mxu0 0.0
    %1417 = vmatpush1.xpose.msra.mxu0 0.0
    %1418 = vmatprep.subr.mxu0 0.0
    %1419 = vmatpush1.xpose.msra.mxu0 0.0
    %1420 = vmatprep.subr.mxu0 0.0
    %1421 = vmatpush1.xpose.msra.mxu0 0.0
    %1422 = vmatprep.subr.mxu0 0.0
    %1423 = vmatpush1.xpose.msra.mxu0 %v1390
    %1424 = vmatprep.subr.mxu0 0.0
    %1425 = vmatpush2.xpose.msra.mxu0 0.0
    %1426 = vmatprep.subr.mxu0 0.0
    %1427 = vmatpush2.xpose.msra.mxu0 0.0
    %1428 = vmatprep.subr.mxu0 0.0
    %1429 = vmatpush2.xpose.msra.mxu0 0.0
    %1430 = vmatprep.subr.mxu0 0.0
    %1431 = vmatpush2.xpose.msra.mxu0 0.0
    %1432 = vmatprep.subr.mxu0 0.0
    %1433 = vmatpush2.xpose.msra.mxu0 0.0
    %1434 = vmatprep.subr.mxu0 0.0
    %1435 = vmatpush2.xpose.msra.mxu0 0.0
    %1436 = vmatprep.subr.mxu0 0.0
    %1437 = vmatpush2.xpose.msra.mxu0 0.0
    %1438 = vmatprep.subr.mxu0 0.0
    %1439 = vmatpush2.xpose.msra.mxu0 0.0
    %1440 = vmatprep.subr.mxu0 0.0
    %1441 = vmatpush2.xpose.msra.mxu0 0.0
    %1442 = vmatprep.subr.mxu0 0.0
    %1443 = vmatpush2.xpose.msra.mxu0 0.0
    %1444 = vmatprep.subr.mxu0 0.0
    %1445 = vmatpush2.xpose.msra.mxu0 0.0
    %1446 = vmatprep.subr.mxu0 0.0
    %1447 = vmatpush2.xpose.msra.mxu0 0.0
    %1448 = vmatprep.subr.mxu0 0.0
    %1449 = vmatpush2.xpose.msra.mxu0 0.0
    %1450 = vmatprep.subr.mxu0 0.0
    %1451 = vmatpush2.xpose.msra.mxu0 0.0
    %1452 = vmatprep.subr.mxu0 0.0
    %1453 = vmatpush2.xpose.msra.mxu0 0.0
    %1454 = vmatprep.subr.mxu0 0.0
    %1455 = vmatpush2.xpose.msra.mxu0 0.0
    %1456 = vmatprep.mubr.f32.mxu0 0.0
    %1457 = vmatmul.mubr.f32.gmra.mxu0 %v1387
    %v1458 = vpop.f32.mrf.mxu0
    %v1459 = vadd.f32 0.0, %v1458
    %v1460 = vpop.f32.mrf.mxu0
    %1461 = vdwg.mxu0
    %v1463 = vsel %vm128, %v319, 0
    %v1466 = vsel %vm128, %v123, 0
    %1468 = vmatprep.subr.mxu0 0.0
    %1469 = vmatpush1.xpose.msra.mxu0 0.0
    %1470 = vmatprep.subr.mxu0 0.0
    %1471 = vmatpush1.xpose.msra.mxu0 0.0
    %1472 = vmatprep.subr.mxu0 0.0
    %1473 = vmatpush1.xpose.msra.mxu0 0.0
    %1474 = vmatprep.subr.mxu0 0.0
    %1475 = vmatpush1.xpose.msra.mxu0 0.0
    %1476 = vmatprep.subr.mxu0 0.0
    %1477 = vmatpush1.xpose.msra.mxu0 0.0
    %1478 = vmatprep.subr.mxu0 0.0
    %1479 = vmatpush1.xpose.msra.mxu0 0.0
    %1480 = vmatprep.subr.mxu0 0.0
    %1481 = vmatpush1.xpose.msra.mxu0 0.0
    %1482 = vmatprep.subr.mxu0 0.0
    %1483 = vmatpush1.xpose.msra.mxu0 0.0
    %1484 = vmatprep.subr.mxu0 0.0
    %1485 = vmatpush1.xpose.msra.mxu0 0.0
    %1486 = vmatprep.subr.mxu0 0.0
    %1487 = vmatpush1.xpose.msra.mxu0 0.0
    %1488 = vmatprep.subr.mxu0 0.0
    %1489 = vmatpush1.xpose.msra.mxu0 0.0
    %1490 = vmatprep.subr.mxu0 0.0
    %1491 = vmatpush1.xpose.msra.mxu0 0.0
    %1492 = vmatprep.subr.mxu0 0.0
    %1493 = vmatpush1.xpose.msra.mxu0 0.0
    %1494 = vmatprep.subr.mxu0 0.0
    %1495 = vmatpush1.xpose.msra.mxu0 0.0
    %1496 = vmatprep.subr.mxu0 0.0
    %1497 = vmatpush1.xpose.msra.mxu0 0.0
    %1498 = vmatprep.subr.mxu0 0.0
    %1499 = vmatpush1.xpose.msra.mxu0 %v1466
    %1500 = vmatprep.subr.mxu0 0.0
    %1501 = vmatpush2.xpose.msra.mxu0 0.0
    %1502 = vmatprep.subr.mxu0 0.0
    %1503 = vmatpush2.xpose.msra.mxu0 0.0
    %1504 = vmatprep.subr.mxu0 0.0
    %1505 = vmatpush2.xpose.msra.mxu0 0.0
    %1506 = vmatprep.subr.mxu0 0.0
    %1507 = vmatpush2.xpose.msra.mxu0 0.0
    %1508 = vmatprep.subr.mxu0 0.0
    %1509 = vmatpush2.xpose.msra.mxu0 0.0
    %1510 = vmatprep.subr.mxu0 0.0
    %1511 = vmatpush2.xpose.msra.mxu0 0.0
    %1512 = vmatprep.subr.mxu0 0.0
    %1513 = vmatpush2.xpose.msra.mxu0 0.0
    %1514 = vmatprep.subr.mxu0 0.0
    %1515 = vmatpush2.xpose.msra.mxu0 0.0
    %1516 = vmatprep.subr.mxu0 0.0
    %1517 = vmatpush2.xpose.msra.mxu0 0.0
    %1518 = vmatprep.subr.mxu0 0.0
    %1519 = vmatpush2.xpose.msra.mxu0 0.0
    %1520 = vmatprep.subr.mxu0 0.0
    %1521 = vmatpush2.xpose.msra.mxu0 0.0
    %1522 = vmatprep.subr.mxu0 0.0
    %1523 = vmatpush2.xpose.msra.mxu0 0.0
    %1524 = vmatprep.subr.mxu0 0.0
    %1525 = vmatpush2.xpose.msra.mxu0 0.0
    %1526 = vmatprep.subr.mxu0 0.0
    %1527 = vmatpush2.xpose.msra.mxu0 0.0
    %1528 = vmatprep.subr.mxu0 0.0
    %1529 = vmatpush2.xpose.msra.mxu0 0.0
    %1530 = vmatprep.subr.mxu0 0.0
    %1531 = vmatpush2.xpose.msra.mxu0 0.0
    %1532 = vmatprep.mubr.f32.mxu0 0.0
    %1533 = vmatmul.mubr.f32.gmra.mxu0 %v1463
    %v1534 = vpop.f32.mrf.mxu0
    %v1535 = vadd.f32 0.0, %v1534
    %v1536 = vpop.f32.mrf.mxu0
    %1537 = vdwg.mxu0
    %v1538 = vtanh.pop %v395
    %v1539 = vtanh.pop %v471
    %v1540 = vtanh.pop %v547
    %v1541 = vtanh.pop %v623
    %v1542 = vtanh.pop %v699
    %v1543 = vtanh.pop %v775
    %v1544 = vtanh.pop %v851
    %v1545 = vtanh.pop %v927
    %v1546 = vtanh.pop %v1003
    %v1547 = vtanh.pop %v1079
    %v1548 = vtanh.pop %v1155
    %v1549 = vtanh.pop %v1231
    %v1550 = vtanh.pop %v1307
    %v1551 = vtanh.pop %v1383
    %v1552 = vtanh.pop %v1459
    %v1553 = vtanh.pop %v1535
    %vm1554 = vcmask 64512
    %v1555 = vsel %vm1554, %v1538, 0.0
    %1556 = vadd.xlane.f32.xlu0 %v1555
    %v1557 = vpop.xlane.xlu0 %1556
    %v1558 = vsel %vm1554, %v1539, 0.0
    %1559 = vadd.xlane.f32.xlu0 %v1558
    %v1560 = vpop.xlane.xlu0 %1559
    %v1561 = vsel %vm1554, %v1540, 0.0
    %1562 = vadd.xlane.f32.xlu0 %v1561
    %v1563 = vpop.xlane.xlu0 %1562
    %v1564 = vsel %vm1554, %v1541, 0.0
    %1565 = vadd.xlane.f32.xlu0 %v1564
    %v1566 = vpop.xlane.xlu0 %1565
    %v1567 = vsel %vm1554, %v1542, 0.0
    %1568 = vadd.xlane.f32.xlu0 %v1567
    %v1569 = vpop.xlane.xlu0 %1568
    %v1570 = vsel %vm1554, %v1543, 0.0
    %1571 = vadd.xlane.f32.xlu0 %v1570
    %v1572 = vpop.xlane.xlu0 %1571
    %v1573 = vsel %vm1554, %v1544, 0.0
    %1574 = vadd.xlane.f32.xlu0 %v1573
    %v1575 = vpop.xlane.xlu0 %1574
    %v1576 = vsel %vm1554, %v1545, 0.0
    %1577 = vadd.xlane.f32.xlu0 %v1576
    %v1578 = vpop.xlane.xlu0 %1577
    %v1579 = vsel %vm1554, %v1546, 0.0
    %1580 = vadd.xlane.f32.xlu0 %v1579
    %v1581 = vpop.xlane.xlu0 %1580
    %v1582 = vsel %vm1554, %v1547, 0.0
    %1583 = vadd.xlane.f32.xlu0 %v1582
    %v1584 = vpop.xlane.xlu0 %1583
    %v1585 = vsel %vm1554, %v1548, 0.0
    %1586 = vadd.xlane.f32.xlu0 %v1585
    %v1587 = vpop.xlane.xlu0 %1586
    %v1588 = vsel %vm1554, %v1549, 0.0
    %1589 = vadd.xlane.f32.xlu0 %v1588
    %v1590 = vpop.xlane.xlu0 %1589
    %v1591 = vsel %vm1554, %v1550, 0.0
    %1592 = vadd.xlane.f32.xlu0 %v1591
    %v1593 = vpop.xlane.xlu0 %1592
    %v1594 = vsel %vm1554, %v1551, 0.0
    %1595 = vadd.xlane.f32.xlu0 %v1594
    %v1596 = vpop.xlane.xlu0 %1595
    %v1597 = vsel %vm1554, %v1552, 0.0
    %1598 = vadd.xlane.f32.xlu0 %v1597
    %v1599 = vpop.xlane.xlu0 %1598
    %v1600 = vsel %vm1554, %v1553, 0.0
    %1601 = vadd.xlane.f32.xlu0 %v1600
    %v1602 = vpop.xlane.xlu0 %1601
    %v1619 = vlaneseq
    %v1620 = vand.u32 %v1619, 127
    %v1621 = vlaneseq
    %v1622 = vshrl.u32 %v1621, 7
    %v1623 = vsub.s32 %v1620, %v1622
    %v1624 = vrot.slane %v1557, %v1623
    %v1625 = vlaneseq
    %v1626 = vshrl.u32 %v1625, 7
    %v1627 = vsub.s32 %v1620, %v1626
    %v1628 = vrot.slane %v1560, %v1627
    %v1629 = vlaneseq
    %v1630 = vshrl.u32 %v1629, 7
    %v1631 = vsub.s32 %v1620, %v1630
    %v1632 = vrot.slane %v1563, %v1631
    %v1633 = vlaneseq
    %v1634 = vshrl.u32 %v1633, 7
    %v1635 = vsub.s32 %v1620, %v1634
    %v1636 = vrot.slane %v1566, %v1635
    %v1637 = vlaneseq
    %v1638 = vshrl.u32 %v1637, 7
    %v1639 = vsub.s32 %v1620, %v1638
    %v1640 = vrot.slane %v1569, %v1639
    %v1641 = vlaneseq
    %v1642 = vshrl.u32 %v1641, 7
    %v1643 = vsub.s32 %v1620, %v1642
    %v1644 = vrot.slane %v1572, %v1643
    %v1645 = vlaneseq
    %v1646 = vshrl.u32 %v1645, 7
    %v1647 = vsub.s32 %v1620, %v1646
    %v1648 = vrot.slane %v1575, %v1647
    %v1649 = vlaneseq
    %v1650 = vshrl.u32 %v1649, 7
    %v1651 = vsub.s32 %v1620, %v1650
    %v1652 = vrot.slane %v1578, %v1651
    %v1653 = vlaneseq
    %v1654 = vshrl.u32 %v1653, 7
    %v1655 = vsub.s32 %v1620, %v1654
    %v1656 = vrot.slane %v1581, %v1655
    %v1657 = vlaneseq
    %v1658 = vshrl.u32 %v1657, 7
    %v1659 = vsub.s32 %v1620, %v1658
    %v1660 = vrot.slane %v1584, %v1659
    %v1661 = vlaneseq
    %v1662 = vshrl.u32 %v1661, 7
    %v1663 = vsub.s32 %v1620, %v1662
    %v1664 = vrot.slane %v1587, %v1663
    %v1665 = vlaneseq
    %v1666 = vshrl.u32 %v1665, 7
    %v1667 = vsub.s32 %v1620, %v1666
    %v1668 = vrot.slane %v1590, %v1667
    %v1669 = vlaneseq
    %v1670 = vshrl.u32 %v1669, 7
    %v1671 = vsub.s32 %v1620, %v1670
    %v1672 = vrot.slane %v1593, %v1671
    %v1673 = vlaneseq
    %v1674 = vshrl.u32 %v1673, 7
    %v1675 = vsub.s32 %v1620, %v1674
    %v1676 = vrot.slane %v1596, %v1675
    %v1677 = vlaneseq
    %v1678 = vshrl.u32 %v1677, 7
    %v1679 = vsub.s32 %v1620, %v1678
    %v1680 = vrot.slane %v1599, %v1679
    %v1681 = vlaneseq
    %v1682 = vshrl.u32 %v1681, 7
    %v1683 = vsub.s32 %v1620, %v1682
    %v1684 = vrot.slane %v1602, %v1683
    %vm1685 = vcmask 1041409
    %v1686 = vsel %vm1685, %v1628, %v1624
    %vm1687 = vcmask 1042434
    %v1688 = vsel %vm1687, %v1632, %v1686
    %vm1689 = vcmask 1043459
    %v1690 = vsel %vm1689, %v1636, %v1688
    %vm1691 = vcmask 1044484
    %v1692 = vsel %vm1691, %v1640, %v1690
    %vm1693 = vcmask 1045509
    %v1694 = vsel %vm1693, %v1644, %v1692
    %vm1695 = vcmask 1046534
    %v1696 = vsel %vm1695, %v1648, %v1694
    %vm1697 = vcmask 1047559
    %v1698 = vsel %vm1697, %v1652, %v1696
    %v1699 = vsel %vm1685, %v1660, %v1656
    %v1700 = vsel %vm1687, %v1664, %v1699
    %v1701 = vsel %vm1689, %v1668, %v1700
    %v1702 = vsel %vm1691, %v1672, %v1701
    %v1703 = vsel %vm1693, %v1676, %v1702
    %v1704 = vsel %vm1695, %v1680, %v1703
    %v1705 = vsel %vm1697, %v1684, %v1704
    %v1708 = vsel %vm1554, %v1698, -inf
    %1709 = vmax.xlane.f32.xlu0 %v1708
    %v1710 = vpop.xlane.xlu0 %1709
    %v1711 = vsel %vm1554, %v1705, -inf
    %1712 = vmax.xlane.f32.xlu0 %v1711
    %v1713 = vpop.xlane.xlu0 %1712
    %v1716 = vlaneseq
    %v1717 = vshrl.u32 %v1716, 7
    %v1718 = vsub.s32 0, %v1717
    %v1719 = vrot.slane %v1710, %v1718
    %v1720 = vlaneseq
    %v1721 = vshrl.u32 %v1720, 7
    %v1722 = vsub.s32 1, %v1721
    %v1723 = vrot.slane %v1710, %v1722
    %v1724 = vlaneseq
    %v1725 = vshrl.u32 %v1724, 7
    %v1726 = vsub.s32 2, %v1725
    %v1727 = vrot.slane %v1710, %v1726
    %v1728 = vlaneseq
    %v1729 = vshrl.u32 %v1728, 7
    %v1730 = vsub.s32 3, %v1729
    %v1731 = vrot.slane %v1710, %v1730
    %v1732 = vlaneseq
    %v1733 = vshrl.u32 %v1732, 7
    %v1734 = vsub.s32 4, %v1733
    %v1735 = vrot.slane %v1710, %v1734
    %v1736 = vlaneseq
    %v1737 = vshrl.u32 %v1736, 7
    %v1738 = vsub.s32 5, %v1737
    %v1739 = vrot.slane %v1710, %v1738
    %v1740 = vlaneseq
    %v1741 = vshrl.u32 %v1740, 7
    %v1742 = vsub.s32 6, %v1741
    %v1743 = vrot.slane %v1710, %v1742
    %v1744 = vlaneseq
    %v1745 = vshrl.u32 %v1744, 7
    %v1746 = vsub.s32 7, %v1745
    %v1747 = vrot.slane %v1710, %v1746
    %v1748 = vlaneseq
    %v1749 = vshrl.u32 %v1748, 7
    %v1750 = vsub.s32 0, %v1749
    %v1751 = vrot.slane %v1713, %v1750
    %v1752 = vlaneseq
    %v1753 = vshrl.u32 %v1752, 7
    %v1754 = vsub.s32 1, %v1753
    %v1755 = vrot.slane %v1713, %v1754
    %v1756 = vlaneseq
    %v1757 = vshrl.u32 %v1756, 7
    %v1758 = vsub.s32 2, %v1757
    %v1759 = vrot.slane %v1713, %v1758
    %v1760 = vlaneseq
    %v1761 = vshrl.u32 %v1760, 7
    %v1762 = vsub.s32 3, %v1761
    %v1763 = vrot.slane %v1713, %v1762
    %v1764 = vlaneseq
    %v1765 = vshrl.u32 %v1764, 7
    %v1766 = vsub.s32 4, %v1765
    %v1767 = vrot.slane %v1713, %v1766
    %v1768 = vlaneseq
    %v1769 = vshrl.u32 %v1768, 7
    %v1770 = vsub.s32 5, %v1769
    %v1771 = vrot.slane %v1713, %v1770
    %v1772 = vlaneseq
    %v1773 = vshrl.u32 %v1772, 7
    %v1774 = vsub.s32 6, %v1773
    %v1775 = vrot.slane %v1713, %v1774
    %v1776 = vlaneseq
    %v1777 = vshrl.u32 %v1776, 7
    %v1778 = vsub.s32 7, %v1777
    %v1779 = vrot.slane %v1713, %v1778
    %v1796 = vsub.f32 %v1557, %v1719
    %v1797 = vsub.f32 %v1560, %v1723
    %v1798 = vsub.f32 %v1563, %v1727
    %v1799 = vsub.f32 %v1566, %v1731
    %v1800 = vsub.f32 %v1569, %v1735
    %v1801 = vsub.f32 %v1572, %v1739
    %v1802 = vsub.f32 %v1575, %v1743
    %v1803 = vsub.f32 %v1578, %v1747
    %v1804 = vsub.f32 %v1581, %v1751
    %v1805 = vsub.f32 %v1584, %v1755
    %v1806 = vsub.f32 %v1587, %v1759
    %v1807 = vsub.f32 %v1590, %v1763
    %v1808 = vsub.f32 %v1593, %v1767
    %v1809 = vsub.f32 %v1596, %v1771
    %v1810 = vsub.f32 %v1599, %v1775
    %v1811 = vsub.f32 %v1602, %v1779
    %v1812 = vmul.f32 %v1796, 1.442695
    %v1813 = vpow.pop %v1812
    %v1814 = vmul.f32 %v1797, 1.442695
    %v1815 = vpow.pop %v1814
    %v1816 = vmul.f32 %v1798, 1.442695
    %v1817 = vpow.pop %v1816
    %v1818 = vmul.f32 %v1799, 1.442695
    %v1819 = vpow.pop %v1818
    %v1820 = vmul.f32 %v1800, 1.442695
    %v1821 = vpow.pop %v1820
    %v1822 = vmul.f32 %v1801, 1.442695
    %v1823 = vpow.pop %v1822
    %v1824 = vmul.f32 %v1802, 1.442695
    %v1825 = vpow.pop %v1824
    %v1826 = vmul.f32 %v1803, 1.442695
    %v1827 = vpow.pop %v1826
    %v1828 = vmul.f32 %v1804, 1.442695
    %v1829 = vpow.pop %v1828
    %v1830 = vmul.f32 %v1805, 1.442695
    %v1831 = vpow.pop %v1830
    %v1832 = vmul.f32 %v1806, 1.442695
    %v1833 = vpow.pop %v1832
    %v1834 = vmul.f32 %v1807, 1.442695
    %v1835 = vpow.pop %v1834
    %v1836 = vmul.f32 %v1808, 1.442695
    %v1837 = vpow.pop %v1836
    %v1838 = vmul.f32 %v1809, 1.442695
    %v1839 = vpow.pop %v1838
    %v1840 = vmul.f32 %v1810, 1.442695
    %v1841 = vpow.pop %v1840
    %v1842 = vmul.f32 %v1811, 1.442695
    %v1843 = vpow.pop %v1842
    %1860 = vset.pattern.permute.xlu0 0
    %1861 = vperm.xlu0 %1860, %v1813
    %v1862 = vpop.permute.xlu0 %1861
    %1863 = vset.pattern.permute.xlu0 0
    %1864 = vperm.xlu0 %1863, %v1815
    %v1865 = vpop.permute.xlu0 %1864
    %1866 = vset.pattern.permute.xlu0 0
    %1867 = vperm.xlu0 %1866, %v1817
    %v1868 = vpop.permute.xlu0 %1867
    %1869 = vset.pattern.permute.xlu0 0
    %1870 = vperm.xlu0 %1869, %v1819
    %v1871 = vpop.permute.xlu0 %1870
    %1872 = vset.pattern.permute.xlu0 0
    %1873 = vperm.xlu0 %1872, %v1821
    %v1874 = vpop.permute.xlu0 %1873
    %1875 = vset.pattern.permute.xlu0 0
    %1876 = vperm.xlu0 %1875, %v1823
    %v1877 = vpop.permute.xlu0 %1876
    %1878 = vset.pattern.permute.xlu0 0
    %1879 = vperm.xlu0 %1878, %v1825
    %v1880 = vpop.permute.xlu0 %1879
    %1881 = vset.pattern.permute.xlu0 0
    %1882 = vperm.xlu0 %1881, %v1827
    %v1883 = vpop.permute.xlu0 %1882
    %1884 = vset.pattern.permute.xlu0 0
    %1885 = vperm.xlu0 %1884, %v1829
    %v1886 = vpop.permute.xlu0 %1885
    %1887 = vset.pattern.permute.xlu0 0
    %1888 = vperm.xlu0 %1887, %v1831
    %v1889 = vpop.permute.xlu0 %1888
    %1890 = vset.pattern.permute.xlu0 0
    %1891 = vperm.xlu0 %1890, %v1833
    %v1892 = vpop.permute.xlu0 %1891
    %1893 = vset.pattern.permute.xlu0 0
    %1894 = vperm.xlu0 %1893, %v1835
    %v1895 = vpop.permute.xlu0 %1894
    %1896 = vset.pattern.permute.xlu0 0
    %1897 = vperm.xlu0 %1896, %v1837
    %v1898 = vpop.permute.xlu0 %1897
    %1899 = vset.pattern.permute.xlu0 0
    %1900 = vperm.xlu0 %1899, %v1839
    %v1901 = vpop.permute.xlu0 %1900
    %1902 = vset.pattern.permute.xlu0 0
    %1903 = vperm.xlu0 %1902, %v1841
    %v1904 = vpop.permute.xlu0 %1903
    %1905 = vset.pattern.permute.xlu0 0
    %1906 = vperm.xlu0 %1905, %v1843
    %v1907 = vpop.permute.xlu0 %1906
    %v1908 = vlaneseq
    %v1909 = vshrl.u32 %v1908, 7
    %v1910 = vsub.s32 %v1620, %v1909
    %v1911 = vrot.slane %v1862, %v1910
    %v1912 = vlaneseq
    %v1913 = vshrl.u32 %v1912, 7
    %v1914 = vsub.s32 %v1620, %v1913
    %v1915 = vrot.slane %v1865, %v1914
    %v1916 = vlaneseq
    %v1917 = vshrl.u32 %v1916, 7
    %v1918 = vsub.s32 %v1620, %v1917
    %v1919 = vrot.slane %v1868, %v1918
    %v1920 = vlaneseq
    %v1921 = vshrl.u32 %v1920, 7
    %v1922 = vsub.s32 %v1620, %v1921
    %v1923 = vrot.slane %v1871, %v1922
    %v1924 = vlaneseq
    %v1925 = vshrl.u32 %v1924, 7
    %v1926 = vsub.s32 %v1620, %v1925
    %v1927 = vrot.slane %v1874, %v1926
    %v1928 = vlaneseq
    %v1929 = vshrl.u32 %v1928, 7
    %v1930 = vsub.s32 %v1620, %v1929
    %v1931 = vrot.slane %v1877, %v1930
    %v1932 = vlaneseq
    %v1933 = vshrl.u32 %v1932, 7
    %v1934 = vsub.s32 %v1620, %v1933
    %v1935 = vrot.slane %v1880, %v1934
    %v1936 = vlaneseq
    %v1937 = vshrl.u32 %v1936, 7
    %v1938 = vsub.s32 %v1620, %v1937
    %v1939 = vrot.slane %v1883, %v1938
    %v1940 = vlaneseq
    %v1941 = vshrl.u32 %v1940, 7
    %v1942 = vsub.s32 %v1620, %v1941
    %v1943 = vrot.slane %v1886, %v1942
    %v1944 = vlaneseq
    %v1945 = vshrl.u32 %v1944, 7
    %v1946 = vsub.s32 %v1620, %v1945
    %v1947 = vrot.slane %v1889, %v1946
    %v1948 = vlaneseq
    %v1949 = vshrl.u32 %v1948, 7
    %v1950 = vsub.s32 %v1620, %v1949
    %v1951 = vrot.slane %v1892, %v1950
    %v1952 = vlaneseq
    %v1953 = vshrl.u32 %v1952, 7
    %v1954 = vsub.s32 %v1620, %v1953
    %v1955 = vrot.slane %v1895, %v1954
    %v1956 = vlaneseq
    %v1957 = vshrl.u32 %v1956, 7
    %v1958 = vsub.s32 %v1620, %v1957
    %v1959 = vrot.slane %v1898, %v1958
    %v1960 = vlaneseq
    %v1961 = vshrl.u32 %v1960, 7
    %v1962 = vsub.s32 %v1620, %v1961
    %v1963 = vrot.slane %v1901, %v1962
    %v1964 = vlaneseq
    %v1965 = vshrl.u32 %v1964, 7
    %v1966 = vsub.s32 %v1620, %v1965
    %v1967 = vrot.slane %v1904, %v1966
    %v1968 = vlaneseq
    %v1969 = vshrl.u32 %v1968, 7
    %v1970 = vsub.s32 %v1620, %v1969
    %v1971 = vrot.slane %v1907, %v1970
    %v1972 = vsel %vm1685, %v1915, %v1911
    %v1973 = vsel %vm1687, %v1919, %v1972
    %v1974 = vsel %vm1689, %v1923, %v1973
    %v1975 = vsel %vm1691, %v1927, %v1974
    %v1976 = vsel %vm1693, %v1931, %v1975
    %v1977 = vsel %vm1695, %v1935, %v1976
    %v1978 = vsel %vm1697, %v1939, %v1977
    %v1979 = vsel %vm1685, %v1947, %v1943
    %v1980 = vsel %vm1687, %v1951, %v1979
    %v1981 = vsel %vm1689, %v1955, %v1980
    %v1982 = vsel %vm1691, %v1959, %v1981
    %v1983 = vsel %vm1693, %v1963, %v1982
    %v1984 = vsel %vm1695, %v1967, %v1983
    %v1985 = vsel %vm1697, %v1971, %v1984
    %v1988 = vsel %vm1554, %v1978, 0.0
    %1989 = vadd.xlane.f32.xlu0 %v1988
    %v1990 = vpop.xlane.xlu0 %1989
    %v1991 = vsel %vm1554, %v1985, 0.0
    %1992 = vadd.xlane.f32.xlu0 %v1991
    %v1993 = vpop.xlane.xlu0 %1992
    %v1994 = vrcp.pop %v1990
    %v1995 = vrcp.pop %v1993
    %v1996 = vmul.f32 %v1990, %v1994
    %v1997 = vmul.f32 %v1993, %v1995
    %v1998 = vsub.f32 2.0, %v1996
    %v1999 = vsub.f32 2.0, %v1997
    %v2000 = vmul.f32 %v1994, %v1998
    %v2001 = vmul.f32 %v1995, %v1999
    %v2004 = vlaneseq
    %v2005 = vshrl.u32 %v2004, 7
    %v2006 = vsub.s32 0, %v2005
    %v2007 = vrot.slane %v2000, %v2006
    %v2008 = vlaneseq
    %v2009 = vshrl.u32 %v2008, 7
    %v2010 = vsub.s32 1, %v2009
    %v2011 = vrot.slane %v2000, %v2010
    %v2012 = vlaneseq
    %v2013 = vshrl.u32 %v2012, 7
    %v2014 = vsub.s32 2, %v2013
    %v2015 = vrot.slane %v2000, %v2014
    %v2016 = vlaneseq
    %v2017 = vshrl.u32 %v2016, 7
    %v2018 = vsub.s32 3, %v2017
    %v2019 = vrot.slane %v2000, %v2018
    %v2020 = vlaneseq
    %v2021 = vshrl.u32 %v2020, 7
    %v2022 = vsub.s32 4, %v2021
    %v2023 = vrot.slane %v2000, %v2022
    %v2024 = vlaneseq
    %v2025 = vshrl.u32 %v2024, 7
    %v2026 = vsub.s32 5, %v2025
    %v2027 = vrot.slane %v2000, %v2026
    %v2028 = vlaneseq
    %v2029 = vshrl.u32 %v2028, 7
    %v2030 = vsub.s32 6, %v2029
    %v2031 = vrot.slane %v2000, %v2030
    %v2032 = vlaneseq
    %v2033 = vshrl.u32 %v2032, 7
    %v2034 = vsub.s32 7, %v2033
    %v2035 = vrot.slane %v2000, %v2034
    %v2036 = vlaneseq
    %v2037 = vshrl.u32 %v2036, 7
    %v2038 = vsub.s32 0, %v2037
    %v2039 = vrot.slane %v2001, %v2038
    %v2040 = vlaneseq
    %v2041 = vshrl.u32 %v2040, 7
    %v2042 = vsub.s32 1, %v2041
    %v2043 = vrot.slane %v2001, %v2042
    %v2044 = vlaneseq
    %v2045 = vshrl.u32 %v2044, 7
    %v2046 = vsub.s32 2, %v2045
    %v2047 = vrot.slane %v2001, %v2046
    %v2048 = vlaneseq
    %v2049 = vshrl.u32 %v2048, 7
    %v2050 = vsub.s32 3, %v2049
    %v2051 = vrot.slane %v2001, %v2050
    %v2052 = vlaneseq
    %v2053 = vshrl.u32 %v2052, 7
    %v2054 = vsub.s32 4, %v2053
    %v2055 = vrot.slane %v2001, %v2054
    %v2056 = vlaneseq
    %v2057 = vshrl.u32 %v2056, 7
    %v2058 = vsub.s32 5, %v2057
    %v2059 = vrot.slane %v2001, %v2058
    %v2060 = vlaneseq
    %v2061 = vshrl.u32 %v2060, 7
    %v2062 = vsub.s32 6, %v2061
    %v2063 = vrot.slane %v2001, %v2062
    %v2064 = vlaneseq
    %v2065 = vshrl.u32 %v2064, 7
    %v2066 = vsub.s32 7, %v2065
    %v2067 = vrot.slane %v2001, %v2066
    %v2084 = vmul.f32 %v1813, %v2007
    %v2085 = vmul.f32 %v1815, %v2011
    %v2086 = vmul.f32 %v1817, %v2015
    %v2087 = vmul.f32 %v1819, %v2019
    %v2088 = vmul.f32 %v1821, %v2023
    %v2089 = vmul.f32 %v1823, %v2027
    %v2090 = vmul.f32 %v1825, %v2031
    %v2091 = vmul.f32 %v1827, %v2035
    %v2092 = vmul.f32 %v1829, %v2039
    %v2093 = vmul.f32 %v1831, %v2043
    %v2094 = vmul.f32 %v1833, %v2047
    %v2095 = vmul.f32 %v1835, %v2051
    %v2096 = vmul.f32 %v1837, %v2055
    %v2097 = vmul.f32 %v1839, %v2059
    %v2098 = vmul.f32 %v1841, %v2063
    %v2099 = vmul.f32 %v1843, %v2067
    %v2100 = vrot.slane %v1555, 4
    %v2101 = vadd.f32 %v1555, %v2100
    %v2102 = vrot.slane %v2101, 2
    %v2103 = vadd.f32 %v2101, %v2102
    %v2104 = vrot.slane %v2103, 1
    %v2105 = vadd.f32 %v2103, %v2104
    %v2106 = vrot.slane %v1558, 4
    %v2107 = vadd.f32 %v1558, %v2106
    %v2108 = vrot.slane %v2107, 2
    %v2109 = vadd.f32 %v2107, %v2108
    %v2110 = vrot.slane %v2109, 1
    %v2111 = vadd.f32 %v2109, %v2110
    %v2112 = vrot.slane %v1561, 4
    %v2113 = vadd.f32 %v1561, %v2112
    %v2114 = vrot.slane %v2113, 2
    %v2115 = vadd.f32 %v2113, %v2114
    %v2116 = vrot.slane %v2115, 1
    %v2117 = vadd.f32 %v2115, %v2116
    %v2118 = vrot.slane %v1564, 4
    %v2119 = vadd.f32 %v1564, %v2118
    %v2120 = vrot.slane %v2119, 2
    %v2121 = vadd.f32 %v2119, %v2120
    %v2122 = vrot.slane %v2121, 1
    %v2123 = vadd.f32 %v2121, %v2122
    %v2124 = vrot.slane %v1567, 4
    %v2125 = vadd.f32 %v1567, %v2124
    %v2126 = vrot.slane %v2125, 2
    %v2127 = vadd.f32 %v2125, %v2126
    %v2128 = vrot.slane %v2127, 1
    %v2129 = vadd.f32 %v2127, %v2128
    %v2130 = vrot.slane %v1570, 4
    %v2131 = vadd.f32 %v1570, %v2130
    %v2132 = vrot.slane %v2131, 2
    %v2133 = vadd.f32 %v2131, %v2132
    %v2134 = vrot.slane %v2133, 1
    %v2135 = vadd.f32 %v2133, %v2134
    %v2136 = vrot.slane %v1573, 4
    %v2137 = vadd.f32 %v1573, %v2136
    %v2138 = vrot.slane %v2137, 2
    %v2139 = vadd.f32 %v2137, %v2138
    %v2140 = vrot.slane %v2139, 1
    %v2141 = vadd.f32 %v2139, %v2140
    %v2142 = vrot.slane %v1576, 4
    %v2143 = vadd.f32 %v1576, %v2142
    %v2144 = vrot.slane %v2143, 2
    %v2145 = vadd.f32 %v2143, %v2144
    %v2146 = vrot.slane %v2145, 1
    %v2147 = vadd.f32 %v2145, %v2146
    %v2148 = vrot.slane %v1579, 4
    %v2149 = vadd.f32 %v1579, %v2148
    %v2150 = vrot.slane %v2149, 2
    %v2151 = vadd.f32 %v2149, %v2150
    %v2152 = vrot.slane %v2151, 1
    %v2153 = vadd.f32 %v2151, %v2152
    %v2154 = vrot.slane %v1582, 4
    %v2155 = vadd.f32 %v1582, %v2154
    %v2156 = vrot.slane %v2155, 2
    %v2157 = vadd.f32 %v2155, %v2156
    %v2158 = vrot.slane %v2157, 1
    %v2159 = vadd.f32 %v2157, %v2158
    %v2160 = vrot.slane %v1585, 4
    %v2161 = vadd.f32 %v1585, %v2160
    %v2162 = vrot.slane %v2161, 2
    %v2163 = vadd.f32 %v2161, %v2162
    %v2164 = vrot.slane %v2163, 1
    %v2165 = vadd.f32 %v2163, %v2164
    %v2166 = vrot.slane %v1588, 4
    %v2167 = vadd.f32 %v1588, %v2166
    %v2168 = vrot.slane %v2167, 2
    %v2169 = vadd.f32 %v2167, %v2168
    %v2170 = vrot.slane %v2169, 1
    %v2171 = vadd.f32 %v2169, %v2170
    %v2172 = vrot.slane %v1591, 4
    %v2173 = vadd.f32 %v1591, %v2172
    %v2174 = vrot.slane %v2173, 2
    %v2175 = vadd.f32 %v2173, %v2174
    %v2176 = vrot.slane %v2175, 1
    %v2177 = vadd.f32 %v2175, %v2176
    %v2178 = vrot.slane %v1594, 4
    %v2179 = vadd.f32 %v1594, %v2178
    %v2180 = vrot.slane %v2179, 2
    %v2181 = vadd.f32 %v2179, %v2180
    %v2182 = vrot.slane %v2181, 1
    %v2183 = vadd.f32 %v2181, %v2182
    %v2184 = vrot.slane %v1597, 4
    %v2185 = vadd.f32 %v1597, %v2184
    %v2186 = vrot.slane %v2185, 2
    %v2187 = vadd.f32 %v2185, %v2186
    %v2188 = vrot.slane %v2187, 1
    %v2189 = vadd.f32 %v2187, %v2188
    %v2190 = vrot.slane %v1600, 4
    %v2191 = vadd.f32 %v1600, %v2190
    %v2192 = vrot.slane %v2191, 2
    %v2193 = vadd.f32 %v2191, %v2192
    %v2194 = vrot.slane %v2193, 1
    %v2195 = vadd.f32 %v2193, %v2194
    %v2212 = vsel %vm1685, %v2111, %v2105
    %v2213 = vsel %vm1687, %v2117, %v2212
    %v2214 = vsel %vm1689, %v2123, %v2213
    %v2215 = vsel %vm1691, %v2129, %v2214
    %v2216 = vsel %vm1693, %v2135, %v2215
    %v2217 = vsel %vm1695, %v2141, %v2216
    %v2218 = vsel %vm1697, %v2147, %v2217
    %v2219 = vsel %vm1685, %v2159, %v2153
    %v2220 = vsel %vm1687, %v2165, %v2219
    %v2221 = vsel %vm1689, %v2171, %v2220
    %v2222 = vsel %vm1691, %v2177, %v2221
    %v2223 = vsel %vm1693, %v2183, %v2222
    %v2224 = vsel %vm1695, %v2189, %v2223
    %v2225 = vsel %vm1697, %v2195, %v2224
    %v2228 = vsel %vm1554, %v2218, -inf
    %2229 = vmax.xlane.f32.xlu0 %v2228
    %v2230 = vpop.xlane.xlu0 %2229
    %v2231 = vsel %vm1554, %v2225, -inf
    %2232 = vmax.xlane.f32.xlu0 %v2231
    %v2233 = vpop.xlane.xlu0 %2232
    %v2236 = vrot.slane %v2230, 1
    %v2237 = vrot.slane %v2230, 2
    %v2238 = vrot.slane %v2230, 3
    %v2239 = vrot.slane %v2230, 4
    %v2240 = vrot.slane %v2230, 5
    %v2241 = vrot.slane %v2230, 6
    %v2242 = vrot.slane %v2230, 7
    %v2243 = vrot.slane %v2233, 1
    %v2244 = vrot.slane %v2233, 2
    %v2245 = vrot.slane %v2233, 3
    %v2246 = vrot.slane %v2233, 4
    %v2247 = vrot.slane %v2233, 5
    %v2248 = vrot.slane %v2233, 6
    %v2249 = vrot.slane %v2233, 7
    %v2266 = vsub.f32 %v2105, %v2230
    %v2267 = vsub.f32 %v2111, %v2236
    %v2268 = vsub.f32 %v2117, %v2237
    %v2269 = vsub.f32 %v2123, %v2238
    %v2270 = vsub.f32 %v2129, %v2239
    %v2271 = vsub.f32 %v2135, %v2240
    %v2272 = vsub.f32 %v2141, %v2241
    %v2273 = vsub.f32 %v2147, %v2242
    %v2274 = vsub.f32 %v2153, %v2233
    %v2275 = vsub.f32 %v2159, %v2243
    %v2276 = vsub.f32 %v2165, %v2244
    %v2277 = vsub.f32 %v2171, %v2245
    %v2278 = vsub.f32 %v2177, %v2246
    %v2279 = vsub.f32 %v2183, %v2247
    %v2280 = vsub.f32 %v2189, %v2248
    %v2281 = vsub.f32 %v2195, %v2249
    %v2282 = vmul.f32 %v2266, 1.442695
    %v2283 = vpow.pop %v2282
    %v2284 = vmul.f32 %v2267, 1.442695
    %v2285 = vpow.pop %v2284
    %v2286 = vmul.f32 %v2268, 1.442695
    %v2287 = vpow.pop %v2286
    %v2288 = vmul.f32 %v2269, 1.442695
    %v2289 = vpow.pop %v2288
    %v2290 = vmul.f32 %v2270, 1.442695
    %v2291 = vpow.pop %v2290
    %v2292 = vmul.f32 %v2271, 1.442695
    %v2293 = vpow.pop %v2292
    %v2294 = vmul.f32 %v2272, 1.442695
    %v2295 = vpow.pop %v2294
    %v2296 = vmul.f32 %v2273, 1.442695
    %v2297 = vpow.pop %v2296
    %v2298 = vmul.f32 %v2274, 1.442695
    %v2299 = vpow.pop %v2298
    %v2300 = vmul.f32 %v2275, 1.442695
    %v2301 = vpow.pop %v2300
    %v2302 = vmul.f32 %v2276, 1.442695
    %v2303 = vpow.pop %v2302
    %v2304 = vmul.f32 %v2277, 1.442695
    %v2305 = vpow.pop %v2304
    %v2306 = vmul.f32 %v2278, 1.442695
    %v2307 = vpow.pop %v2306
    %v2308 = vmul.f32 %v2279, 1.442695
    %v2309 = vpow.pop %v2308
    %v2310 = vmul.f32 %v2280, 1.442695
    %v2311 = vpow.pop %v2310
    %v2312 = vmul.f32 %v2281, 1.442695
    %v2313 = vpow.pop %v2312
    %v2330 = vrot.slane %v2285, 7
    %v2331 = vsel %vm1685, %v2330, %v2283
    %v2332 = vrot.slane %v2287, 6
    %v2333 = vsel %vm1687, %v2332, %v2331
    %v2334 = vrot.slane %v2289, 5
    %v2335 = vsel %vm1689, %v2334, %v2333
    %v2336 = vrot.slane %v2291, 4
    %v2337 = vsel %vm1691, %v2336, %v2335
    %v2338 = vrot.slane %v2293, 3
    %v2339 = vsel %vm1693, %v2338, %v2337
    %v2340 = vrot.slane %v2295, 2
    %v2341 = vsel %vm1695, %v2340, %v2339
    %v2342 = vrot.slane %v2297, 1
    %v2343 = vsel %vm1697, %v2342, %v2341
    %v2344 = vrot.slane %v2301, 7
    %v2345 = vsel %vm1685, %v2344, %v2299
    %v2346 = vrot.slane %v2303, 6
    %v2347 = vsel %vm1687, %v2346, %v2345
    %v2348 = vrot.slane %v2305, 5
    %v2349 = vsel %vm1689, %v2348, %v2347
    %v2350 = vrot.slane %v2307, 4
    %v2351 = vsel %vm1691, %v2350, %v2349
    %v2352 = vrot.slane %v2309, 3
    %v2353 = vsel %vm1693, %v2352, %v2351
    %v2354 = vrot.slane %v2311, 2
    %v2355 = vsel %vm1695, %v2354, %v2353
    %v2356 = vrot.slane %v2313, 1
    %v2357 = vsel %vm1697, %v2356, %v2355
    %v2360 = vsel %vm1554, %v2343, 0.0
    %2361 = vadd.xlane.f32.xlu0 %v2360
    %v2362 = vpop.xlane.xlu0 %2361
    %v2363 = vsel %vm1554, %v2357, 0.0
    %2364 = vadd.xlane.f32.xlu0 %v2363
    %v2365 = vpop.xlane.xlu0 %2364
    %v2366 = vrcp.pop %v2362
    %v2367 = vrcp.pop %v2365
    %v2368 = vmul.f32 %v2362, %v2366
    %v2369 = vmul.f32 %v2365, %v2367
    %v2370 = vsub.f32 2.0, %v2368
    %v2371 = vsub.f32 2.0, %v2369
    %v2372 = vmul.f32 %v2366, %v2370
    %v2373 = vmul.f32 %v2367, %v2371
    %v2376 = vrot.slane %v2372, 1
    %v2377 = vrot.slane %v2372, 2
    %v2378 = vrot.slane %v2372, 3
    %v2379 = vrot.slane %v2372, 4
    %v2380 = vrot.slane %v2372, 5
    %v2381 = vrot.slane %v2372, 6
    %v2382 = vrot.slane %v2372, 7
    %v2383 = vrot.slane %v2373, 1
    %v2384 = vrot.slane %v2373, 2
    %v2385 = vrot.slane %v2373, 3
    %v2386 = vrot.slane %v2373, 4
    %v2387 = vrot.slane %v2373, 5
    %v2388 = vrot.slane %v2373, 6
    %v2389 = vrot.slane %v2373, 7
    %v2406 = vmul.f32 %v2283, %v2372
    %v2407 = vmul.f32 %v2285, %v2376
    %v2408 = vmul.f32 %v2287, %v2377
    %v2409 = vmul.f32 %v2289, %v2378
    %v2410 = vmul.f32 %v2291, %v2379
    %v2411 = vmul.f32 %v2293, %v2380
    %v2412 = vmul.f32 %v2295, %v2381
    %v2413 = vmul.f32 %v2297, %v2382
    %v2414 = vmul.f32 %v2299, %v2373
    %v2415 = vmul.f32 %v2301, %v2383
    %v2416 = vmul.f32 %v2303, %v2384
    %v2417 = vmul.f32 %v2305, %v2385
    %v2418 = vmul.f32 %v2307, %v2386
    %v2419 = vmul.f32 %v2309, %v2387
    %v2420 = vmul.f32 %v2311, %v2388
    %v2421 = vmul.f32 %v2313, %v2389
    %2423 = vset.pattern.permute.xlu0 0
    %2424 = vperm.xlu0 %2423, %v2084
    %v2425 = vpop.permute.xlu0 %2424
    %2428 = vset.pattern.permute.xlu0 0
    %2429 = vperm.xlu0 %2428, %v2085
    %v2430 = vpop.permute.xlu0 %2429
    %2433 = vset.pattern.permute.xlu0 0
    %2434 = vperm.xlu0 %2433, %v2086
    %v2435 = vpop.permute.xlu0 %2434
    %2438 = vset.pattern.permute.xlu0 0
    %2439 = vperm.xlu0 %2438, %v2087
    %v2440 = vpop.permute.xlu0 %2439
    %2443 = vset.pattern.permute.xlu0 0
    %2444 = vperm.xlu0 %2443, %v2088
    %v2445 = vpop.permute.xlu0 %2444
    %2448 = vset.pattern.permute.xlu0 0
    %2449 = vperm.xlu0 %2448, %v2089
    %v2450 = vpop.permute.xlu0 %2449
    %2453 = vset.pattern.permute.xlu0 0
    %2454 = vperm.xlu0 %2453, %v2090
    %v2455 = vpop.permute.xlu0 %2454
    %2458 = vset.pattern.permute.xlu0 0
    %2459 = vperm.xlu0 %2458, %v2091
    %v2460 = vpop.permute.xlu0 %2459
    %2463 = vset.pattern.permute.xlu0 0
    %2464 = vperm.xlu0 %2463, %v2092
    %v2465 = vpop.permute.xlu0 %2464
    %2468 = vset.pattern.permute.xlu0 0
    %2469 = vperm.xlu0 %2468, %v2093
    %v2470 = vpop.permute.xlu0 %2469
    %2473 = vset.pattern.permute.xlu0 0
    %2474 = vperm.xlu0 %2473, %v2094
    %v2475 = vpop.permute.xlu0 %2474
    %2478 = vset.pattern.permute.xlu0 0
    %2479 = vperm.xlu0 %2478, %v2095
    %v2480 = vpop.permute.xlu0 %2479
    %2483 = vset.pattern.permute.xlu0 0
    %2484 = vperm.xlu0 %2483, %v2096
    %v2485 = vpop.permute.xlu0 %2484
    %2488 = vset.pattern.permute.xlu0 0
    %2489 = vperm.xlu0 %2488, %v2097
    %v2490 = vpop.permute.xlu0 %2489
    %2493 = vset.pattern.permute.xlu0 0
    %2494 = vperm.xlu0 %2493, %v2098
    %v2495 = vpop.permute.xlu0 %2494
    %2498 = vset.pattern.permute.xlu0 0
    %2499 = vperm.xlu0 %2498, %v2099
    %v2500 = vpop.permute.xlu0 %2499
    %v2502 = vmul.f32 %v2425, %v92
    %v2503 = vmul.f32 %v2430, %v93
    %v2504 = vmul.f32 %v2435, %v94
    %v2505 = vmul.f32 %v2440, %v95
    %v2506 = vmul.f32 %v2445, %v96
    %v2507 = vmul.f32 %v2450, %v97
    %v2508 = vmul.f32 %v2455, %v98
    %v2509 = vmul.f32 %v2460, %v99
    %v2510 = vmul.f32 %v2465, %v100
    %v2511 = vmul.f32 %v2470, %v101
    %v2512 = vmul.f32 %v2475, %v102
    %v2513 = vmul.f32 %v2480, %v103
    %v2514 = vmul.f32 %v2485, %v104
    %v2515 = vmul.f32 %v2490, %v105
    %v2516 = vmul.f32 %v2495, %v106
    %v2517 = vmul.f32 %v2500, %v107
    %v2518 = vsel %vm128, %v2502, 0.0
    %v2519 = vrot.slane %v2518, 4
    %v2520 = vadd.f32 %v2518, %v2519
    %v2521 = vrot.slane %v2520, 2
    %v2522 = vadd.f32 %v2520, %v2521
    %v2523 = vrot.slane %v2522, 1
    %v2524 = vadd.f32 %v2522, %v2523
    %v2525 = vsel %vm128, %v2503, 0.0
    %v2526 = vrot.slane %v2525, 4
    %v2527 = vadd.f32 %v2525, %v2526
    %v2528 = vrot.slane %v2527, 2
    %v2529 = vadd.f32 %v2527, %v2528
    %v2530 = vrot.slane %v2529, 1
    %v2531 = vadd.f32 %v2529, %v2530
    %v2532 = vsel %vm128, %v2504, 0.0
    %v2533 = vrot.slane %v2532, 4
    %v2534 = vadd.f32 %v2532, %v2533
    %v2535 = vrot.slane %v2534, 2
    %v2536 = vadd.f32 %v2534, %v2535
    %v2537 = vrot.slane %v2536, 1
    %v2538 = vadd.f32 %v2536, %v2537
    %v2539 = vsel %vm128, %v2505, 0.0
    %v2540 = vrot.slane %v2539, 4
    %v2541 = vadd.f32 %v2539, %v2540
    %v2542 = vrot.slane %v2541, 2
    %v2543 = vadd.f32 %v2541, %v2542
    %v2544 = vrot.slane %v2543, 1
    %v2545 = vadd.f32 %v2543, %v2544
    %v2546 = vsel %vm128, %v2506, 0.0
    %v2547 = vrot.slane %v2546, 4
    %v2548 = vadd.f32 %v2546, %v2547
    %v2549 = vrot.slane %v2548, 2
    %v2550 = vadd.f32 %v2548, %v2549
    %v2551 = vrot.slane %v2550, 1
    %v2552 = vadd.f32 %v2550, %v2551
    %v2553 = vsel %vm128, %v2507, 0.0
    %v2554 = vrot.slane %v2553, 4
    %v2555 = vadd.f32 %v2553, %v2554
    %v2556 = vrot.slane %v2555, 2
    %v2557 = vadd.f32 %v2555, %v2556
    %v2558 = vrot.slane %v2557, 1
    %v2559 = vadd.f32 %v2557, %v2558
    %v2560 = vsel %vm128, %v2508, 0.0
    %v2561 = vrot.slane %v2560, 4
    %v2562 = vadd.f32 %v2560, %v2561
    %v2563 = vrot.slane %v2562, 2
    %v2564 = vadd.f32 %v2562, %v2563
    %v2565 = vrot.slane %v2564, 1
    %v2566 = vadd.f32 %v2564, %v2565
    %v2567 = vsel %vm128, %v2509, 0.0
    %v2568 = vrot.slane %v2567, 4
    %v2569 = vadd.f32 %v2567, %v2568
    %v2570 = vrot.slane %v2569, 2
    %v2571 = vadd.f32 %v2569, %v2570
    %v2572 = vrot.slane %v2571, 1
    %v2573 = vadd.f32 %v2571, %v2572
    %v2574 = vsel %vm128, %v2510, 0.0
    %v2575 = vrot.slane %v2574, 4
    %v2576 = vadd.f32 %v2574, %v2575
    %v2577 = vrot.slane %v2576, 2
    %v2578 = vadd.f32 %v2576, %v2577
    %v2579 = vrot.slane %v2578, 1
    %v2580 = vadd.f32 %v2578, %v2579
    %v2581 = vsel %vm128, %v2511, 0.0
    %v2582 = vrot.slane %v2581, 4
    %v2583 = vadd.f32 %v2581, %v2582
    %v2584 = vrot.slane %v2583, 2
    %v2585 = vadd.f32 %v2583, %v2584
    %v2586 = vrot.slane %v2585, 1
    %v2587 = vadd.f32 %v2585, %v2586
    %v2588 = vsel %vm128, %v2512, 0.0
    %v2589 = vrot.slane %v2588, 4
    %v2590 = vadd.f32 %v2588, %v2589
    %v2591 = vrot.slane %v2590, 2
    %v2592 = vadd.f32 %v2590, %v2591
    %v2593 = vrot.slane %v2592, 1
    %v2594 = vadd.f32 %v2592, %v2593
    %v2595 = vsel %vm128, %v2513, 0.0
    %v2596 = vrot.slane %v2595, 4
    %v2597 = vadd.f32 %v2595, %v2596
    %v2598 = vrot.slane %v2597, 2
    %v2599 = vadd.f32 %v2597, %v2598
    %v2600 = vrot.slane %v2599, 1
    %v2601 = vadd.f32 %v2599, %v2600
    %v2602 = vsel %vm128, %v2514, 0.0
    %v2603 = vrot.slane %v2602, 4
    %v2604 = vadd.f32 %v2602, %v2603
    %v2605 = vrot.slane %v2604, 2
    %v2606 = vadd.f32 %v2604, %v2605
    %v2607 = vrot.slane %v2606, 1
    %v2608 = vadd.f32 %v2606, %v2607
    %v2609 = vsel %vm128, %v2515, 0.0
    %v2610 = vrot.slane %v2609, 4
    %v2611 = vadd.f32 %v2609, %v2610
    %v2612 = vrot.slane %v2611, 2
    %v2613 = vadd.f32 %v2611, %v2612
    %v2614 = vrot.slane %v2613, 1
    %v2615 = vadd.f32 %v2613, %v2614
    %v2616 = vsel %vm128, %v2516, 0.0
    %v2617 = vrot.slane %v2616, 4
    %v2618 = vadd.f32 %v2616, %v2617
    %v2619 = vrot.slane %v2618, 2
    %v2620 = vadd.f32 %v2618, %v2619
    %v2621 = vrot.slane %v2620, 1
    %v2622 = vadd.f32 %v2620, %v2621
    %v2623 = vsel %vm128, %v2517, 0.0
    %v2624 = vrot.slane %v2623, 4
    %v2625 = vadd.f32 %v2623, %v2624
    %v2626 = vrot.slane %v2625, 2
    %v2627 = vadd.f32 %v2625, %v2626
    %v2628 = vrot.slane %v2627, 1
    %v2629 = vadd.f32 %v2627, %v2628
    %v2630 = vlaneseq
    %v2631 = vshrl.u32 %v2630, 7
    %v2632 = vsub.s32 0, %v2631
    %v2633 = vrot.slane %v2406, %v2632
    %2635 = vbcast.lane.b32.xlu0 %v2633, 256
    %v2636 = vpop.permute.xlu0 %2635
    %v2637 = vlaneseq
    %v2638 = vshrl.u32 %v2637, 7
    %v2639 = vsub.s32 0, %v2638
    %v2640 = vrot.slane %v2407, %v2639
    %2642 = vbcast.lane.b32.xlu0 %v2640, 256
    %v2643 = vpop.permute.xlu0 %2642
    %v2644 = vlaneseq
    %v2645 = vshrl.u32 %v2644, 7
    %v2646 = vsub.s32 0, %v2645
    %v2647 = vrot.slane %v2408, %v2646
    %2649 = vbcast.lane.b32.xlu0 %v2647, 256
    %v2650 = vpop.permute.xlu0 %2649
    %v2651 = vlaneseq
    %v2652 = vshrl.u32 %v2651, 7
    %v2653 = vsub.s32 0, %v2652
    %v2654 = vrot.slane %v2409, %v2653
    %2656 = vbcast.lane.b32.xlu0 %v2654, 256
    %v2657 = vpop.permute.xlu0 %2656
    %v2658 = vlaneseq
    %v2659 = vshrl.u32 %v2658, 7
    %v2660 = vsub.s32 0, %v2659
    %v2661 = vrot.slane %v2410, %v2660
    %2663 = vbcast.lane.b32.xlu0 %v2661, 256
    %v2664 = vpop.permute.xlu0 %2663
    %v2665 = vlaneseq
    %v2666 = vshrl.u32 %v2665, 7
    %v2667 = vsub.s32 0, %v2666
    %v2668 = vrot.slane %v2411, %v2667
    %2670 = vbcast.lane.b32.xlu0 %v2668, 256
    %v2671 = vpop.permute.xlu0 %2670
    %v2672 = vlaneseq
    %v2673 = vshrl.u32 %v2672, 7
    %v2674 = vsub.s32 0, %v2673
    %v2675 = vrot.slane %v2412, %v2674
    %2677 = vbcast.lane.b32.xlu0 %v2675, 256
    %v2678 = vpop.permute.xlu0 %2677
    %v2679 = vlaneseq
    %v2680 = vshrl.u32 %v2679, 7
    %v2681 = vsub.s32 0, %v2680
    %v2682 = vrot.slane %v2413, %v2681
    %2684 = vbcast.lane.b32.xlu0 %v2682, 256
    %v2685 = vpop.permute.xlu0 %2684
    %v2686 = vlaneseq
    %v2687 = vshrl.u32 %v2686, 7
    %v2688 = vsub.s32 0, %v2687
    %v2689 = vrot.slane %v2414, %v2688
    %2691 = vbcast.lane.b32.xlu0 %v2689, 256
    %v2692 = vpop.permute.xlu0 %2691
    %v2693 = vlaneseq
    %v2694 = vshrl.u32 %v2693, 7
    %v2695 = vsub.s32 0, %v2694
    %v2696 = vrot.slane %v2415, %v2695
    %2698 = vbcast.lane.b32.xlu0 %v2696, 256
    %v2699 = vpop.permute.xlu0 %2698
    %v2700 = vlaneseq
    %v2701 = vshrl.u32 %v2700, 7
    %v2702 = vsub.s32 0, %v2701
    %v2703 = vrot.slane %v2416, %v2702
    %2705 = vbcast.lane.b32.xlu0 %v2703, 256
    %v2706 = vpop.permute.xlu0 %2705
    %v2707 = vlaneseq
    %v2708 = vshrl.u32 %v2707, 7
    %v2709 = vsub.s32 0, %v2708
    %v2710 = vrot.slane %v2417, %v2709
    %2712 = vbcast.lane.b32.xlu0 %v2710, 256
    %v2713 = vpop.permute.xlu0 %2712
    %v2714 = vlaneseq
    %v2715 = vshrl.u32 %v2714, 7
    %v2716 = vsub.s32 0, %v2715
    %v2717 = vrot.slane %v2418, %v2716
    %2719 = vbcast.lane.b32.xlu0 %v2717, 256
    %v2720 = vpop.permute.xlu0 %2719
    %v2721 = vlaneseq
    %v2722 = vshrl.u32 %v2721, 7
    %v2723 = vsub.s32 0, %v2722
    %v2724 = vrot.slane %v2419, %v2723
    %2726 = vbcast.lane.b32.xlu0 %v2724, 256
    %v2727 = vpop.permute.xlu0 %2726
    %v2728 = vlaneseq
    %v2729 = vshrl.u32 %v2728, 7
    %v2730 = vsub.s32 0, %v2729
    %v2731 = vrot.slane %v2420, %v2730
    %2733 = vbcast.lane.b32.xlu0 %v2731, 256
    %v2734 = vpop.permute.xlu0 %2733
    %v2735 = vlaneseq
    %v2736 = vshrl.u32 %v2735, 7
    %v2737 = vsub.s32 0, %v2736
    %v2738 = vrot.slane %v2421, %v2737
    %2740 = vbcast.lane.b32.xlu0 %v2738, 256
    %v2741 = vpop.permute.xlu0 %2740
    %v2742 = vmul.f32 %v2636, %v108
    %v2743 = vmul.f32 %v2643, %v109
    %v2744 = vmul.f32 %v2650, %v110
    %v2745 = vmul.f32 %v2657, %v111
    %v2746 = vmul.f32 %v2664, %v112
    %v2747 = vmul.f32 %v2671, %v113
    %v2748 = vmul.f32 %v2678, %v114
    %v2749 = vmul.f32 %v2685, %v115
    %v2750 = vmul.f32 %v2692, %v116
    %v2751 = vmul.f32 %v2699, %v117
    %v2752 = vmul.f32 %v2706, %v118
    %v2753 = vmul.f32 %v2713, %v119
    %v2754 = vmul.f32 %v2720, %v120
    %v2755 = vmul.f32 %v2727, %v121
    %v2756 = vmul.f32 %v2734, %v122
    %v2757 = vmul.f32 %v2741, %v123
    %v2758 = vsel %vm128, %v2742, 0.0
    %v2759 = vrot.slane %v2758, 4
    %v2760 = vadd.f32 %v2758, %v2759
    %v2761 = vrot.slane %v2760, 2
    %v2762 = vadd.f32 %v2760, %v2761
    %v2763 = vrot.slane %v2762, 1
    %v2764 = vadd.f32 %v2762, %v2763
    %v2765 = vsel %vm128, %v2743, 0.0
    %v2766 = vrot.slane %v2765, 4
    %v2767 = vadd.f32 %v2765, %v2766
    %v2768 = vrot.slane %v2767, 2
    %v2769 = vadd.f32 %v2767, %v2768
    %v2770 = vrot.slane %v2769, 1
    %v2771 = vadd.f32 %v2769, %v2770
    %v2772 = vsel %vm128, %v2744, 0.0
    %v2773 = vrot.slane %v2772, 4
    %v2774 = vadd.f32 %v2772, %v2773
    %v2775 = vrot.slane %v2774, 2
    %v2776 = vadd.f32 %v2774, %v2775
    %v2777 = vrot.slane %v2776, 1
    %v2778 = vadd.f32 %v2776, %v2777
    %v2779 = vsel %vm128, %v2745, 0.0
    %v2780 = vrot.slane %v2779, 4
    %v2781 = vadd.f32 %v2779, %v2780
    %v2782 = vrot.slane %v2781, 2
    %v2783 = vadd.f32 %v2781, %v2782
    %v2784 = vrot.slane %v2783, 1
    %v2785 = vadd.f32 %v2783, %v2784
    %v2786 = vsel %vm128, %v2746, 0.0
    %v2787 = vrot.slane %v2786, 4
    %v2788 = vadd.f32 %v2786, %v2787
    %v2789 = vrot.slane %v2788, 2
    %v2790 = vadd.f32 %v2788, %v2789
    %v2791 = vrot.slane %v2790, 1
    %v2792 = vadd.f32 %v2790, %v2791
    %v2793 = vsel %vm128, %v2747, 0.0
    %v2794 = vrot.slane %v2793, 4
    %v2795 = vadd.f32 %v2793, %v2794
    %v2796 = vrot.slane %v2795, 2
    %v2797 = vadd.f32 %v2795, %v2796
    %v2798 = vrot.slane %v2797, 1
    %v2799 = vadd.f32 %v2797, %v2798
    %v2800 = vsel %vm128, %v2748, 0.0
    %v2801 = vrot.slane %v2800, 4
    %v2802 = vadd.f32 %v2800, %v2801
    %v2803 = vrot.slane %v2802, 2
    %v2804 = vadd.f32 %v2802, %v2803
    %v2805 = vrot.slane %v2804, 1
    %v2806 = vadd.f32 %v2804, %v2805
    %v2807 = vsel %vm128, %v2749, 0.0
    %v2808 = vrot.slane %v2807, 4
    %v2809 = vadd.f32 %v2807, %v2808
    %v2810 = vrot.slane %v2809, 2
    %v2811 = vadd.f32 %v2809, %v2810
    %v2812 = vrot.slane %v2811, 1
    %v2813 = vadd.f32 %v2811, %v2812
    %v2814 = vsel %vm128, %v2750, 0.0
    %v2815 = vrot.slane %v2814, 4
    %v2816 = vadd.f32 %v2814, %v2815
    %v2817 = vrot.slane %v2816, 2
    %v2818 = vadd.f32 %v2816, %v2817
    %v2819 = vrot.slane %v2818, 1
    %v2820 = vadd.f32 %v2818, %v2819
    %v2821 = vsel %vm128, %v2751, 0.0
    %v2822 = vrot.slane %v2821, 4
    %v2823 = vadd.f32 %v2821, %v2822
    %v2824 = vrot.slane %v2823, 2
    %v2825 = vadd.f32 %v2823, %v2824
    %v2826 = vrot.slane %v2825, 1
    %v2827 = vadd.f32 %v2825, %v2826
    %v2828 = vsel %vm128, %v2752, 0.0
    %v2829 = vrot.slane %v2828, 4
    %v2830 = vadd.f32 %v2828, %v2829
    %v2831 = vrot.slane %v2830, 2
    %v2832 = vadd.f32 %v2830, %v2831
    %v2833 = vrot.slane %v2832, 1
    %v2834 = vadd.f32 %v2832, %v2833
    %v2835 = vsel %vm128, %v2753, 0.0
    %v2836 = vrot.slane %v2835, 4
    %v2837 = vadd.f32 %v2835, %v2836
    %v2838 = vrot.slane %v2837, 2
    %v2839 = vadd.f32 %v2837, %v2838
    %v2840 = vrot.slane %v2839, 1
    %v2841 = vadd.f32 %v2839, %v2840
    %v2842 = vsel %vm128, %v2754, 0.0
    %v2843 = vrot.slane %v2842, 4
    %v2844 = vadd.f32 %v2842, %v2843
    %v2845 = vrot.slane %v2844, 2
    %v2846 = vadd.f32 %v2844, %v2845
    %v2847 = vrot.slane %v2846, 1
    %v2848 = vadd.f32 %v2846, %v2847
    %v2849 = vsel %vm128, %v2755, 0.0
    %v2850 = vrot.slane %v2849, 4
    %v2851 = vadd.f32 %v2849, %v2850
    %v2852 = vrot.slane %v2851, 2
    %v2853 = vadd.f32 %v2851, %v2852
    %v2854 = vrot.slane %v2853, 1
    %v2855 = vadd.f32 %v2853, %v2854
    %v2856 = vsel %vm128, %v2756, 0.0
    %v2857 = vrot.slane %v2856, 4
    %v2858 = vadd.f32 %v2856, %v2857
    %v2859 = vrot.slane %v2858, 2
    %v2860 = vadd.f32 %v2858, %v2859
    %v2861 = vrot.slane %v2860, 1
    %v2862 = vadd.f32 %v2860, %v2861
    %v2863 = vsel %vm128, %v2757, 0.0
    %v2864 = vrot.slane %v2863, 4
    %v2865 = vadd.f32 %v2863, %v2864
    %v2866 = vrot.slane %v2865, 2
    %v2867 = vadd.f32 %v2865, %v2866
    %v2868 = vrot.slane %v2867, 1
    %v2869 = vadd.f32 %v2867, %v2868
    %v2870 = vld [vmem:[#allocation8] sm:$0xff]
    %v2871 = vld [vmem:[#allocation8 + $0x8] sm:$0xff]
    %v2872 = vld [vmem:[#allocation8 + $0x10] sm:$0xff]
    %v2873 = vld [vmem:[#allocation8 + $0x18] sm:$0xff]
    %v2874 = vld [vmem:[#allocation10] sm:$0xff]
    %v2875 = vld [vmem:[#allocation10 + $0x8] sm:$0xff]
    %v2876 = vld [vmem:[#allocation10 + $0x10] sm:$0xff]
    %v2877 = vld [vmem:[#allocation10 + $0x18] sm:$0xff]
    %v2894 = vsel %vm1685, %v2771, %v2764
    %v2895 = vsel %vm1687, %v2778, %v2894
    %v2896 = vsel %vm1689, %v2785, %v2895
    %v2897 = vsel %vm1691, %v2792, %v2896
    %v2898 = vsel %vm1693, %v2799, %v2897
    %v2899 = vsel %vm1695, %v2806, %v2898
    %v2900 = vsel %vm1697, %v2813, %v2899
    %v2901 = vsel %vm1685, %v2827, %v2820
    %v2902 = vsel %vm1687, %v2834, %v2901
    %v2903 = vsel %vm1689, %v2841, %v2902
    %v2904 = vsel %vm1691, %v2848, %v2903
    %v2905 = vsel %vm1693, %v2855, %v2904
    %v2906 = vsel %vm1695, %v2862, %v2905
    %v2907 = vsel %vm1697, %v2869, %v2906
    %v2908 = vsel %vm128, %v2900, 0
    %v2910 = vsel %vm128, %v2907, 0
    %2912 = vmatprep.subr.mxu0 0.0
    %2913 = vmatpush1.msra.mxu0 0.0
    %2914 = vmatprep.subr.mxu0 0.0
    %2915 = vmatpush1.msra.mxu0 0.0
    %2916 = vmatprep.subr.mxu0 0.0
    %2917 = vmatpush1.msra.mxu0 0.0
    %2918 = vmatprep.subr.mxu0 0.0
    %2919 = vmatpush1.msra.mxu0 0.0
    %2920 = vmatprep.subr.mxu0 0.0
    %2921 = vmatpush1.msra.mxu0 0.0
    %2922 = vmatprep.subr.mxu0 0.0
    %2923 = vmatpush1.msra.mxu0 0.0
    %2924 = vmatprep.subr.mxu0 0.0
    %2925 = vmatpush1.msra.mxu0 0.0
    %2926 = vmatprep.subr.mxu0 0.0
    %2927 = vmatpush1.msra.mxu0 0.0
    %2928 = vmatprep.subr.mxu0 0.0
    %2929 = vmatpush1.msra.mxu0 0.0
    %2930 = vmatprep.subr.mxu0 0.0
    %2931 = vmatpush1.msra.mxu0 0.0
    %2932 = vmatprep.subr.mxu0 0.0
    %2933 = vmatpush1.msra.mxu0 0.0
    %2934 = vmatprep.subr.mxu0 0.0
    %2935 = vmatpush1.msra.mxu0 0.0
    %2936 = vmatprep.subr.mxu0 0.0
    %2937 = vmatpush1.msra.mxu0 %v2877
    %2938 = vmatprep.subr.mxu0 0.0
    %2939 = vmatpush1.msra.mxu0 %v2876
    %2940 = vmatprep.subr.mxu0 0.0
    %2941 = vmatpush1.msra.mxu0 %v2875
    %2942 = vmatprep.subr.mxu0 0.0
    %2943 = vmatpush1.msra.mxu0 %v2874
    %2944 = vmatprep.subr.mxu0 0.0
    %2945 = vmatpush2.msra.mxu0 0.0
    %2946 = vmatprep.subr.mxu0 0.0
    %2947 = vmatpush2.msra.mxu0 0.0
    %2948 = vmatprep.subr.mxu0 0.0
    %2949 = vmatpush2.msra.mxu0 0.0
    %2950 = vmatprep.subr.mxu0 0.0
    %2951 = vmatpush2.msra.mxu0 0.0
    %2952 = vmatprep.subr.mxu0 0.0
    %2953 = vmatpush2.msra.mxu0 0.0
    %2954 = vmatprep.subr.mxu0 0.0
    %2955 = vmatpush2.msra.mxu0 0.0
    %2956 = vmatprep.subr.mxu0 0.0
    %2957 = vmatpush2.msra.mxu0 0.0
    %2958 = vmatprep.subr.mxu0 0.0
    %2959 = vmatpush2.msra.mxu0 0.0
    %2960 = vmatprep.subr.mxu0 0.0
    %2961 = vmatpush2.msra.mxu0 0.0
    %2962 = vmatprep.subr.mxu0 0.0
    %2963 = vmatpush2.msra.mxu0 0.0
    %2964 = vmatprep.subr.mxu0 0.0
    %2965 = vmatpush2.msra.mxu0 0.0
    %2966 = vmatprep.subr.mxu0 0.0
    %2967 = vmatpush2.msra.mxu0 0.0
    %2968 = vmatprep.subr.mxu0 0.0
    %2969 = vmatpush2.msra.mxu0 0.0
    %2970 = vmatprep.subr.mxu0 0.0
    %2971 = vmatpush2.msra.mxu0 0.0
    %2972 = vmatprep.subr.mxu0 0.0
    %2973 = vmatpush2.msra.mxu0 0.0
    %2974 = vmatprep.subr.mxu0 0.0
    %2975 = vmatpush2.msra.mxu0 0.0
    %2976 = vmatprep.mubr.f32.mxu0 0.0
    %2977 = vmatmul.mubr.f32.gmra.mxu0 %v2908
    %v2978 = vpop.f32.mrf.mxu0
    %v2979 = vadd.f32 0.0, %v2978
    %v2980 = vpop.f32.mrf.mxu0
    %2981 = vmatprep.mubr.f32.mxu0 0.0
    %2982 = vmatmul.mubr.f32.gmra.mxu0 %v2910
    %v2983 = vpop.f32.mrf.mxu0
    %v2984 = vadd.f32 0.0, %v2983
    %v2985 = vpop.f32.mrf.mxu0
    %2986 = vdwg.mxu0
    %v3003 = vsel %vm1685, %v2531, %v2524
    %v3004 = vsel %vm1687, %v2538, %v3003
    %v3005 = vsel %vm1689, %v2545, %v3004
    %v3006 = vsel %vm1691, %v2552, %v3005
    %v3007 = vsel %vm1693, %v2559, %v3006
    %v3008 = vsel %vm1695, %v2566, %v3007
    %v3009 = vsel %vm1697, %v2573, %v3008
    %v3010 = vsel %vm1685, %v2587, %v2580
    %v3011 = vsel %vm1687, %v2594, %v3010
    %v3012 = vsel %vm1689, %v2601, %v3011
    %v3013 = vsel %vm1691, %v2608, %v3012
    %v3014 = vsel %vm1693, %v2615, %v3013
    %v3015 = vsel %vm1695, %v2622, %v3014
    %v3016 = vsel %vm1697, %v2629, %v3015
    %v3017 = vsel %vm128, %v3009, 0
    %v3019 = vsel %vm128, %v3016, 0
    %3021 = vmatprep.subr.mxu0 0.0
    %3022 = vmatpush1.msra.mxu0 0.0
    %3023 = vmatprep.subr.mxu0 0.0
    %3024 = vmatpush1.msra.mxu0 0.0
    %3025 = vmatprep.subr.mxu0 0.0
    %3026 = vmatpush1.msra.mxu0 0.0
    %3027 = vmatprep.subr.mxu0 0.0
    %3028 = vmatpush1.msra.mxu0 0.0
    %3029 = vmatprep.subr.mxu0 0.0
    %3030 = vmatpush1.msra.mxu0 0.0
    %3031 = vmatprep.subr.mxu0 0.0
    %3032 = vmatpush1.msra.mxu0 0.0
    %3033 = vmatprep.subr.mxu0 0.0
    %3034 = vmatpush1.msra.mxu0 0.0
    %3035 = vmatprep.subr.mxu0 0.0
    %3036 = vmatpush1.msra.mxu0 0.0
    %3037 = vmatprep.subr.mxu0 0.0
    %3038 = vmatpush1.msra.mxu0 0.0
    %3039 = vmatprep.subr.mxu0 0.0
    %3040 = vmatpush1.msra.mxu0 0.0
    %3041 = vmatprep.subr.mxu0 0.0
    %3042 = vmatpush1.msra.mxu0 0.0
    %3043 = vmatprep.subr.mxu0 0.0
    %3044 = vmatpush1.msra.mxu0 0.0
    %3045 = vmatprep.subr.mxu0 0.0
    %3046 = vmatpush1.msra.mxu0 %v2873
    %3047 = vmatprep.subr.mxu0 0.0
    %3048 = vmatpush1.msra.mxu0 %v2872
    %3049 = vmatprep.subr.mxu0 0.0
    %3050 = vmatpush1.msra.mxu0 %v2871
    %3051 = vmatprep.subr.mxu0 0.0
    %3052 = vmatpush1.msra.mxu0 %v2870
    %3053 = vmatprep.subr.mxu0 0.0
    %3054 = vmatpush2.msra.mxu0 0.0
    %3055 = vmatprep.subr.mxu0 0.0
    %3056 = vmatpush2.msra.mxu0 0.0
    %3057 = vmatprep.subr.mxu0 0.0
    %3058 = vmatpush2.msra.mxu0 0.0
    %3059 = vmatprep.subr.mxu0 0.0
    %3060 = vmatpush2.msra.mxu0 0.0
    %3061 = vmatprep.subr.mxu0 0.0
    %3062 = vmatpush2.msra.mxu0 0.0
    %3063 = vmatprep.subr.mxu0 0.0
    %3064 = vmatpush2.msra.mxu0 0.0
    %3065 = vmatprep.subr.mxu0 0.0
    %3066 = vmatpush2.msra.mxu0 0.0
    %3067 = vmatprep.subr.mxu0 0.0
    %3068 = vmatpush2.msra.mxu0 0.0
    %3069 = vmatprep.subr.mxu0 0.0
    %3070 = vmatpush2.msra.mxu0 0.0
    %3071 = vmatprep.subr.mxu0 0.0
    %3072 = vmatpush2.msra.mxu0 0.0
    %3073 = vmatprep.subr.mxu0 0.0
    %3074 = vmatpush2.msra.mxu0 0.0
    %3075 = vmatprep.subr.mxu0 0.0
    %3076 = vmatpush2.msra.mxu0 0.0
    %3077 = vmatprep.subr.mxu0 0.0
    %3078 = vmatpush2.msra.mxu0 0.0
    %3079 = vmatprep.subr.mxu0 0.0
    %3080 = vmatpush2.msra.mxu0 0.0
    %3081 = vmatprep.subr.mxu0 0.0
    %3082 = vmatpush2.msra.mxu0 0.0
    %3083 = vmatprep.subr.mxu0 0.0
    %3084 = vmatpush2.msra.mxu0 0.0
    %3085 = vmatprep.mubr.f32.mxu0 0.0
    %3086 = vmatmul.mubr.f32.gmra.mxu0 %v3017
    %v3087 = vpop.f32.mrf.mxu0
    %v3088 = vadd.f32 %v2979, %v3087
    %v3089 = vpop.f32.mrf.mxu0
    %3090 = vmatprep.mubr.f32.mxu0 0.0
    %3091 = vmatmul.mubr.f32.gmra.mxu0 %v3019
    %v3092 = vpop.f32.mrf.mxu0
    %v3093 = vadd.f32 %v2984, %v3092
    %v3094 = vpop.f32.mrf.mxu0
    %3095 = vdwg.mxu0
    %v3096 = vld [vmem:[%s5] sm:$0x1]
    %v3098 = vlaneseq
    %v3099 = vshrl.u32 %v3098, 7
    %v3100 = vsub.s32 0, %v3099
    %v3101 = vrot.slane %v3096, %v3100
    %v3103 = vadd.f32 %v3088, %v3101
    %v3104 = vadd.f32 %v3093, %v3101
    %3105 = vst.msk [vmem:[#allocation11] sm:$0xff] %vm128, %v3103
    %3106 = vst.msk [vmem:[#allocation11 + $0x8] sm:$0xff] %vm128, %v3104
    // Predicated region
    $region46: #{tpu_custom_call.1} parent=1 // pred_check
      _
    $region47: #{tpu_custom_call.1} parent=1 // pred_check_branch
      %3108 = sbr.rel (0) target = $region49
    $region48: #{tpu_custom_call.1} parent=1 // pred_region
      %s3110 = ssub.s32 256, 256
      %3111 = vsyncadd [#allocation4], %s3110
      %s3112 = sshll.u32 [#allocation11], 4
      %s3113 = int_to_ptr.vmem [resolvable:$true] %s3112
      %3118 = dma.vmem_to_hbm [thread:$0]  %s3113, 256, %s6, [#allocation4], 128, 128, 8
    $region49: #{tpu_custom_call.1} parent=1 // pred_fallthru
      _
    // Predicated region
    $region50: #{tpu_custom_call.1} parent=1 // pred_check
      _
    $region51: #{tpu_custom_call.1} parent=1 // pred_check_branch
      %3120 = sbr.rel (0) target = $region53
    $region52: #{tpu_custom_call.1} parent=1 // pred_region
      %3121 = dma.done [#allocation4], 256
    $region53: #{tpu_custom_call.1} parent=1 // pred_fallthru
      _
    %3122 = vsyncpa [#allocation3], 1
    %3123 = vsyncpa [#allocation6], 1
    %3124 = vsyncpa [#allocation9], 1
    %3125 = vsyncpa [#allocation4], 1

</llo_original>
